<compile_context>
chip_gen: v7x
topology: tpu7x:2x2x1
jax: 0.10.0
libtpu: 0.0.40
codegen_flags: <defaults>
</compile_context>

<pallas_src>
import functools

import jax
import jax.numpy as jnp
from jax.experimental import pallas as pl
from jax.experimental.pallas import tpu as pltpu

LN_EPS = 1e-5  # nn.LayerNorm default


# ----------------------------- in-kernel math -----------------------------

def _layernorm(x, gamma, beta):
    mu = jnp.mean(x, axis=-1, keepdims=True)
    var = jnp.mean((x - mu) ** 2, axis=-1, keepdims=True)
    return (x - mu) * jax.lax.rsqrt(var + LN_EPS) * gamma + beta


def _gelu_tanh(x):
    # TODO(synk): PVTv2's Mlp uses exact-erf nn.GELU(); tanh form differs by
    # ~1e-3 absolute but keeps the transcendental on a single EUP op.
    c = 0.7978845608028654  # sqrt(2/pi)
    return 0.5 * x * (1.0 + jnp.tanh(c * (x + 0.044715 * (x * x * x))))


# ------------------------------ fused kernel -------------------------------

def _block_kernel(x_ref, g1_ref, be1_ref, wqkv_ref, wp_ref, bp_ref,
                  g2_ref, be2_ref, w1_ref, b1_ref, wdw_ref, bdw_ref,
                  w2_ref, b2_ref, o_ref, pad_ref, *,
                  num_heads, width, seq_n, halo, key_tile):
    M, C = x_ref.shape                 # M = block_b * N (batch folded into M)
    N = seq_n
    BB = M // N
    D = C // num_heads
    Hd = w1_ref.shape[1]
    P = halo
    bf16, f32 = jnp.bfloat16, jnp.float32

    x = x_ref[...]                                             # (M, C) f32

    # ---------------- branch 1: x + Attention(norm1(x)) --------------------
    xn = _layernorm(x, g1_ref[...], be1_ref[...])
    qkv = jnp.dot(xn.astype(bf16), wqkv_ref[...],
                  preferred_element_type=f32)                  # (M, 3C); q pre-scaled

    n_kt = N // key_tile
    head_outs = []
    for h in range(num_heads):                                 # static, small
        # Slice qkv directly (no full q/k/v (M, C) copies).
        qh = qkv[:, h * D:(h + 1) * D].reshape(BB, N, D).astype(bf16)
        kh = qkv[:, C + h * D:C + (h + 1) * D].reshape(BB, N, D).astype(bf16)
        vh = qkv[:, 2 * C + h * D:2 * C + (h + 1) * D].reshape(BB, N, D).astype(bf16)

        m = lsum = acc = None
        for kt in range(n_kt):                                 # K-tiled online softmax
            sl = slice(kt * key_tile, (kt + 1) * key_tile)
            s = jnp.einsum('bqd,bkd->bqk', qh, kh[:, sl, :],
                           preferred_element_type=f32)         # (BB, N, key_tile)
            s_max = jnp.max(s, axis=-1, keepdims=True)
            m_new = s_max if kt == 0 else jnp.maximum(m, s_max)
            p = jnp.exp(s - m_new)
            pv = jnp.einsum('bqk,bkd->bqd', p.astype(bf16), vh[:, sl, :],
                            preferred_element_type=f32)        # (BB, N, D)
            ps = jnp.sum(p, axis=-1, keepdims=True)
            if kt == 0:
                lsum, acc = ps, pv
            else:
                alpha = jnp.exp(m - m_new)
                lsum = alpha * lsum + ps
                acc = alpha * acc + pv
            m = m_new
        # softmax denominator applied to the (N, D) accumulator on the EUP
        head_outs.append(acc * pl.reciprocal(lsum, approx=True))

    # One fused (M, C) @ (C, C) projection instead of num_heads K=D matmuls.
    attn = jnp.concatenate(head_outs, axis=-1).reshape(M, C).astype(bf16)
    x1 = x + jnp.dot(attn, wp_ref[...], preferred_element_type=f32) + bp_ref[...]

    # ---------------- branch 2: x1 + Mlp(norm2(x1)) -------------------------
    xn2 = _layernorm(x1, g2_ref[...], be2_ref[...])
    h1 = jnp.dot(xn2.astype(bf16), w1_ref[...],
                 preferred_element_type=f32) + b1_ref[...]     # (M, Hd)

    # Depthwise 3x3 conv (stride 1, pad 1) over each image's HxW token grid.
    # Each image is written into a zero-halo scratch slab of N + 2P rows, so
    # tap (dh, dw) is a static-offset window load at row P + dh*W + dw; rows
    # that fall off the top/bottom of an image land in the zero halo, and only
    # the 6 dw != 0 taps need a (w-coordinate) boundary mask.
    zeros_halo = jnp.zeros((BB, P, Hd), f32)
    pad_ref[:, :P, :] = zeros_halo                  # halos zeroed every step:
    pad_ref[:, P + N:, :] = zeros_halo              # safe under megacore split
    pad_ref[:, P:P + N, :] = h1.reshape(BB, N, Hd)

    wcol = jax.lax.broadcasted_iota(jnp.int32, (BB, N, 1), 1) % width
    mask_l = (wcol > 0).astype(f32)                 # tap valid when dw == -1
    mask_r = (wcol < width - 1).astype(f32)         # tap valid when dw == +1

    acc2 = None
    t = 0
    for dh in (-1, 0, 1):
        for dw in (-1, 0, 1):
            off = dh * width + dw
            win = pad_ref[:, P + off:P + off + N, :]           # (BB, N, Hd)
            tap = win * wdw_ref[t:t + 1, :]
            if dw == -1:
                tap = tap * mask_l
            elif dw == 1:
                tap = tap * mask_r
            acc2 = tap if acc2 is None else acc2 + tap
            t += 1
    acc2 = acc2 + bdw_ref[...]

    g = _gelu_tanh(acc2).reshape(M, Hd)
    y = jnp.dot(g.astype(bf16), w2_ref[...],
                preferred_element_type=f32) + b2_ref[...]      # (M, C)

    o_ref[...] = (x1 + y).astype(o_ref.dtype)


# ------------------------------- host wrapper ------------------------------

def _pick_block_b(B, N, target_rows=512):
    """Largest divisor of B with <= ~target_rows tokens per tile, while keeping
    >= 2 grid steps when B >= 2 so the 'parallel' axis can shard across v7x's
    two TensorCores.  On v7x (64 MiB VMEM) re-derive with a smaller target."""
    cap = B if B < 2 else max(1, B // 2)
    best = 1
    for bb in range(1, cap + 1):
        if B % bb == 0 and bb * N <= max(target_rows, N):
            best = bb
    return best


def _pick_key_tile(N, cap=512):
    """Largest divisor of N <= cap, preferring multiples of 8 (sublane-aligned
    key-tile slices)."""
    fallback = None
    for d in range(min(N, cap), 0, -1):
        if N % d == 0:
            if d % 8 == 0:
                return d
            if fallback is None:
                fallback = d
    return fallback or N


def pvtv2_block_apply(x, params, H, W, num_heads, *, block_b=None,
                      key_tile=None, vmem_limit_bytes=48 * 1024 * 1024):
    B, N, C = x.shape
    assert N == H * W and N % 8 == 0
    Hd = params["w1_t"].shape[1]
    if block_b is None:
        block_b = _pick_block_b(B, N)
    if key_tile is None:
        key_tile = _pick_key_tile(N)
    M = block_b * N
    P = ((W + 1 + 7) // 8) * 8          # zero-halo rows per image side (8-aligned)
    scale = float((C // num_heads) ** -0.5)

    # Host-side prep: fused QKV weight with the softmax scale folded into Wq,
    # MXU weights pre-cast to bf16 (halves weight DMA).
    bf16 = jnp.bfloat16
    wqkv = jnp.concatenate([params["wq_t"] * scale, params["wk_t"],
                            params["wv_t"]], axis=1).astype(bf16)   # (C, 3C)
    wp = params["wp_t"].astype(bf16)
    w1 = params["w1_t"].astype(bf16)
    w2 = params["w2_t"].astype(bf16)

    # 2-D (B*N, C) slabs for x/out; when C % 128 == 0 these store lane-dense.
    # TODO(synk): for C % 128 != 0 (e.g. C=32/64/320) a (B, N*C) out layout
    # would need an in-kernel relayout; left as masked stores instead.
    x2d = x.reshape(B * N, C)

    vec = lambda d: pl.BlockSpec((1, d), lambda i: (0, 0))
    mat = lambda r, c: pl.BlockSpec((r, c), lambda i: (0, 0))
    tok_in = pl.BlockSpec((M, C), lambda i: (i, 0))
    tok_out = pl.BlockSpec((M, C), lambda i: (i, 0))

    # NOTE: weight/bias blocks are grid-invariant; single-buffering them
    # (pl.Buffered(1) / run_scoped staging) is the next VMEM lever if block_b
    # needs to grow further, especially on v7x's 64 MiB VMEM.
    fn = pl.pallas_call(
        functools.partial(_block_kernel, num_heads=num_heads, width=W,
                          seq_n=N, halo=P, key_tile=key_tile),
        grid=(B // block_b,),
        in_specs=[tok_in, vec(C), vec(C), mat(C, 3 * C), mat(C, C), vec(C),
                  vec(C), vec(C), mat(C, Hd), vec(Hd), mat(9, Hd), vec(Hd),
                  mat(Hd, C), vec(C)],
        out_specs=tok_out,
        out_shape=jax.ShapeDtypeStruct((B * N, C), x.dtype),
        scratch_shapes=[pltpu.VMEM((block_b, N + 2 * P, Hd), jnp.float32)],
        compiler_params=pltpu.CompilerParams(
            dimension_semantics=("parallel",),
            # 48 MiB is safe on v5e/v6e (128 MiB phys) and within the ~48-56
            # MiB budget on v7x (64 MiB phys); sweep higher on v5e/v6e.
            vmem_limit_bytes=vmem_limit_bytes),
    )
    out = fn(x2d, params["g1"], params["be1"], wqkv, wp, params["bp"],
             params["g2"], params["be2"], w1, params["b1"],
             params["wdw"], params["bdw"], w2, params["b2"])
    return out.reshape(B, N, C)


# --------------------------- params / reference ----------------------------

def init_params(key, dim, num_heads, mlp_ratio):
    """Deterministic synthetic init mirroring Block._init_weights shapes."""
    hd = int(dim * mlp_ratio)
    ks = jax.random.split(key, 6)
    tn = lambda k, s: (0.02 * jax.random.truncated_normal(k, -2.0, 2.0, s)
                       ).astype(jnp.float32)
    wq = tn(ks[0], (dim, dim))          # torch Linear weight layout (out, in)
    wkv = tn(ks[1], (2 * dim, dim))     # qkv_bias=False -> no q/kv bias
    wp = tn(ks[2], (dim, dim))
    w1 = tn(ks[3], (hd, dim))
    w2 = tn(ks[4], (dim, hd))
    wdw = (jnp.sqrt(2.0 / 9.0) *
           jax.random.normal(ks[5], (hd, 1, 3, 3))).astype(jnp.float32)
    z = lambda d: jnp.zeros((1, d), jnp.float32)
    o = lambda d: jnp.ones((1, d), jnp.float32)
    return dict(
        g1=o(dim), be1=z(dim), g2=o(dim), be2=z(dim),
        wq_t=wq.T, wk_t=wkv[:dim].T, wv_t=wkv[dim:].T,
        wp_t=wp.T, bp=z(dim),
        w1_t=w1.T, b1=z(hd),
        wdw=wdw.reshape(hd, 9).T,       # (9, Hd), tap index = kh*3 + kw
        bdw=z(hd),
        w2_t=w2.T, b2=z(dim),
    )


def _reference_block(x, params, H, W, num_heads):
    """Pure-JAX (XLA, f32) reference of the same forward pass."""
    B, N, C = x.shape
    D = C // num_heads
    scale = D ** -0.5

    def ln(t, g, b):
        mu = jnp.mean(t, -1, keepdims=True)
        var = jnp.mean((t - mu) ** 2, -1, keepdims=True)
        return (t - mu) * jax.lax.rsqrt(var + LN_EPS) * g + b

    xn = ln(x, params["g1"], params["be1"])
    q = xn @ params["wq_t"]
    k = xn @ params["wk_t"]
    v = xn @ params["wv_t"]
    qh = q.reshape(B, N, num_heads, D).transpose(0, 2, 1, 3)
    kh = k.reshape(B, N, num_heads, D).transpose(0, 2, 1, 3)
    vh = v.reshape(B, N, num_heads, D).transpose(0, 2, 1, 3)
    a = jax.nn.softmax(jnp.einsum('bhqd,bhkd->bhqk', qh, kh) * scale, axis=-1)
    o = jnp.einsum('bhqk,bhkd->bhqd', a, vh).transpose(0, 2, 1, 3).reshape(B, N, C)
    x = x + o @ params["wp_t"] + params["bp"]

    xn2 = ln(x, params["g2"], params["be2"])
    h1 = xn2 @ params["w1_t"] + params["b1"]
    Hd = h1.shape[-1]
    img = jnp.pad(h1.reshape(B, H, W, Hd), ((0, 0), (1, 1), (1, 1), (0, 0)))
    acc = jnp.zeros((B, H, W, Hd), jnp.float32) + params["bdw"]
    t = 0
    for kh_ in range(3):
        for kw_ in range(3):
            acc = acc + img[:, kh_:kh_ + H, kw_:kw_ + W, :] * params["wdw"][t]
            t += 1
    y = _gelu_tanh(acc.reshape(B, N, Hd)) @ params["w2_t"] + params["b2"]
    return x + y


if __name__ == "__main__":
    # Block(dim=32, num_heads=2, mlp_ratio=4, sr_ratio=1) on an 8x8 token grid.
    B, H, W, dim, num_heads, mlp_ratio = 4, 8, 8, 32, 2, 4.0
    N = H * W
    key = jax.random.PRNGKey(0)
    kx, kp = jax.random.split(key)
    x = jax.random.normal(kx, (B, N, dim), jnp.float32)
    params = init_params(kp, dim, num_heads, mlp_ratio)

    out = jax.block_until_ready(pvtv2_block_apply(x, params, H, W, num_heads))
    ref = jax.block_until_ready(_reference_block(x, params, H, W, num_heads))

    assert out.shape == (B, N, dim) and out.dtype == jnp.float32
    assert bool(jnp.all(jnp.isfinite(out)))
    err = float(jnp.max(jnp.abs(out - ref)))
    assert err < 2e-2, f"max |kernel - reference| = {err}"
    print("KERNEL_OK")
</pallas_src>

<mosaic_0001>
module attributes {stable_mosaic.version = 11 : i64} {
  func.func @_block_kernel(%arg0: i32, %arg1: memref<128x32xf32, #tpu.memory_space<vmem>>, %arg2: memref<1x32xf32, #tpu.memory_space<vmem>>, %arg3: memref<1x32xf32, #tpu.memory_space<vmem>>, %arg4: memref<32x96xbf16, #tpu.memory_space<vmem>>, %arg5: memref<32x32xbf16, #tpu.memory_space<vmem>>, %arg6: memref<1x32xf32, #tpu.memory_space<vmem>>, %arg7: memref<1x32xf32, #tpu.memory_space<vmem>>, %arg8: memref<1x32xf32, #tpu.memory_space<vmem>>, %arg9: memref<32x128xbf16, #tpu.memory_space<vmem>>, %arg10: memref<1x128xf32, #tpu.memory_space<vmem>>, %arg11: memref<9x128xf32, #tpu.memory_space<vmem>>, %arg12: memref<1x128xf32, #tpu.memory_space<vmem>>, %arg13: memref<128x32xbf16, #tpu.memory_space<vmem>>, %arg14: memref<1x32xf32, #tpu.memory_space<vmem>>, %arg15: memref<128x32xf32, #tpu.memory_space<vmem>>, %arg16: memref<2x96x128xf32, #tpu.memory_space<vmem>>) attributes {dimension_semantics = [#tpu.dimension_semantics<parallel>], iteration_bounds = array<i64: 2>, scalar_prefetch = 0 : i64, scratch_operands = 1 : i64, tpu.core_type = #tpu.core_type<tc>, window_params = [{transform_indices = @transform_0, window_bounds = array<i64: 128, 32>}, {pipeline_mode = #tpu.pipeline_mode<synchronous>, transform_indices = @transform_1, window_bounds = array<i64: 1, 32>}, {pipeline_mode = #tpu.pipeline_mode<synchronous>, transform_indices = @transform_2, window_bounds = array<i64: 1, 32>}, {pipeline_mode = #tpu.pipeline_mode<synchronous>, transform_indices = @transform_3, window_bounds = array<i64: 32, 96>}, {pipeline_mode = #tpu.pipeline_mode<synchronous>, transform_indices = @transform_4, window_bounds = array<i64: 32, 32>}, {pipeline_mode = #tpu.pipeline_mode<synchronous>, transform_indices = @transform_5, window_bounds = array<i64: 1, 32>}, {pipeline_mode = #tpu.pipeline_mode<synchronous>, transform_indices = @transform_6, window_bounds = array<i64: 1, 32>}, {pipeline_mode = #tpu.pipeline_mode<synchronous>, transform_indices = @transform_7, window_bounds = array<i64: 1, 32>}, {pipeline_mode = #tpu.pipeline_mode<synchronous>, transform_indices = @transform_8, window_bounds = array<i64: 32, 128>}, {pipeline_mode = #tpu.pipeline_mode<synchronous>, transform_indices = @transform_9, window_bounds = array<i64: 1, 128>}, {pipeline_mode = #tpu.pipeline_mode<synchronous>, transform_indices = @transform_10, window_bounds = array<i64: 9, 128>}, {pipeline_mode = #tpu.pipeline_mode<synchronous>, transform_indices = @transform_11, window_bounds = array<i64: 1, 128>}, {pipeline_mode = #tpu.pipeline_mode<synchronous>, transform_indices = @transform_12, window_bounds = array<i64: 128, 32>}, {pipeline_mode = #tpu.pipeline_mode<synchronous>, transform_indices = @transform_13, window_bounds = array<i64: 1, 32>}, {transform_indices = @transform_14, window_bounds = array<i64: 128, 32>}]} {
    %c0 = arith.constant 0 : index
    %c0_0 = arith.constant 0 : index
    %0 = vector.load %arg1[%c0, %c0_0] : memref<128x32xf32, #tpu.memory_space<vmem>>, vector<128x32xf32>
    %c0_1 = arith.constant 0 : index
    %c0_2 = arith.constant 0 : index
    %1 = vector.load %arg2[%c0_1, %c0_2] : memref<1x32xf32, #tpu.memory_space<vmem>>, vector<1x32xf32>
    %c0_3 = arith.constant 0 : index
    %c0_4 = arith.constant 0 : index
    %2 = vector.load %arg3[%c0_3, %c0_4] : memref<1x32xf32, #tpu.memory_space<vmem>>, vector<1x32xf32>
    %cst = arith.constant dense<0.000000e+00> : vector<128xf32>
    %3 = vector.multi_reduction <add>, %0, %cst [1] : vector<128x32xf32> to vector<128xf32>
    %4 = vector.shape_cast %3 : vector<128xf32> to vector<128x1xf32>
    %cst_5 = arith.constant 3.200000e+01 : f32
    %5 = vector.broadcast %cst_5 : f32 to vector<128x1xf32>
    %6 = arith.divf %4, %5 : vector<128x1xf32>
    %7 = vector.broadcast %6 : vector<128x1xf32> to vector<128x32xf32>
    %8 = arith.subf %0, %7 : vector<128x32xf32>
    %9 = arith.mulf %8, %8 : vector<128x32xf32>
    %cst_6 = arith.constant dense<0.000000e+00> : vector<128xf32>
    %10 = vector.multi_reduction <add>, %9, %cst_6 [1] : vector<128x32xf32> to vector<128xf32>
    %11 = vector.shape_cast %10 : vector<128xf32> to vector<128x1xf32>
    %cst_7 = arith.constant 3.200000e+01 : f32
    %12 = vector.broadcast %cst_7 : f32 to vector<128x1xf32>
    %13 = arith.divf %11, %12 : vector<128x1xf32>
    %14 = vector.broadcast %6 : vector<128x1xf32> to vector<128x32xf32>
    %15 = arith.subf %0, %14 : vector<128x32xf32>
    %cst_8 = arith.constant 9.99999974E-6 : f32
    %16 = vector.broadcast %cst_8 : f32 to vector<128x1xf32>
    %17 = arith.addf %13, %16 : vector<128x1xf32>
    %18 = math.rsqrt %17 : vector<128x1xf32>
    %19 = vector.broadcast %18 : vector<128x1xf32> to vector<128x32xf32>
    %20 = arith.mulf %15, %19 : vector<128x32xf32>
    %21 = vector.broadcast %1 : vector<1x32xf32> to vector<128x32xf32>
    %22 = arith.mulf %20, %21 : vector<128x32xf32>
    %23 = vector.broadcast %2 : vector<1x32xf32> to vector<128x32xf32>
    %24 = arith.addf %22, %23 : vector<128x32xf32>
    %25 = arith.truncf %24 : vector<128x32xf32> to vector<128x32xbf16>
    %c0_9 = arith.constant 0 : index
    %c0_10 = arith.constant 0 : index
    %26 = vector.load %arg4[%c0_9, %c0_10] : memref<32x96xbf16, #tpu.memory_space<vmem>>, vector<32x96xbf16>
    %cst_11 = arith.constant dense<0.000000e+00> : vector<128x96xf32>
    %27 = tpu.matmul %25, %26, %cst_11 {dimension_numbers = #tpu.dot_dimension_numbers<[1], [0], [0], [1], [0, 0, 1, 1], [], []>} : vector<128x32xbf16>, vector<32x96xbf16>, vector<128x96xf32> -> vector<128x96xf32>
    %28 = vector.extract_strided_slice %27 {offsets = [0, 0], sizes = [128, 16], strides = [1, 1]} : vector<128x96xf32> to vector<128x16xf32>
    %29 = vector.shape_cast %28 : vector<128x16xf32> to vector<2x64x16xf32>
    %30 = arith.truncf %29 : vector<2x64x16xf32> to vector<2x64x16xbf16>
    %31 = vector.extract_strided_slice %27 {offsets = [0, 32], sizes = [128, 16], strides = [1, 1]} : vector<128x96xf32> to vector<128x16xf32>
    %32 = vector.shape_cast %31 : vector<128x16xf32> to vector<2x64x16xf32>
    %33 = arith.truncf %32 : vector<2x64x16xf32> to vector<2x64x16xbf16>
    %34 = vector.extract_strided_slice %27 {offsets = [0, 64], sizes = [128, 16], strides = [1, 1]} : vector<128x96xf32> to vector<128x16xf32>
    %35 = vector.shape_cast %34 : vector<128x16xf32> to vector<2x64x16xf32>
    %36 = arith.truncf %35 : vector<2x64x16xf32> to vector<2x64x16xbf16>
    "tpu.trace_start"() <{level = 10 : i32, message = "bqd,bkd->bqk"}> : () -> ()
    %cst_12 = arith.constant dense<0.000000e+00> : vector<2x64x64xf32>
    %37 = tpu.matmul %30, %33, %cst_12 {dimension_numbers = #tpu.dot_dimension_numbers<[2], [2], [1], [1], [0, 0, 0, 1, 1, 1], [0], [0]>} : vector<2x64x16xbf16>, vector<2x64x16xbf16>, vector<2x64x64xf32> -> vector<2x64x64xf32>
    "tpu.trace_stop"() : () -> ()
    %cst_13 = arith.constant dense<0xFF800000> : vector<2x64xf32>
    %38 = vector.multi_reduction <maximumf>, %37, %cst_13 [2] : vector<2x64x64xf32> to vector<2x64xf32>
    %39 = vector.shape_cast %38 : vector<2x64xf32> to vector<2x64x1xf32>
    %40 = vector.broadcast %39 : vector<2x64x1xf32> to vector<2x64x64xf32>
    %41 = arith.subf %37, %40 : vector<2x64x64xf32>
    %42 = math.exp %41 : vector<2x64x64xf32>
    %43 = arith.truncf %42 : vector<2x64x64xf32> to vector<2x64x64xbf16>
    "tpu.trace_start"() <{level = 10 : i32, message = "bqk,bkd->bqd"}> : () -> ()
    %cst_14 = arith.constant dense<0.000000e+00> : vector<2x64x16xf32>
    %44 = tpu.matmul %43, %36, %cst_14 {dimension_numbers = #tpu.dot_dimension_numbers<[2], [1], [1], [2], [0, 0, 0, 1, 1, 2], [0], [0]>} : vector<2x64x64xbf16>, vector<2x64x16xbf16>, vector<2x64x16xf32> -> vector<2x64x16xf32>
    "tpu.trace_stop"() : () -> ()
    %cst_15 = arith.constant dense<0.000000e+00> : vector<2x64xf32>
    %45 = vector.multi_reduction <add>, %42, %cst_15 [2] : vector<2x64x64xf32> to vector<2x64xf32>
    %46 = vector.shape_cast %45 : vector<2x64xf32> to vector<2x64x1xf32>
    %47 = tpu.reciprocal %46 {approx = true} : vector<2x64x1xf32> -> vector<2x64x1xf32>
    %48 = vector.broadcast %47 : vector<2x64x1xf32> to vector<2x64x16xf32>
    %49 = arith.mulf %44, %48 : vector<2x64x16xf32>
    %50 = vector.extract_strided_slice %27 {offsets = [0, 16], sizes = [128, 16], strides = [1, 1]} : vector<128x96xf32> to vector<128x16xf32>
    %51 = vector.shape_cast %50 : vector<128x16xf32> to vector<2x64x16xf32>
    %52 = arith.truncf %51 : vector<2x64x16xf32> to vector<2x64x16xbf16>
    %53 = vector.extract_strided_slice %27 {offsets = [0, 48], sizes = [128, 16], strides = [1, 1]} : vector<128x96xf32> to vector<128x16xf32>
    %54 = vector.shape_cast %53 : vector<128x16xf32> to vector<2x64x16xf32>
    %55 = arith.truncf %54 : vector<2x64x16xf32> to vector<2x64x16xbf16>
    %56 = vector.extract_strided_slice %27 {offsets = [0, 80], sizes = [128, 16], strides = [1, 1]} : vector<128x96xf32> to vector<128x16xf32>
    %57 = vector.shape_cast %56 : vector<128x16xf32> to vector<2x64x16xf32>
    %58 = arith.truncf %57 : vector<2x64x16xf32> to vector<2x64x16xbf16>
    "tpu.trace_start"() <{level = 10 : i32, message = "bqd,bkd->bqk"}> : () -> ()
    %cst_16 = arith.constant dense<0.000000e+00> : vector<2x64x64xf32>
    %59 = tpu.matmul %52, %55, %cst_16 {dimension_numbers = #tpu.dot_dimension_numbers<[2], [2], [1], [1], [0, 0, 0, 1, 1, 1], [0], [0]>} : vector<2x64x16xbf16>, vector<2x64x16xbf16>, vector<2x64x64xf32> -> vector<2x64x64xf32>
    "tpu.trace_stop"() : () -> ()
    %cst_17 = arith.constant dense<0xFF800000> : vector<2x64xf32>
    %60 = vector.multi_reduction <maximumf>, %59, %cst_17 [2] : vector<2x64x64xf32> to vector<2x64xf32>
    %61 = vector.shape_cast %60 : vector<2x64xf32> to vector<2x64x1xf32>
    %62 = vector.broadcast %61 : vector<2x64x1xf32> to vector<2x64x64xf32>
    %63 = arith.subf %59, %62 : vector<2x64x64xf32>
    %64 = math.exp %63 : vector<2x64x64xf32>
    %65 = arith.truncf %64 : vector<2x64x64xf32> to vector<2x64x64xbf16>
    "tpu.trace_start"() <{level = 10 : i32, message = "bqk,bkd->bqd"}> : () -> ()
    %cst_18 = arith.constant dense<0.000000e+00> : vector<2x64x16xf32>
    %66 = tpu.matmul %65, %58, %cst_18 {dimension_numbers = #tpu.dot_dimension_numbers<[2], [1], [1], [2], [0, 0, 0, 1, 1, 2], [0], [0]>} : vector<2x64x64xbf16>, vector<2x64x16xbf16>, vector<2x64x16xf32> -> vector<2x64x16xf32>
    "tpu.trace_stop"() : () -> ()
    %cst_19 = arith.constant dense<0.000000e+00> : vector<2x64xf32>
    %67 = vector.multi_reduction <add>, %64, %cst_19 [2] : vector<2x64x64xf32> to vector<2x64xf32>
    %68 = vector.shape_cast %67 : vector<2x64xf32> to vector<2x64x1xf32>
    %69 = tpu.reciprocal %68 {approx = true} : vector<2x64x1xf32> -> vector<2x64x1xf32>
    %70 = vector.broadcast %69 : vector<2x64x1xf32> to vector<2x64x16xf32>
    %71 = arith.mulf %66, %70 : vector<2x64x16xf32>
    %72 = tpu.concatenate %49, %71 in 2 : vector<2x64x16xf32>, vector<2x64x16xf32> -> vector<2x64x32xf32>
    %73 = vector.shape_cast %72 : vector<2x64x32xf32> to vector<128x32xf32>
    %74 = arith.truncf %73 : vector<128x32xf32> to vector<128x32xbf16>
    %c0_20 = arith.constant 0 : index
    %c0_21 = arith.constant 0 : index
    %75 = vector.load %arg5[%c0_20, %c0_21] : memref<32x32xbf16, #tpu.memory_space<vmem>>, vector<32x32xbf16>
    %cst_22 = arith.constant dense<0.000000e+00> : vector<128x32xf32>
    %76 = tpu.matmul %74, %75, %cst_22 {dimension_numbers = #tpu.dot_dimension_numbers<[1], [0], [0], [1], [0, 0, 1, 1], [], []>} : vector<128x32xbf16>, vector<32x32xbf16>, vector<128x32xf32> -> vector<128x32xf32>
    %77 = arith.addf %0, %76 : vector<128x32xf32>
    %c0_23 = arith.constant 0 : index
    %c0_24 = arith.constant 0 : index
    %78 = vector.load %arg6[%c0_23, %c0_24] : memref<1x32xf32, #tpu.memory_space<vmem>>, vector<1x32xf32>
    %79 = vector.broadcast %78 : vector<1x32xf32> to vector<128x32xf32>
    %80 = arith.addf %77, %79 : vector<128x32xf32>
    %c0_25 = arith.constant 0 : index
    %c0_26 = arith.constant 0 : index
    %81 = vector.load %arg7[%c0_25, %c0_26] : memref<1x32xf32, #tpu.memory_space<vmem>>, vector<1x32xf32>
    %c0_27 = arith.constant 0 : index
    %c0_28 = arith.constant 0 : index
    %82 = vector.load %arg8[%c0_27, %c0_28] : memref<1x32xf32, #tpu.memory_space<vmem>>, vector<1x32xf32>
    %cst_29 = arith.constant dense<0.000000e+00> : vector<128xf32>
    %83 = vector.multi_reduction <add>, %80, %cst_29 [1] : vector<128x32xf32> to vector<128xf32>
    %84 = vector.shape_cast %83 : vector<128xf32> to vector<128x1xf32>
    %cst_30 = arith.constant 3.200000e+01 : f32
    %85 = vector.broadcast %cst_30 : f32 to vector<128x1xf32>
    %86 = arith.divf %84, %85 : vector<128x1xf32>
    %87 = vector.broadcast %86 : vector<128x1xf32> to vector<128x32xf32>
    %88 = arith.subf %80, %87 : vector<128x32xf32>
    %89 = arith.mulf %88, %88 : vector<128x32xf32>
    %cst_31 = arith.constant dense<0.000000e+00> : vector<128xf32>
    %90 = vector.multi_reduction <add>, %89, %cst_31 [1] : vector<128x32xf32> to vector<128xf32>
    %91 = vector.shape_cast %90 : vector<128xf32> to vector<128x1xf32>
    %cst_32 = arith.constant 3.200000e+01 : f32
    %92 = vector.broadcast %cst_32 : f32 to vector<128x1xf32>
    %93 = arith.divf %91, %92 : vector<128x1xf32>
    %94 = vector.broadcast %86 : vector<128x1xf32> to vector<128x32xf32>
    %95 = arith.subf %80, %94 : vector<128x32xf32>
    %cst_33 = arith.constant 9.99999974E-6 : f32
    %96 = vector.broadcast %cst_33 : f32 to vector<128x1xf32>
    %97 = arith.addf %93, %96 : vector<128x1xf32>
    %98 = math.rsqrt %97 : vector<128x1xf32>
    %99 = vector.broadcast %98 : vector<128x1xf32> to vector<128x32xf32>
    %100 = arith.mulf %95, %99 : vector<128x32xf32>
    %101 = vector.broadcast %81 : vector<1x32xf32> to vector<128x32xf32>
    %102 = arith.mulf %100, %101 : vector<128x32xf32>
    %103 = vector.broadcast %82 : vector<1x32xf32> to vector<128x32xf32>
    %104 = arith.addf %102, %103 : vector<128x32xf32>
    %105 = arith.truncf %104 : vector<128x32xf32> to vector<128x32xbf16>
    %c0_34 = arith.constant 0 : index
    %c0_35 = arith.constant 0 : index
    %106 = vector.load %arg9[%c0_34, %c0_35] : memref<32x128xbf16, #tpu.memory_space<vmem>>, vector<32x128xbf16>
    %cst_36 = arith.constant dense<0.000000e+00> : vector<128x128xf32>
    %107 = tpu.matmul %105, %106, %cst_36 {dimension_numbers = #tpu.dot_dimension_numbers<[1], [0], [0], [1], [0, 0, 1, 1], [], []>} : vector<128x32xbf16>, vector<32x128xbf16>, vector<128x128xf32> -> vector<128x128xf32>
    %c0_37 = arith.constant 0 : index
    %c0_38 = arith.constant 0 : index
    %108 = vector.load %arg10[%c0_37, %c0_38] : memref<1x128xf32, #tpu.memory_space<vmem>>, vector<1x128xf32>
    %109 = vector.broadcast %108 : vector<1x128xf32> to vector<128x128xf32>
    %110 = arith.addf %107, %109 : vector<128x128xf32>
    %cst_39 = arith.constant 0.000000e+00 : f32
    %111 = vector.broadcast %cst_39 : f32 to vector<2x16x128xf32>
    %c0_40 = arith.constant 0 : index
    %c0_41 = arith.constant 0 : index
    %c0_42 = arith.constant 0 : index
    %112 = vector.load %arg16[%c0_40, %c0_41, %c0_42] : memref<2x96x128xf32, #tpu.memory_space<vmem>>, vector<2x16x128xf32>
    tpu.vector_store %arg16[%c0_40, %c0_41, %c0_42], %111 {strides = array<i32>} : memref<2x96x128xf32, #tpu.memory_space<vmem>>, vector<2x16x128xf32>,
    %c0_43 = arith.constant 0 : index
    %c80 = arith.constant 80 : index
    %c0_44 = arith.constant 0 : index
    %113 = vector.load %arg16[%c0_43, %c80, %c0_44] : memref<2x96x128xf32, #tpu.memory_space<vmem>>, vector<2x16x128xf32>
    tpu.vector_store %arg16[%c0_43, %c80, %c0_44], %111 {strides = array<i32>} : memref<2x96x128xf32, #tpu.memory_space<vmem>>, vector<2x16x128xf32>,
    %114 = vector.shape_cast %110 : vector<128x128xf32> to vector<2x64x128xf32>
    %c0_45 = arith.constant 0 : index
    %c16 = arith.constant 16 : index
    %c0_46 = arith.constant 0 : index
    %115 = vector.load %arg16[%c0_45, %c16, %c0_46] : memref<2x96x128xf32, #tpu.memory_space<vmem>>, vector<2x64x128xf32>
    tpu.vector_store %arg16[%c0_45, %c16, %c0_46], %114 {strides = array<i32>} : memref<2x96x128xf32, #tpu.memory_space<vmem>>, vector<2x64x128xf32>,
    %116 = tpu.iota {dimensions = array<i32: 1>} : vector<2x64x1xi32>
    %c8_i32 = arith.constant 8 : i32
    %c0_i32 = arith.constant 0 : i32
    %117 = arith.cmpi eq, %c8_i32, %c0_i32 : i32
    %c1_i32 = arith.constant 1 : i32
    %118 = arith.select %117, %c1_i32, %c8_i32 : i32
    %119 = vector.broadcast %118 : i32 to vector<2x64x1xi32>
    %120 = arith.remsi %116, %119 : vector<2x64x1xi32>
    %c0_i32_47 = arith.constant 0 : i32
    %121 = vector.broadcast %c0_i32_47 : i32 to vector<2x64x1xi32>
    %122 = arith.cmpi ne, %120, %121 : vector<2x64x1xi32>
    %c0_i32_48 = arith.constant 0 : i32
    %123 = vector.broadcast %c0_i32_48 : i32 to vector<2x64x1xi32>
    %124 = arith.cmpi slt, %120, %123 : vector<2x64x1xi32>
    %c0_i32_49 = arith.constant 0 : i32
    %125 = arith.cmpi slt, %118, %c0_i32_49 : i32
    %126 = vector.broadcast %125 : i1 to vector<2x64x1xi1>
    %127 = vector.broadcast %126 : vector<2x64x1xi1> to vector<2x64x1xi1>
    %128 = arith.xori %124, %127 : vector<2x64x1xi1>
    %129 = arith.andi %128, %122 : vector<2x64x1xi1>
    %130 = vector.broadcast %118 : i32 to vector<2x64x1xi32>
    %131 = arith.addi %120, %130 : vector<2x64x1xi32>
    %132 = arith.select %129, %131, %120 : vector<2x64x1xi1>, vector<2x64x1xi32>
    %c0_i32_50 = arith.constant 0 : i32
    %133 = vector.broadcast %c0_i32_50 : i32 to vector<2x64x1xi32>
    %134 = arith.cmpi sgt, %132, %133 : vector<2x64x1xi32>
    %135 = arith.extui %134 : vector<2x64x1xi1> to vector<2x64x1xi32>
    %136 = arith.sitofp %135 : vector<2x64x1xi32> to vector<2x64x1xf32>
    %c7_i32 = arith.constant 7 : i32
    %137 = vector.broadcast %c7_i32 : i32 to vector<2x64x1xi32>
    %138 = arith.cmpi slt, %132, %137 : vector<2x64x1xi32>
    %139 = arith.extui %138 : vector<2x64x1xi1> to vector<2x64x1xi32>
    %140 = arith.sitofp %139 : vector<2x64x1xi32> to vector<2x64x1xf32>
    %c0_51 = arith.constant 0 : index
    %c7 = arith.constant 7 : index
    %c0_52 = arith.constant 0 : index
    %141 = vector.load %arg16[%c0_51, %c7, %c0_52] : memref<2x96x128xf32, #tpu.memory_space<vmem>>, vector<2x64x128xf32>
    %c0_53 = arith.constant 0 : index
    %c0_54 = arith.constant 0 : index
    %142 = vector.load %arg11[%c0_53, %c0_54] : memref<9x128xf32, #tpu.memory_space<vmem>>, vector<1x128xf32>
    %143 = vector.shape_cast %142 : vector<1x128xf32> to vector<1x1x128xf32>
    %144 = vector.broadcast %143 : vector<1x1x128xf32> to vector<2x64x128xf32>
    %145 = arith.mulf %141, %144 : vector<2x64x128xf32>
    %146 = vector.broadcast %136 : vector<2x64x1xf32> to vector<2x64x128xf32>
    %147 = arith.mulf %145, %146 : vector<2x64x128xf32>
    %c0_55 = arith.constant 0 : index
    %c8 = arith.constant 8 : index
    %c0_56 = arith.constant 0 : index
    %148 = vector.load %arg16[%c0_55, %c8, %c0_56] : memref<2x96x128xf32, #tpu.memory_space<vmem>>, vector<2x64x128xf32>
    %c1 = arith.constant 1 : index
    %c0_57 = arith.constant 0 : index
    %149 = vector.load %arg11[%c1, %c0_57] : memref<9x128xf32, #tpu.memory_space<vmem>>, vector<1x128xf32>
    %150 = vector.shape_cast %149 : vector<1x128xf32> to vector<1x1x128xf32>
    %151 = vector.broadcast %150 : vector<1x1x128xf32> to vector<2x64x128xf32>
    %152 = arith.mulf %148, %151 : vector<2x64x128xf32>
    %153 = arith.addf %147, %152 : vector<2x64x128xf32>
    %c0_58 = arith.constant 0 : index
    %c9 = arith.constant 9 : index
    %c0_59 = arith.constant 0 : index
    %154 = vector.load %arg16[%c0_58, %c9, %c0_59] : memref<2x96x128xf32, #tpu.memory_space<vmem>>, vector<2x64x128xf32>
    %c2 = arith.constant 2 : index
    %c0_60 = arith.constant 0 : index
    %155 = vector.load %arg11[%c2, %c0_60] : memref<9x128xf32, #tpu.memory_space<vmem>>, vector<1x128xf32>
    %156 = vector.shape_cast %155 : vector<1x128xf32> to vector<1x1x128xf32>
    %157 = vector.broadcast %156 : vector<1x1x128xf32> to vector<2x64x128xf32>
    %158 = arith.mulf %154, %157 : vector<2x64x128xf32>
    %159 = vector.broadcast %140 : vector<2x64x1xf32> to vector<2x64x128xf32>
    %160 = arith.mulf %158, %159 : vector<2x64x128xf32>
    %161 = arith.addf %153, %160 : vector<2x64x128xf32>
    %c0_61 = arith.constant 0 : index
    %c15 = arith.constant 15 : index
    %c0_62 = arith.constant 0 : index
    %162 = vector.load %arg16[%c0_61, %c15, %c0_62] : memref<2x96x128xf32, #tpu.memory_space<vmem>>, vector<2x64x128xf32>
    %c3 = arith.constant 3 : index
    %c0_63 = arith.constant 0 : index
    %163 = vector.load %arg11[%c3, %c0_63] : memref<9x128xf32, #tpu.memory_space<vmem>>, vector<1x128xf32>
    %164 = vector.shape_cast %163 : vector<1x128xf32> to vector<1x1x128xf32>
    %165 = vector.broadcast %164 : vector<1x1x128xf32> to vector<2x64x128xf32>
    %166 = arith.mulf %162, %165 : vector<2x64x128xf32>
    %167 = vector.broadcast %136 : vector<2x64x1xf32> to vector<2x64x128xf32>
    %168 = arith.mulf %166, %167 : vector<2x64x128xf32>
    %169 = arith.addf %161, %168 : vector<2x64x128xf32>
    %c0_64 = arith.constant 0 : index
    %c16_65 = arith.constant 16 : index
    %c0_66 = arith.constant 0 : index
    %170 = vector.load %arg16[%c0_64, %c16_65, %c0_66] : memref<2x96x128xf32, #tpu.memory_space<vmem>>, vector<2x64x128xf32>
    %c4 = arith.constant 4 : index
    %c0_67 = arith.constant 0 : index
    %171 = vector.load %arg11[%c4, %c0_67] : memref<9x128xf32, #tpu.memory_space<vmem>>, vector<1x128xf32>
    %172 = vector.shape_cast %171 : vector<1x128xf32> to vector<1x1x128xf32>
    %173 = vector.broadcast %172 : vector<1x1x128xf32> to vector<2x64x128xf32>
    %174 = arith.mulf %170, %173 : vector<2x64x128xf32>
    %175 = arith.addf %169, %174 : vector<2x64x128xf32>
    %c0_68 = arith.constant 0 : index
    %c17 = arith.constant 17 : index
    %c0_69 = arith.constant 0 : index
    %176 = vector.load %arg16[%c0_68, %c17, %c0_69] : memref<2x96x128xf32, #tpu.memory_space<vmem>>, vector<2x64x128xf32>
    %c5 = arith.constant 5 : index
    %c0_70 = arith.constant 0 : index
    %177 = vector.load %arg11[%c5, %c0_70] : memref<9x128xf32, #tpu.memory_space<vmem>>, vector<1x128xf32>
    %178 = vector.shape_cast %177 : vector<1x128xf32> to vector<1x1x128xf32>
    %179 = vector.broadcast %178 : vector<1x1x128xf32> to vector<2x64x128xf32>
    %180 = arith.mulf %176, %179 : vector<2x64x128xf32>
    %181 = vector.broadcast %140 : vector<2x64x1xf32> to vector<2x64x128xf32>
    %182 = arith.mulf %180, %181 : vector<2x64x128xf32>
    %183 = arith.addf %175, %182 : vector<2x64x128xf32>
    %c0_71 = arith.constant 0 : index
    %c23 = arith.constant 23 : index
    %c0_72 = arith.constant 0 : index
    %184 = vector.load %arg16[%c0_71, %c23, %c0_72] : memref<2x96x128xf32, #tpu.memory_space<vmem>>, vector<2x64x128xf32>
    %c6 = arith.constant 6 : index
    %c0_73 = arith.constant 0 : index
    %185 = vector.load %arg11[%c6, %c0_73] : memref<9x128xf32, #tpu.memory_space<vmem>>, vector<1x128xf32>
    %186 = vector.shape_cast %185 : vector<1x128xf32> to vector<1x1x128xf32>
    %187 = vector.broadcast %186 : vector<1x1x128xf32> to vector<2x64x128xf32>
    %188 = arith.mulf %184, %187 : vector<2x64x128xf32>
    %189 = vector.broadcast %136 : vector<2x64x1xf32> to vector<2x64x128xf32>
    %190 = arith.mulf %188, %189 : vector<2x64x128xf32>
    %191 = arith.addf %183, %190 : vector<2x64x128xf32>
    %c0_74 = arith.constant 0 : index
    %c24 = arith.constant 24 : index
    %c0_75 = arith.constant 0 : index
    %192 = vector.load %arg16[%c0_74, %c24, %c0_75] : memref<2x96x128xf32, #tpu.memory_space<vmem>>, vector<2x64x128xf32>
    %c7_76 = arith.constant 7 : index
    %c0_77 = arith.constant 0 : index
    %193 = vector.load %arg11[%c7_76, %c0_77] : memref<9x128xf32, #tpu.memory_space<vmem>>, vector<1x128xf32>
    %194 = vector.shape_cast %193 : vector<1x128xf32> to vector<1x1x128xf32>
    %195 = vector.broadcast %194 : vector<1x1x128xf32> to vector<2x64x128xf32>
    %196 = arith.mulf %192, %195 : vector<2x64x128xf32>
    %197 = arith.addf %191, %196 : vector<2x64x128xf32>
    %c0_78 = arith.constant 0 : index
    %c25 = arith.constant 25 : index
    %c0_79 = arith.constant 0 : index
    %198 = vector.load %arg16[%c0_78, %c25, %c0_79] : memref<2x96x128xf32, #tpu.memory_space<vmem>>, vector<2x64x128xf32>
    %c8_80 = arith.constant 8 : index
    %c0_81 = arith.constant 0 : index
    %199 = vector.load %arg11[%c8_80, %c0_81] : memref<9x128xf32, #tpu.memory_space<vmem>>, vector<1x128xf32>
    %200 = vector.shape_cast %199 : vector<1x128xf32> to vector<1x1x128xf32>
    %201 = vector.broadcast %200 : vector<1x1x128xf32> to vector<2x64x128xf32>
    %202 = arith.mulf %198, %201 : vector<2x64x128xf32>
    %203 = vector.broadcast %140 : vector<2x64x1xf32> to vector<2x64x128xf32>
    %204 = arith.mulf %202, %203 : vector<2x64x128xf32>
    %205 = arith.addf %197, %204 : vector<2x64x128xf32>
    %c0_82 = arith.constant 0 : index
    %c0_83 = arith.constant 0 : index
    %206 = vector.load %arg12[%c0_82, %c0_83] : memref<1x128xf32, #tpu.memory_space<vmem>>, vector<1x128xf32>
    %207 = vector.shape_cast %206 : vector<1x128xf32> to vector<1x1x128xf32>
    %208 = vector.broadcast %207 : vector<1x1x128xf32> to vector<2x64x128xf32>
    %209 = arith.addf %205, %208 : vector<2x64x128xf32>
    %cst_84 = arith.constant 5.000000e-01 : f32
    %210 = vector.broadcast %cst_84 : f32 to vector<2x64x128xf32>
    %211 = arith.mulf %210, %209 : vector<2x64x128xf32>
    %212 = arith.mulf %209, %209 : vector<2x64x128xf32>
    %213 = arith.mulf %212, %209 : vector<2x64x128xf32>
    %cst_85 = arith.constant 4.471500e-02 : f32
    %214 = vector.broadcast %cst_85 : f32 to vector<2x64x128xf32>
    %215 = arith.mulf %214, %213 : vector<2x64x128xf32>
    %216 = arith.addf %209, %215 : vector<2x64x128xf32>
    %cst_86 = arith.constant 0.797884583 : f32
    %217 = vector.broadcast %cst_86 : f32 to vector<2x64x128xf32>
    %218 = arith.mulf %217, %216 : vector<2x64x128xf32>
    %219 = math.tanh %218 : vector<2x64x128xf32>
    %cst_87 = arith.constant 1.000000e+00 : f32
    %220 = vector.broadcast %cst_87 : f32 to vector<2x64x128xf32>
    %221 = arith.addf %220, %219 : vector<2x64x128xf32>
    %222 = arith.mulf %211, %221 : vector<2x64x128xf32>
    %223 = vector.shape_cast %222 : vector<2x64x128xf32> to vector<128x128xf32>
    %224 = arith.truncf %223 : vector<128x128xf32> to vector<128x128xbf16>
    %c0_88 = arith.constant 0 : index
    %c0_89 = arith.constant 0 : index
    %225 = vector.load %arg13[%c0_88, %c0_89] : memref<128x32xbf16, #tpu.memory_space<vmem>>, vector<128x32xbf16>
    %cst_90 = arith.constant dense<0.000000e+00> : vector<128x32xf32>
    %226 = tpu.matmul %224, %225, %cst_90 {dimension_numbers = #tpu.dot_dimension_numbers<[1], [0], [0], [1], [0, 0, 1, 1], [], []>} : vector<128x128xbf16>, vector<128x32xbf16>, vector<128x32xf32> -> vector<128x32xf32>
    %c0_91 = arith.constant 0 : index
    %c0_92 = arith.constant 0 : index
    %227 = vector.load %arg14[%c0_91, %c0_92] : memref<1x32xf32, #tpu.memory_space<vmem>>, vector<1x32xf32>
    %228 = vector.broadcast %227 : vector<1x32xf32> to vector<128x32xf32>
    %229 = arith.addf %226, %228 : vector<128x32xf32>
    %230 = arith.addf %80, %229 : vector<128x32xf32>
    %c0_93 = arith.constant 0 : index
    %c0_94 = arith.constant 0 : index
    %231 = vector.load %arg15[%c0_93, %c0_94] : memref<128x32xf32, #tpu.memory_space<vmem>>, vector<128x32xf32>
    tpu.vector_store %arg15[%c0_93, %c0_94], %230 {strides = array<i32>} : memref<128x32xf32, #tpu.memory_space<vmem>>, vector<128x32xf32>,
    return
  }
  func.func @transform_0(%arg0: i32) -> (i32, i32) {
    %c0_i32 = arith.constant 0 : i32
    %c0_i32_0 = arith.constant 0 : i32
    return %arg0, %c0_i32 : i32, i32
  }
  func.func @transform_1(%arg0: i32) -> (i32, i32) {
    %c0_i32 = arith.constant 0 : i32
    %c0_i32_0 = arith.constant 0 : i32
    %c0_i32_1 = arith.constant 0 : i32
    return %c0_i32, %c0_i32_0 : i32, i32
  }
  func.func @transform_2(%arg0: i32) -> (i32, i32) {
    %c0_i32 = arith.constant 0 : i32
    %c0_i32_0 = arith.constant 0 : i32
    %c0_i32_1 = arith.constant 0 : i32
    return %c0_i32, %c0_i32_0 : i32, i32
  }
  func.func @transform_3(%arg0: i32) -> (i32, i32) {
    %c0_i32 = arith.constant 0 : i32
    %c0_i32_0 = arith.constant 0 : i32
    %c0_i32_1 = arith.constant 0 : i32
    return %c0_i32, %c0_i32_0 : i32, i32
  }
  func.func @transform_4(%arg0: i32) -> (i32, i32) {
    %c0_i32 = arith.constant 0 : i32
    %c0_i32_0 = arith.constant 0 : i32
    %c0_i32_1 = arith.constant 0 : i32
    return %c0_i32, %c0_i32_0 : i32, i32
  }
  func.func @transform_5(%arg0: i32) -> (i32, i32) {
    %c0_i32 = arith.constant 0 : i32
    %c0_i32_0 = arith.constant 0 : i32
    %c0_i32_1 = arith.constant 0 : i32
    return %c0_i32, %c0_i32_0 : i32, i32
  }
  func.func @transform_6(%arg0: i32) -> (i32, i32) {
    %c0_i32 = arith.constant 0 : i32
    %c0_i32_0 = arith.constant 0 : i32
    %c0_i32_1 = arith.constant 0 : i32
    return %c0_i32, %c0_i32_0 : i32, i32
  }
  func.func @transform_7(%arg0: i32) -> (i32, i32) {
    %c0_i32 = arith.constant 0 : i32
    %c0_i32_0 = arith.constant 0 : i32
    %c0_i32_1 = arith.constant 0 : i32
    return %c0_i32, %c0_i32_0 : i32, i32
  }
  func.func @transform_8(%arg0: i32) -> (i32, i32) {
    %c0_i32 = arith.constant 0 : i32
    %c0_i32_0 = arith.constant 0 : i32
    %c0_i32_1 = arith.constant 0 : i32
    return %c0_i32, %c0_i32_0 : i32, i32
  }
  func.func @transform_9(%arg0: i32) -> (i32, i32) {
    %c0_i32 = arith.constant 0 : i32
    %c0_i32_0 = arith.constant 0 : i32
    %c0_i32_1 = arith.constant 0 : i32
    return %c0_i32, %c0_i32_0 : i32, i32
  }
  func.func @transform_10(%arg0: i32) -> (i32, i32) {
    %c0_i32 = arith.constant 0 : i32
    %c0_i32_0 = arith.constant 0 : i32
    %c0_i32_1 = arith.constant 0 : i32
    return %c0_i32, %c0_i32_0 : i32, i32
  }
  func.func @transform_11(%arg0: i32) -> (i32, i32) {
    %c0_i32 = arith.constant 0 : i32
    %c0_i32_0 = arith.constant 0 : i32
    %c0_i32_1 = arith.constant 0 : i32
    return %c0_i32, %c0_i32_0 : i32, i32
  }
  func.func @transform_12(%arg0: i32) -> (i32, i32) {
    %c0_i32 = arith.constant 0 : i32
    %c0_i32_0 = arith.constant 0 : i32
    %c0_i32_1 = arith.constant 0 : i32
    return %c0_i32, %c0_i32_0 : i32, i32
  }
  func.func @transform_13(%arg0: i32) -> (i32, i32) {
    %c0_i32 = arith.constant 0 : i32
    %c0_i32_0 = arith.constant 0 : i32
    %c0_i32_1 = arith.constant 0 : i32
    return %c0_i32, %c0_i32_0 : i32, i32
  }
  func.func @transform_14(%arg0: i32) -> (i32, i32) {
    %c0_i32 = arith.constant 0 : i32
    %c0_i32_0 = arith.constant 0 : i32
    return %arg0, %c0_i32 : i32, i32
  }
}

</mosaic_0001>

<llo_original>
// kernel: tpu_custom_call.1
$region0: #{tpu_custom_call.1}
  #allocation0 [shape = 'u32[]', space=smem, size = 0x4, offset = 0x4, fixed_abs, tag = 'smem constant byte address 0x4 - core index']
  #allocation1 [shape = 'u32[144,128]{1,0:T(1,128)}', space=vmem, size = 0x12000, scoped, tag = 'internal scratch']
  #allocation2 [shape = 'f32[2,96,128]{2,1,0:T(8,128)}', space=vmem, size = 0x18000, scoped, tag = 'scratch operand']
  %s0 = inlined_call_operand.vmem [shape: f32[256,32], index: 0, kind: input, shape index: {}]
  %s1 = inlined_call_operand.vmem [shape: f32[1,32], index: 1, kind: input, shape index: {}]
  %s2 = inlined_call_operand.vmem [shape: f32[1,32], index: 2, kind: input, shape index: {}]
  %s3 = inlined_call_operand.vmem [shape: bf16[32,96], index: 3, kind: input, shape index: {}]
  %s4 = inlined_call_operand.vmem [shape: bf16[32,32], index: 4, kind: input, shape index: {}]
  %s5 = inlined_call_operand.vmem [shape: f32[1,32], index: 5, kind: input, shape index: {}]
  %s6 = inlined_call_operand.vmem [shape: f32[1,32], index: 6, kind: input, shape index: {}]
  %s7 = inlined_call_operand.vmem [shape: f32[1,32], index: 7, kind: input, shape index: {}]
  %s8 = inlined_call_operand.vmem [shape: bf16[32,128], index: 8, kind: input, shape index: {}]
  %s9 = inlined_call_operand.vmem [shape: f32[1,128], index: 9, kind: input, shape index: {}]
  %s10 = inlined_call_operand.vmem [shape: f32[9,128], index: 10, kind: input, shape index: {}]
  %s11 = inlined_call_operand.vmem [shape: f32[1,128], index: 11, kind: input, shape index: {}]
  %s12 = inlined_call_operand.vmem [shape: bf16[128,32], index: 12, kind: input, shape index: {}]
  %s13 = inlined_call_operand.vmem [shape: f32[1,32], index: 13, kind: input, shape index: {}]
  %s14 = inlined_call_operand.vmem [shape: f32[256,32], index: 14, kind: output, shape index: {}]
  %s15 = sld [smem:[#allocation0]]
  $region89: #{tpu_custom_call.1} parent=0
    _
  %s17 = ssub.s32 1, %s15
  %s18 = scalar_select 0, %s17, %s15
  loop: start=0, step=1, limit=4
  $region2: #{tpu_custom_call.1} parent=0 // loop_pre_header
    _
  $region3: #{tpu_custom_call.1} parent=0 // loop_header
    %s20 = sphi 0, %s24
    %p21 = scmp.ge.s32.totalorder %s20, 4
    %s30 = sphi 0, %s32
    %s33 = sphi 0, %s30
    %s34 = sphi 0, %s33
    %s50 = sphi 0, %s34
    %s54 = sphi 0, %s54
    %s56 = sphi 0, %s54
    %s57 = sphi 0, %s56
    %s71 = sphi 0, %s57
    %s75 = sphi 0, %s75
    %s77 = sphi 0, %s75
    %s78 = sphi 0, %s77
    %s92 = sphi 0, %s78
    %s96 = sphi 0, %s96
    %s98 = sphi 0, %s96
    %s99 = sphi 0, %s98
    %s113 = sphi 0, %s99
    %s117 = sphi 0, %s117
    %s119 = sphi 0, %s117
    %s120 = sphi 0, %s119
    %s134 = sphi 0, %s120
    %s138 = sphi 0, %s138
    %s140 = sphi 0, %s138
    %s141 = sphi 0, %s140
    %s155 = sphi 0, %s141
    %s159 = sphi 0, %s159
    %s161 = sphi 0, %s159
    %s162 = sphi 0, %s161
    %s176 = sphi 0, %s162
    %s180 = sphi 0, %s180
    %s182 = sphi 0, %s180
    %s183 = sphi 0, %s182
    %s197 = sphi 0, %s183
    %s201 = sphi 0, %s201
    %s203 = sphi 0, %s201
    %s204 = sphi 0, %s203
    %s218 = sphi 0, %s204
    %s222 = sphi 0, %s222
    %s224 = sphi 0, %s222
    %s225 = sphi 0, %s224
    %s239 = sphi 0, %s225
    %s243 = sphi 0, %s243
    %s245 = sphi 0, %s243
    %s246 = sphi 0, %s245
    %s260 = sphi 0, %s246
    %s264 = sphi 0, %s264
    %s266 = sphi 0, %s264
    %s267 = sphi 0, %s266
    %s281 = sphi 0, %s267
    %s285 = sphi 0, %s285
    %s287 = sphi 0, %s285
    %s288 = sphi 0, %s287
    %s302 = sphi 0, %s288
    %s306 = sphi 0, %s306
    %s308 = sphi 0, %s306
    %s309 = sphi 0, %s308
    %s323 = sphi 0, %s309
    %s329 = sphi 0, %s331
    %s332 = sphi 0, %s329
    %s333 = sphi 0, %s332
    %s349 = sphi 0, %s333
  $region4: #{tpu_custom_call.1} parent=0 // loop_header_branch
    %23 = sbr.rel (%p21) target = $region8
  $region5: #{tpu_custom_call.1} parent=0 // loop_body
    %s25 = ssub.s32 %s20, 1
    %s26 = ssub.s32 %s20, 2
    %s27 = sadd.s32 %s20, 1
    %s28 = ssub.s32 %s20, %s27
    %p29 = scmp.eq.s32.totalorder %s28, 0
    %s31 = sadd.s32 %s30, 1
    %s32 = scalar_select %p29, %s30, %s31
    %p35 = pneg %p29
    %p36 = scmp.eq.s32.totalorder %s20, 1
    %p37 = por %p35, %p36
    %p38 = scmp.ne.s32.totalorder %s30, %s33
    %p39 = scmp.eq.s32.totalorder %s20, 0
    %p40 = por %p38, %p39
    %p41 = scmp.ne.s32.totalorder %s30, %s33
    %p42 = scmp.eq.s32.totalorder %s25, 1
    %p43 = por %p41, %p42
    %p44 = scmp.ne.s32.totalorder %s33, %s34
    %p45 = scmp.eq.s32.totalorder %s25, 0
    %p46 = por %p44, %p45
    %p47 = scmp.ne.s32.totalorder %s33, %s34
    %p48 = scmp.eq.s32.totalorder %s26, 1
    %p49 = por %p47, %p48
    %p51 = scmp.ne.s32.totalorder %s34, %s50
    %p52 = scmp.eq.s32.totalorder %s26, 0
    %p53 = por %p51, %p52
    %s55 = sadd.s32 %s54, 1
    %p58 = scmp.eq.s32.totalorder %s20, 1
    %p59 = scmp.ne.s32.totalorder %s54, %s56
    %p60 = scmp.eq.s32.totalorder %s20, 0
    %p61 = por %p59, %p60
    %p62 = scmp.ne.s32.totalorder %s54, %s56
    %p63 = scmp.eq.s32.totalorder %s25, 1
    %p64 = por %p62, %p63
    %p65 = scmp.ne.s32.totalorder %s56, %s57
    %p66 = scmp.eq.s32.totalorder %s25, 0
    %p67 = por %p65, %p66
    %p68 = scmp.ne.s32.totalorder %s56, %s57
    %p69 = scmp.eq.s32.totalorder %s26, 1
    %p70 = por %p68, %p69
    %p72 = scmp.ne.s32.totalorder %s57, %s71
    %p73 = scmp.eq.s32.totalorder %s26, 0
    %p74 = por %p72, %p73
    %s76 = sadd.s32 %s75, 1
    %p79 = scmp.eq.s32.totalorder %s20, 1
    %p80 = scmp.ne.s32.totalorder %s75, %s77
    %p81 = scmp.eq.s32.totalorder %s20, 0
    %p82 = por %p80, %p81
    %p83 = scmp.ne.s32.totalorder %s75, %s77
    %p84 = scmp.eq.s32.totalorder %s25, 1
    %p85 = por %p83, %p84
    %p86 = scmp.ne.s32.totalorder %s77, %s78
    %p87 = scmp.eq.s32.totalorder %s25, 0
    %p88 = por %p86, %p87
    %p89 = scmp.ne.s32.totalorder %s77, %s78
    %p90 = scmp.eq.s32.totalorder %s26, 1
    %p91 = por %p89, %p90
    %p93 = scmp.ne.s32.totalorder %s78, %s92
    %p94 = scmp.eq.s32.totalorder %s26, 0
    %p95 = por %p93, %p94
    %s97 = sadd.s32 %s96, 1
    %p100 = scmp.eq.s32.totalorder %s20, 1
    %p101 = scmp.ne.s32.totalorder %s96, %s98
    %p102 = scmp.eq.s32.totalorder %s20, 0
    %p103 = por %p101, %p102
    %p104 = scmp.ne.s32.totalorder %s96, %s98
    %p105 = scmp.eq.s32.totalorder %s25, 1
    %p106 = por %p104, %p105
    %p107 = scmp.ne.s32.totalorder %s98, %s99
    %p108 = scmp.eq.s32.totalorder %s25, 0
    %p109 = por %p107, %p108
    %p110 = scmp.ne.s32.totalorder %s98, %s99
    %p111 = scmp.eq.s32.totalorder %s26, 1
    %p112 = por %p110, %p111
    %p114 = scmp.ne.s32.totalorder %s99, %s113
    %p115 = scmp.eq.s32.totalorder %s26, 0
    %p116 = por %p114, %p115
    %s118 = sadd.s32 %s117, 1
    %p121 = scmp.eq.s32.totalorder %s20, 1
    %p122 = scmp.ne.s32.totalorder %s117, %s119
    %p123 = scmp.eq.s32.totalorder %s20, 0
    %p124 = por %p122, %p123
    %p125 = scmp.ne.s32.totalorder %s117, %s119
    %p126 = scmp.eq.s32.totalorder %s25, 1
    %p127 = por %p125, %p126
    %p128 = scmp.ne.s32.totalorder %s119, %s120
    %p129 = scmp.eq.s32.totalorder %s25, 0
    %p130 = por %p128, %p129
    %p131 = scmp.ne.s32.totalorder %s119, %s120
    %p132 = scmp.eq.s32.totalorder %s26, 1
    %p133 = por %p131, %p132
    %p135 = scmp.ne.s32.totalorder %s120, %s134
    %p136 = scmp.eq.s32.totalorder %s26, 0
    %p137 = por %p135, %p136
    %s139 = sadd.s32 %s138, 1
    %p142 = scmp.eq.s32.totalorder %s20, 1
    %p143 = scmp.ne.s32.totalorder %s138, %s140
    %p144 = scmp.eq.s32.totalorder %s20, 0
    %p145 = por %p143, %p144
    %p146 = scmp.ne.s32.totalorder %s138, %s140
    %p147 = scmp.eq.s32.totalorder %s25, 1
    %p148 = por %p146, %p147
    %p149 = scmp.ne.s32.totalorder %s140, %s141
    %p150 = scmp.eq.s32.totalorder %s25, 0
    %p151 = por %p149, %p150
    %p152 = scmp.ne.s32.totalorder %s140, %s141
    %p153 = scmp.eq.s32.totalorder %s26, 1
    %p154 = por %p152, %p153
    %p156 = scmp.ne.s32.totalorder %s141, %s155
    %p157 = scmp.eq.s32.totalorder %s26, 0
    %p158 = por %p156, %p157
    %s160 = sadd.s32 %s159, 1
    %p163 = scmp.eq.s32.totalorder %s20, 1
    %p164 = scmp.ne.s32.totalorder %s159, %s161
    %p165 = scmp.eq.s32.totalorder %s20, 0
    %p166 = por %p164, %p165
    %p167 = scmp.ne.s32.totalorder %s159, %s161
    %p168 = scmp.eq.s32.totalorder %s25, 1
    %p169 = por %p167, %p168
    %p170 = scmp.ne.s32.totalorder %s161, %s162
    %p171 = scmp.eq.s32.totalorder %s25, 0
    %p172 = por %p170, %p171
    %p173 = scmp.ne.s32.totalorder %s161, %s162
    %p174 = scmp.eq.s32.totalorder %s26, 1
    %p175 = por %p173, %p174
    %p177 = scmp.ne.s32.totalorder %s162, %s176
    %p178 = scmp.eq.s32.totalorder %s26, 0
    %p179 = por %p177, %p178
    %s181 = sadd.s32 %s180, 1
    %p184 = scmp.eq.s32.totalorder %s20, 1
    %p185 = scmp.ne.s32.totalorder %s180, %s182
    %p186 = scmp.eq.s32.totalorder %s20, 0
    %p187 = por %p185, %p186
    %p188 = scmp.ne.s32.totalorder %s180, %s182
    %p189 = scmp.eq.s32.totalorder %s25, 1
    %p190 = por %p188, %p189
    %p191 = scmp.ne.s32.totalorder %s182, %s183
    %p192 = scmp.eq.s32.totalorder %s25, 0
    %p193 = por %p191, %p192
    %p194 = scmp.ne.s32.totalorder %s182, %s183
    %p195 = scmp.eq.s32.totalorder %s26, 1
    %p196 = por %p194, %p195
    %p198 = scmp.ne.s32.totalorder %s183, %s197
    %p199 = scmp.eq.s32.totalorder %s26, 0
    %p200 = por %p198, %p199
    %s202 = sadd.s32 %s201, 1
    %p205 = scmp.eq.s32.totalorder %s20, 1
    %p206 = scmp.ne.s32.totalorder %s201, %s203
    %p207 = scmp.eq.s32.totalorder %s20, 0
    %p208 = por %p206, %p207
    %p209 = scmp.ne.s32.totalorder %s201, %s203
    %p210 = scmp.eq.s32.totalorder %s25, 1
    %p211 = por %p209, %p210
    %p212 = scmp.ne.s32.totalorder %s203, %s204
    %p213 = scmp.eq.s32.totalorder %s25, 0
    %p214 = por %p212, %p213
    %p215 = scmp.ne.s32.totalorder %s203, %s204
    %p216 = scmp.eq.s32.totalorder %s26, 1
    %p217 = por %p215, %p216
    %p219 = scmp.ne.s32.totalorder %s204, %s218
    %p220 = scmp.eq.s32.totalorder %s26, 0
    %p221 = por %p219, %p220
    %s223 = sadd.s32 %s222, 1
    %p226 = scmp.eq.s32.totalorder %s20, 1
    %p227 = scmp.ne.s32.totalorder %s222, %s224
    %p228 = scmp.eq.s32.totalorder %s20, 0
    %p229 = por %p227, %p228
    %p230 = scmp.ne.s32.totalorder %s222, %s224
    %p231 = scmp.eq.s32.totalorder %s25, 1
    %p232 = por %p230, %p231
    %p233 = scmp.ne.s32.totalorder %s224, %s225
    %p234 = scmp.eq.s32.totalorder %s25, 0
    %p235 = por %p233, %p234
    %p236 = scmp.ne.s32.totalorder %s224, %s225
    %p237 = scmp.eq.s32.totalorder %s26, 1
    %p238 = por %p236, %p237
    %p240 = scmp.ne.s32.totalorder %s225, %s239
    %p241 = scmp.eq.s32.totalorder %s26, 0
    %p242 = por %p240, %p241
    %s244 = sadd.s32 %s243, 1
    %p247 = scmp.eq.s32.totalorder %s20, 1
    %p248 = scmp.ne.s32.totalorder %s243, %s245
    %p249 = scmp.eq.s32.totalorder %s20, 0
    %p250 = por %p248, %p249
    %p251 = scmp.ne.s32.totalorder %s243, %s245
    %p252 = scmp.eq.s32.totalorder %s25, 1
    %p253 = por %p251, %p252
    %p254 = scmp.ne.s32.totalorder %s245, %s246
    %p255 = scmp.eq.s32.totalorder %s25, 0
    %p256 = por %p254, %p255
    %p257 = scmp.ne.s32.totalorder %s245, %s246
    %p258 = scmp.eq.s32.totalorder %s26, 1
    %p259 = por %p257, %p258
    %p261 = scmp.ne.s32.totalorder %s246, %s260
    %p262 = scmp.eq.s32.totalorder %s26, 0
    %p263 = por %p261, %p262
    %s265 = sadd.s32 %s264, 1
    %p268 = scmp.eq.s32.totalorder %s20, 1
    %p269 = scmp.ne.s32.totalorder %s264, %s266
    %p270 = scmp.eq.s32.totalorder %s20, 0
    %p271 = por %p269, %p270
    %p272 = scmp.ne.s32.totalorder %s264, %s266
    %p273 = scmp.eq.s32.totalorder %s25, 1
    %p274 = por %p272, %p273
    %p275 = scmp.ne.s32.totalorder %s266, %s267
    %p276 = scmp.eq.s32.totalorder %s25, 0
    %p277 = por %p275, %p276
    %p278 = scmp.ne.s32.totalorder %s266, %s267
    %p279 = scmp.eq.s32.totalorder %s26, 1
    %p280 = por %p278, %p279
    %p282 = scmp.ne.s32.totalorder %s267, %s281
    %p283 = scmp.eq.s32.totalorder %s26, 0
    %p284 = por %p282, %p283
    %s286 = sadd.s32 %s285, 1
    %p289 = scmp.eq.s32.totalorder %s20, 1
    %p290 = scmp.ne.s32.totalorder %s285, %s287
    %p291 = scmp.eq.s32.totalorder %s20, 0
    %p292 = por %p290, %p291
    %p293 = scmp.ne.s32.totalorder %s285, %s287
    %p294 = scmp.eq.s32.totalorder %s25, 1
    %p295 = por %p293, %p294
    %p296 = scmp.ne.s32.totalorder %s287, %s288
    %p297 = scmp.eq.s32.totalorder %s25, 0
    %p298 = por %p296, %p297
    %p299 = scmp.ne.s32.totalorder %s287, %s288
    %p300 = scmp.eq.s32.totalorder %s26, 1
    %p301 = por %p299, %p300
    %p303 = scmp.ne.s32.totalorder %s288, %s302
    %p304 = scmp.eq.s32.totalorder %s26, 0
    %p305 = por %p303, %p304
    %s307 = sadd.s32 %s306, 1
    %p310 = scmp.eq.s32.totalorder %s20, 1
    %p311 = scmp.ne.s32.totalorder %s306, %s308
    %p312 = scmp.eq.s32.totalorder %s20, 0
    %p313 = por %p311, %p312
    %p314 = scmp.ne.s32.totalorder %s306, %s308
    %p315 = scmp.eq.s32.totalorder %s25, 1
    %p316 = por %p314, %p315
    %p317 = scmp.ne.s32.totalorder %s308, %s309
    %p318 = scmp.eq.s32.totalorder %s25, 0
    %p319 = por %p317, %p318
    %p320 = scmp.ne.s32.totalorder %s308, %s309
    %p321 = scmp.eq.s32.totalorder %s26, 1
    %p322 = por %p320, %p321
    %p324 = scmp.ne.s32.totalorder %s309, %s323
    %p325 = scmp.eq.s32.totalorder %s26, 0
    %p326 = por %p324, %p325
    %s327 = ssub.s32 %s20, %s27
    %p328 = scmp.eq.s32.totalorder %s327, 0
    %s330 = sadd.s32 %s329, 1
    %s331 = scalar_select %p328, %s329, %s330
    %p334 = pneg %p328
    %p335 = scmp.eq.s32.totalorder %s20, 1
    %p336 = por %p334, %p335
    %p337 = scmp.ne.s32.totalorder %s329, %s332
    %p338 = scmp.eq.s32.totalorder %s20, 0
    %p339 = por %p337, %p338
    %p340 = scmp.ne.s32.totalorder %s329, %s332
    %p341 = scmp.eq.s32.totalorder %s25, 1
    %p342 = por %p340, %p341
    %p343 = scmp.ne.s32.totalorder %s332, %s333
    %p344 = scmp.eq.s32.totalorder %s25, 0
    %p345 = por %p343, %p344
    %p346 = scmp.ne.s32.totalorder %s332, %s333
    %p347 = scmp.eq.s32.totalorder %s26, 1
    %p348 = por %p346, %p347
    %p350 = scmp.ne.s32.totalorder %s333, %s349
    %p351 = scmp.eq.s32.totalorder %s26, 0
    %p352 = por %p350, %p351
    %p353 = scmp.le.s32.totalorder 1, %s20
    %p354 = scmp.lt.s32.totalorder %s20, 3
    %p355 = pnand %p353, %p354
    %p356 = pneg %p355
    // Predicated region
    $region9: #{tpu_custom_call.1} parent=5 // pred_check
      _
    $region10: #{tpu_custom_call.1} parent=5 // pred_check_branch
      %358 = sbr.rel (%p355) target = $region12
    $region11: #{tpu_custom_call.1} parent=5 // pred_region
      %s359 = ssub.s32 %s20, 1
      // Predicated region
      $region13: #{tpu_custom_call.1} parent=11 // pred_check
        %p360 = pneg %p67
      $region14: #{tpu_custom_call.1} parent=11 // pred_check_branch
        %362 = sbr.rel (%p360) target = $region16
      $region15: #{tpu_custom_call.1} parent=11 // pred_region
        _
      $region16: #{tpu_custom_call.1} parent=11 // pred_fallthru
        _
      // Predicated region
      $region17: #{tpu_custom_call.1} parent=11 // pred_check
        %p363 = pneg %p88
      $region18: #{tpu_custom_call.1} parent=11 // pred_check_branch
        %365 = sbr.rel (%p363) target = $region20
      $region19: #{tpu_custom_call.1} parent=11 // pred_region
        _
      $region20: #{tpu_custom_call.1} parent=11 // pred_fallthru
        _
      // Predicated region
      $region21: #{tpu_custom_call.1} parent=11 // pred_check
        %p366 = pneg %p109
      $region22: #{tpu_custom_call.1} parent=11 // pred_check_branch
        %368 = sbr.rel (%p366) target = $region24
      $region23: #{tpu_custom_call.1} parent=11 // pred_region
        _
      $region24: #{tpu_custom_call.1} parent=11 // pred_fallthru
        _
      // Predicated region
      $region25: #{tpu_custom_call.1} parent=11 // pred_check
        %p369 = pneg %p130
      $region26: #{tpu_custom_call.1} parent=11 // pred_check_branch
        %371 = sbr.rel (%p369) target = $region28
      $region27: #{tpu_custom_call.1} parent=11 // pred_region
        _
      $region28: #{tpu_custom_call.1} parent=11 // pred_fallthru
        _
      // Predicated region
      $region29: #{tpu_custom_call.1} parent=11 // pred_check
        %p372 = pneg %p151
      $region30: #{tpu_custom_call.1} parent=11 // pred_check_branch
        %374 = sbr.rel (%p372) target = $region32
      $region31: #{tpu_custom_call.1} parent=11 // pred_region
        _
      $region32: #{tpu_custom_call.1} parent=11 // pred_fallthru
        _
      // Predicated region
      $region33: #{tpu_custom_call.1} parent=11 // pred_check
        %p375 = pneg %p172
      $region34: #{tpu_custom_call.1} parent=11 // pred_check_branch
        %377 = sbr.rel (%p375) target = $region36
      $region35: #{tpu_custom_call.1} parent=11 // pred_region
        _
      $region36: #{tpu_custom_call.1} parent=11 // pred_fallthru
        _
      // Predicated region
      $region37: #{tpu_custom_call.1} parent=11 // pred_check
        %p378 = pneg %p193
      $region38: #{tpu_custom_call.1} parent=11 // pred_check_branch
        %380 = sbr.rel (%p378) target = $region40
      $region39: #{tpu_custom_call.1} parent=11 // pred_region
        _
      $region40: #{tpu_custom_call.1} parent=11 // pred_fallthru
        _
      // Predicated region
      $region41: #{tpu_custom_call.1} parent=11 // pred_check
        %p381 = pneg %p214
      $region42: #{tpu_custom_call.1} parent=11 // pred_check_branch
        %383 = sbr.rel (%p381) target = $region44
      $region43: #{tpu_custom_call.1} parent=11 // pred_region
        _
      $region44: #{tpu_custom_call.1} parent=11 // pred_fallthru
        _
      // Predicated region
      $region45: #{tpu_custom_call.1} parent=11 // pred_check
        %p384 = pneg %p235
      $region46: #{tpu_custom_call.1} parent=11 // pred_check_branch
        %386 = sbr.rel (%p384) target = $region48
      $region47: #{tpu_custom_call.1} parent=11 // pred_region
        _
      $region48: #{tpu_custom_call.1} parent=11 // pred_fallthru
        _
      // Predicated region
      $region49: #{tpu_custom_call.1} parent=11 // pred_check
        %p387 = pneg %p256
      $region50: #{tpu_custom_call.1} parent=11 // pred_check_branch
        %389 = sbr.rel (%p387) target = $region52
      $region51: #{tpu_custom_call.1} parent=11 // pred_region
        _
      $region52: #{tpu_custom_call.1} parent=11 // pred_fallthru
        _
      // Predicated region
      $region53: #{tpu_custom_call.1} parent=11 // pred_check
        %p390 = pneg %p277
      $region54: #{tpu_custom_call.1} parent=11 // pred_check_branch
        %392 = sbr.rel (%p390) target = $region56
      $region55: #{tpu_custom_call.1} parent=11 // pred_region
        _
      $region56: #{tpu_custom_call.1} parent=11 // pred_fallthru
        _
      // Predicated region
      $region57: #{tpu_custom_call.1} parent=11 // pred_check
        %p393 = pneg %p298
      $region58: #{tpu_custom_call.1} parent=11 // pred_check_branch
        %395 = sbr.rel (%p393) target = $region60
      $region59: #{tpu_custom_call.1} parent=11 // pred_region
        _
      $region60: #{tpu_custom_call.1} parent=11 // pred_fallthru
        _
      // Predicated region
      $region61: #{tpu_custom_call.1} parent=11 // pred_check
        %p396 = pneg %p319
      $region62: #{tpu_custom_call.1} parent=11 // pred_check_branch
        %398 = sbr.rel (%p396) target = $region64
      $region63: #{tpu_custom_call.1} parent=11 // pred_region
        _
      $region64: #{tpu_custom_call.1} parent=11 // pred_fallthru
        _
    $region12: #{tpu_custom_call.1} parent=5 // pred_fallthru
      _
    %p399 = scmp.lt.s32.totalorder %s20, 2
    // Predicated region
    $region65: #{tpu_custom_call.1} parent=5 // pred_check
      %p400 = pneg %p399
    $region66: #{tpu_custom_call.1} parent=5 // pred_check_branch
      %402 = sbr.rel (%p400) target = $region68
    $region67: #{tpu_custom_call.1} parent=5 // pred_region
      // Predicated region
      $region69: #{tpu_custom_call.1} parent=67 // pred_check
        %p403 = pneg %p40
      $region70: #{tpu_custom_call.1} parent=67 // pred_check_branch
        %405 = sbr.rel (%p403) target = $region72
      $region71: #{tpu_custom_call.1} parent=67 // pred_region
        %s406 = smul.u32 16, %s20
        %p407 = scmp.lt.s32.totalorder %s406, 31
        %s408 = scalar_select %p407, %s406, 31
        %s409 = smul.addr %s408, 8
        %s410 = scalar_lea.vmem %s0, %s409
        %s411 = smul.u32 16, %s20
      $region72: #{tpu_custom_call.1} parent=67 // pred_fallthru
        _
    $region68: #{tpu_custom_call.1} parent=5 // pred_fallthru
      _
    %p412 = scmp.le.s32.totalorder 1, %s20
    %p413 = scmp.lt.s32.totalorder %s20, 3
    %p414 = pnand %p412, %p413
    %p415 = pneg %p414
    // Predicated region
    $region73: #{tpu_custom_call.1} parent=5 // pred_check
      _
    $region74: #{tpu_custom_call.1} parent=5 // pred_check_branch
      %417 = sbr.rel (%p414) target = $region76
    $region75: #{tpu_custom_call.1} parent=5 // pred_region
      %s418 = ssub.s32 %s20, 1
      %s419 = smul.u32 16, %s25
      %p420 = scmp.lt.s32.totalorder %s419, 31
      %s421 = scalar_select %p420, %s419, 31
      %s422 = smul.addr %s421, 8
      %s423 = scalar_lea.vmem %s0, %s422
      %p424 = pneg %p46
      %p425 = pneg %p43
      %p426 = pneg %p67
      %p427 = pneg %p64
      %p428 = pneg %p88
      %p429 = pneg %p85
      %p430 = pneg %p109
      %p431 = pneg %p106
      %p432 = pneg %p130
      %p433 = pneg %p127
      %p434 = pneg %p151
      %p435 = pneg %p148
      %p436 = pneg %p172
      %p437 = pneg %p169
      %p438 = pneg %p193
      %p439 = pneg %p190
      %p440 = pneg %p214
      %p441 = pneg %p211
      %p442 = pneg %p235
      %p443 = pneg %p232
      %p444 = pneg %p256
      %p445 = pneg %p253
      %p446 = pneg %p277
      %p447 = pneg %p274
      %p448 = pneg %p298
      %p449 = pneg %p295
      %p450 = pneg %p319
      %p451 = pneg %p316
      %p452 = pneg %p345
      %p453 = pneg %p342
      %s454 = smul.u32 16, %s25
      %p455 = scmp.lt.s32.totalorder %s454, 31
      %s456 = scalar_select %p455, %s454, 31
      %s457 = smul.addr %s456, 8
      %s458 = scalar_lea.vmem %s14, %s457
      %s459 = smul.u32 16, %s25
      %p460 = scmp.lt.s32.totalorder %s459, 31
      %s461 = scalar_select %p460, %s459, 31
      %s462 = smul.addr %s461, 8
      %s463 = scalar_lea.vmem %s0, %s462
      %s464 = smul.u32 16, %s25
      %s465 = smul.u32 16, %s25
      %p466 = scmp.lt.s32.totalorder %s465, 31
      %s467 = scalar_select %p466, %s465, 31
      %s468 = smul.addr %s467, 8
      %s469 = scalar_lea.vmem %s14, %s468
      %s470 = smul.u32 16, %s25
      %v472 = vld [vmem:[%s463] sm:$0xff]
      %v473 = vld [vmem:[%s463 + $0x8] sm:$0xff]
      %v474 = vld [vmem:[%s463 + $0x10] sm:$0xff]
      %v475 = vld [vmem:[%s463 + $0x18] sm:$0xff]
      %v476 = vld [vmem:[%s463 + $0x20] sm:$0xff]
      %v477 = vld [vmem:[%s463 + $0x28] sm:$0xff]
      %v478 = vld [vmem:[%s463 + $0x30] sm:$0xff]
      %v479 = vld [vmem:[%s463 + $0x38] sm:$0xff]
      %v480 = vld [vmem:[%s463 + $0x40] sm:$0xff]
      %v481 = vld [vmem:[%s463 + $0x48] sm:$0xff]
      %v482 = vld [vmem:[%s463 + $0x50] sm:$0xff]
      %v483 = vld [vmem:[%s463 + $0x58] sm:$0xff]
      %v484 = vld [vmem:[%s463 + $0x60] sm:$0xff]
      %v485 = vld [vmem:[%s463 + $0x68] sm:$0xff]
      %v486 = vld [vmem:[%s463 + $0x70] sm:$0xff]
      %v487 = vld [vmem:[%s463 + $0x78] sm:$0xff]
      %v488 = vld [vmem:[%s1] sm:$0x1]
      %v489 = vld [vmem:[%s2] sm:$0x1]
      %vm490 = vcmask 261120
      %v491 = vsel %vm490, %v472, 0.0
      %492 = vadd.xlane.f32.xlu0 %v491
      %v493 = vpop.xlane.xlu0 %492
      %v494 = vsel %vm490, %v473, 0.0
      %495 = vadd.xlane.f32.xlu0 %v494
      %v496 = vpop.xlane.xlu0 %495
      %v497 = vsel %vm490, %v474, 0.0
      %498 = vadd.xlane.f32.xlu0 %v497
      %v499 = vpop.xlane.xlu0 %498
      %v500 = vsel %vm490, %v475, 0.0
      %501 = vadd.xlane.f32.xlu0 %v500
      %v502 = vpop.xlane.xlu0 %501
      %v503 = vsel %vm490, %v476, 0.0
      %504 = vadd.xlane.f32.xlu0 %v503
      %v505 = vpop.xlane.xlu0 %504
      %v506 = vsel %vm490, %v477, 0.0
      %507 = vadd.xlane.f32.xlu0 %v506
      %v508 = vpop.xlane.xlu0 %507
      %v509 = vsel %vm490, %v478, 0.0
      %510 = vadd.xlane.f32.xlu0 %v509
      %v511 = vpop.xlane.xlu0 %510
      %v512 = vsel %vm490, %v479, 0.0
      %513 = vadd.xlane.f32.xlu0 %v512
      %v514 = vpop.xlane.xlu0 %513
      %v515 = vsel %vm490, %v480, 0.0
      %516 = vadd.xlane.f32.xlu0 %v515
      %v517 = vpop.xlane.xlu0 %516
      %v518 = vsel %vm490, %v481, 0.0
      %519 = vadd.xlane.f32.xlu0 %v518
      %v520 = vpop.xlane.xlu0 %519
      %v521 = vsel %vm490, %v482, 0.0
      %522 = vadd.xlane.f32.xlu0 %v521
      %v523 = vpop.xlane.xlu0 %522
      %v524 = vsel %vm490, %v483, 0.0
      %525 = vadd.xlane.f32.xlu0 %v524
      %v526 = vpop.xlane.xlu0 %525
      %v527 = vsel %vm490, %v484, 0.0
      %528 = vadd.xlane.f32.xlu0 %v527
      %v529 = vpop.xlane.xlu0 %528
      %v530 = vsel %vm490, %v485, 0.0
      %531 = vadd.xlane.f32.xlu0 %v530
      %v532 = vpop.xlane.xlu0 %531
      %v533 = vsel %vm490, %v486, 0.0
      %534 = vadd.xlane.f32.xlu0 %v533
      %v535 = vpop.xlane.xlu0 %534
      %v536 = vsel %vm490, %v487, 0.0
      %537 = vadd.xlane.f32.xlu0 %v536
      %v538 = vpop.xlane.xlu0 %537
      %v539 = vrcp.pop 32.0
      %v540 = vmul.f32 %v493, %v539
      %v541 = vmul.f32 %v496, %v539
      %v542 = vmul.f32 %v499, %v539
      %v543 = vmul.f32 %v502, %v539
      %v544 = vmul.f32 %v505, %v539
      %v545 = vmul.f32 %v508, %v539
      %v546 = vmul.f32 %v511, %v539
      %v547 = vmul.f32 %v514, %v539
      %v548 = vmul.f32 %v517, %v539
      %v549 = vmul.f32 %v520, %v539
      %v550 = vmul.f32 %v523, %v539
      %v551 = vmul.f32 %v526, %v539
      %v552 = vmul.f32 %v529, %v539
      %v553 = vmul.f32 %v532, %v539
      %v554 = vmul.f32 %v535, %v539
      %v555 = vmul.f32 %v538, %v539
      %v556 = vsub.f32 %v472, %v540
      %v557 = vsub.f32 %v473, %v541
      %v558 = vsub.f32 %v474, %v542
      %v559 = vsub.f32 %v475, %v543
      %v560 = vsub.f32 %v476, %v544
      %v561 = vsub.f32 %v477, %v545
      %v562 = vsub.f32 %v478, %v546
      %v563 = vsub.f32 %v479, %v547
      %v564 = vsub.f32 %v480, %v548
      %v565 = vsub.f32 %v481, %v549
      %v566 = vsub.f32 %v482, %v550
      %v567 = vsub.f32 %v483, %v551
      %v568 = vsub.f32 %v484, %v552
      %v569 = vsub.f32 %v485, %v553
      %v570 = vsub.f32 %v486, %v554
      %v571 = vsub.f32 %v487, %v555
      %v572 = vmul.f32 %v556, %v556
      %v573 = vmul.f32 %v557, %v557
      %v574 = vmul.f32 %v558, %v558
      %v575 = vmul.f32 %v559, %v559
      %v576 = vmul.f32 %v560, %v560
      %v577 = vmul.f32 %v561, %v561
      %v578 = vmul.f32 %v562, %v562
      %v579 = vmul.f32 %v563, %v563
      %v580 = vmul.f32 %v564, %v564
      %v581 = vmul.f32 %v565, %v565
      %v582 = vmul.f32 %v566, %v566
      %v583 = vmul.f32 %v567, %v567
      %v584 = vmul.f32 %v568, %v568
      %v585 = vmul.f32 %v569, %v569
      %v586 = vmul.f32 %v570, %v570
      %v587 = vmul.f32 %v571, %v571
      %v588 = vsel %vm490, %v572, 0.0
      %589 = vadd.xlane.f32.xlu0 %v588
      %v590 = vpop.xlane.xlu0 %589
      %v591 = vsel %vm490, %v573, 0.0
      %592 = vadd.xlane.f32.xlu0 %v591
      %v593 = vpop.xlane.xlu0 %592
      %v594 = vsel %vm490, %v574, 0.0
      %595 = vadd.xlane.f32.xlu0 %v594
      %v596 = vpop.xlane.xlu0 %595
      %v597 = vsel %vm490, %v575, 0.0
      %598 = vadd.xlane.f32.xlu0 %v597
      %v599 = vpop.xlane.xlu0 %598
      %v600 = vsel %vm490, %v576, 0.0
      %601 = vadd.xlane.f32.xlu0 %v600
      %v602 = vpop.xlane.xlu0 %601
      %v603 = vsel %vm490, %v577, 0.0
      %604 = vadd.xlane.f32.xlu0 %v603
      %v605 = vpop.xlane.xlu0 %604
      %v606 = vsel %vm490, %v578, 0.0
      %607 = vadd.xlane.f32.xlu0 %v606
      %v608 = vpop.xlane.xlu0 %607
      %v609 = vsel %vm490, %v579, 0.0
      %610 = vadd.xlane.f32.xlu0 %v609
      %v611 = vpop.xlane.xlu0 %610
      %v612 = vsel %vm490, %v580, 0.0
      %613 = vadd.xlane.f32.xlu0 %v612
      %v614 = vpop.xlane.xlu0 %613
      %v615 = vsel %vm490, %v581, 0.0
      %616 = vadd.xlane.f32.xlu0 %v615
      %v617 = vpop.xlane.xlu0 %616
      %v618 = vsel %vm490, %v582, 0.0
      %619 = vadd.xlane.f32.xlu0 %v618
      %v620 = vpop.xlane.xlu0 %619
      %v621 = vsel %vm490, %v583, 0.0
      %622 = vadd.xlane.f32.xlu0 %v621
      %v623 = vpop.xlane.xlu0 %622
      %v624 = vsel %vm490, %v584, 0.0
      %625 = vadd.xlane.f32.xlu0 %v624
      %v626 = vpop.xlane.xlu0 %625
      %v627 = vsel %vm490, %v585, 0.0
      %628 = vadd.xlane.f32.xlu0 %v627
      %v629 = vpop.xlane.xlu0 %628
      %v630 = vsel %vm490, %v586, 0.0
      %631 = vadd.xlane.f32.xlu0 %v630
      %v632 = vpop.xlane.xlu0 %631
      %v633 = vsel %vm490, %v587, 0.0
      %634 = vadd.xlane.f32.xlu0 %v633
      %v635 = vpop.xlane.xlu0 %634
      %v636 = vmul.f32 %v590, %v539
      %v637 = vmul.f32 %v593, %v539
      %v638 = vmul.f32 %v596, %v539
      %v639 = vmul.f32 %v599, %v539
      %v640 = vmul.f32 %v602, %v539
      %v641 = vmul.f32 %v605, %v539
      %v642 = vmul.f32 %v608, %v539
      %v643 = vmul.f32 %v611, %v539
      %v644 = vmul.f32 %v614, %v539
      %v645 = vmul.f32 %v617, %v539
      %v646 = vmul.f32 %v620, %v539
      %v647 = vmul.f32 %v623, %v539
      %v648 = vmul.f32 %v626, %v539
      %v649 = vmul.f32 %v629, %v539
      %v650 = vmul.f32 %v632, %v539
      %v651 = vmul.f32 %v635, %v539
      %v652 = vadd.f32 %v636, 1e-05
      %v653 = vadd.f32 %v637, 1e-05
      %v654 = vadd.f32 %v638, 1e-05
      %v655 = vadd.f32 %v639, 1e-05
      %v656 = vadd.f32 %v640, 1e-05
      %v657 = vadd.f32 %v641, 1e-05
      %v658 = vadd.f32 %v642, 1e-05
      %v659 = vadd.f32 %v643, 1e-05
      %v660 = vadd.f32 %v644, 1e-05
      %v661 = vadd.f32 %v645, 1e-05
      %v662 = vadd.f32 %v646, 1e-05
      %v663 = vadd.f32 %v647, 1e-05
      %v664 = vadd.f32 %v648, 1e-05
      %v665 = vadd.f32 %v649, 1e-05
      %v666 = vadd.f32 %v650, 1e-05
      %v667 = vadd.f32 %v651, 1e-05
      %v668 = vrsqrt.pop %v652
      %v669 = vrsqrt.pop %v653
      %v670 = vrsqrt.pop %v654
      %v671 = vrsqrt.pop %v655
      %v672 = vrsqrt.pop %v656
      %v673 = vrsqrt.pop %v657
      %v674 = vrsqrt.pop %v658
      %v675 = vrsqrt.pop %v659
      %v676 = vrsqrt.pop %v660
      %v677 = vrsqrt.pop %v661
      %v678 = vrsqrt.pop %v662
      %v679 = vrsqrt.pop %v663
      %v680 = vrsqrt.pop %v664
      %v681 = vrsqrt.pop %v665
      %v682 = vrsqrt.pop %v666
      %v683 = vrsqrt.pop %v667
      %v684 = vmul.f32 %v556, %v668
      %v685 = vmul.f32 %v557, %v669
      %v686 = vmul.f32 %v558, %v670
      %v687 = vmul.f32 %v559, %v671
      %v688 = vmul.f32 %v560, %v672
      %v689 = vmul.f32 %v561, %v673
      %v690 = vmul.f32 %v562, %v674
      %v691 = vmul.f32 %v563, %v675
      %v692 = vmul.f32 %v564, %v676
      %v693 = vmul.f32 %v565, %v677
      %v694 = vmul.f32 %v566, %v678
      %v695 = vmul.f32 %v567, %v679
      %v696 = vmul.f32 %v568, %v680
      %v697 = vmul.f32 %v569, %v681
      %v698 = vmul.f32 %v570, %v682
      %v699 = vmul.f32 %v571, %v683
      %v701 = vlaneseq
      %v702 = vshrl.u32 %v701, 7
      %v703 = vsub.s32 0, %v702
      %v704 = vrot.slane %v488, %v703
      %v706 = vmul.f32 %v684, %v704
      %v707 = vmul.f32 %v685, %v704
      %v708 = vmul.f32 %v686, %v704
      %v709 = vmul.f32 %v687, %v704
      %v710 = vmul.f32 %v688, %v704
      %v711 = vmul.f32 %v689, %v704
      %v712 = vmul.f32 %v690, %v704
      %v713 = vmul.f32 %v691, %v704
      %v714 = vmul.f32 %v692, %v704
      %v715 = vmul.f32 %v693, %v704
      %v716 = vmul.f32 %v694, %v704
      %v717 = vmul.f32 %v695, %v704
      %v718 = vmul.f32 %v696, %v704
      %v719 = vmul.f32 %v697, %v704
      %v720 = vmul.f32 %v698, %v704
      %v721 = vmul.f32 %v699, %v704
      %v723 = vlaneseq
      %v724 = vshrl.u32 %v723, 7
      %v725 = vsub.s32 0, %v724
      %v726 = vrot.slane %v489, %v725
      %v728 = vadd.f32 %v706, %v726
      %v729 = vadd.f32 %v707, %v726
      %v730 = vadd.f32 %v708, %v726
      %v731 = vadd.f32 %v709, %v726
      %v732 = vadd.f32 %v710, %v726
      %v733 = vadd.f32 %v711, %v726
      %v734 = vadd.f32 %v712, %v726
      %v735 = vadd.f32 %v713, %v726
      %v736 = vadd.f32 %v714, %v726
      %v737 = vadd.f32 %v715, %v726
      %v738 = vadd.f32 %v716, %v726
      %v739 = vadd.f32 %v717, %v726
      %v740 = vadd.f32 %v718, %v726
      %v741 = vadd.f32 %v719, %v726
      %v742 = vadd.f32 %v720, %v726
      %v743 = vadd.f32 %v721, %v726
      %v744 = vpack.c.bf16 %v729, %v728
      %v745 = vpack.c.bf16 %v731, %v730
      %v746 = vpack.c.bf16 %v733, %v732
      %v747 = vpack.c.bf16 %v735, %v734
      %v748 = vpack.c.bf16 %v737, %v736
      %v749 = vpack.c.bf16 %v739, %v738
      %v750 = vpack.c.bf16 %v741, %v740
      %v751 = vpack.c.bf16 %v743, %v742
      %v752 = vld [vmem:[%s3] sm:$0xf]
      %v753 = vld [vmem:[%s3 + $0x4] sm:$0xf]
      %v754 = vld [vmem:[%s3 + $0x8] sm:$0xf]
      %v755 = vld [vmem:[%s3 + $0xc] sm:$0xf]
      %v760 = vunpack.c.l.b16 %v752
      %v761 = vunpack.c.l.b16 %v753
      %v762 = vunpack.c.l.b16 %v754
      %v763 = vunpack.c.l.b16 %v755
      %v764 = vpack.c.b16 %v761, %v760
      %v765 = vpack.c.b16 %v763, %v762
      %v769 = vsel %vm490, %v744, 0
      %v772 = vsel %vm490, %v745, 0
      %v775 = vsel %vm490, %v746, 0
      %v778 = vsel %vm490, %v747, 0
      %v781 = vsel %vm490, %v748, 0
      %v784 = vsel %vm490, %v749, 0
      %v787 = vsel %vm490, %v750, 0
      %v790 = vsel %vm490, %v751, 0
      %792 = vmatprep.subr.bf16.mxu0 0
      %793 = vmatpush1.bf16.msra.mxu0 %v764
      %794 = vmatprep.subr.bf16.mxu0 0
      %795 = vmatpush1.bf16.msra.mxu0 %v765
      %796 = vmatprep.subr.bf16.mxu0 0
      %797 = vmatpush1.bf16.msra.mxu0 0
      %798 = vmatprep.subr.bf16.mxu0 0
      %799 = vmatpush1.bf16.msra.mxu0 0
      %800 = vmatprep.subr.bf16.mxu0 0
      %801 = vmatpush1.bf16.msra.mxu0 0
      %802 = vmatprep.subr.bf16.mxu0 0
      %803 = vmatpush1.bf16.msra.mxu0 0
      %804 = vmatprep.subr.bf16.mxu0 0
      %805 = vmatpush1.bf16.msra.mxu0 0
      %806 = vmatprep.subr.bf16.mxu0 0
      %807 = vmatpush1.bf16.msra.mxu0 0
      %808 = vmatprep.subr.bf16.mxu0 0
      %809 = vmatpush1.bf16.msra.mxu0 0
      %810 = vmatprep.subr.bf16.mxu0 0
      %811 = vmatpush1.bf16.msra.mxu0 0
      %812 = vmatprep.subr.bf16.mxu0 0
      %813 = vmatpush1.bf16.msra.mxu0 0
      %814 = vmatprep.subr.bf16.mxu0 0
      %815 = vmatpush1.bf16.msra.mxu0 0
      %816 = vmatprep.subr.bf16.mxu0 0
      %817 = vmatpush1.bf16.msra.mxu0 0
      %818 = vmatprep.subr.bf16.mxu0 0
      %819 = vmatpush1.bf16.msra.mxu0 0
      %820 = vmatprep.subr.bf16.mxu0 0
      %821 = vmatpush1.bf16.msra.mxu0 0
      %822 = vmatprep.subr.bf16.mxu0 0
      %823 = vmatpush1.bf16.msra.mxu0 0
      %824 = vmatprep.mubr.bf16.mxu0 0
      %825 = vmatmul.mubr.bf16.gmra.mrb[0].mxu0 %v769
      %v826 = vpop.f32.mrb[0].mxu0
      %v827 = vadd.f32 0.0, %v826
      %v828 = vpop.f32.mrb[0].mxu0
      %v829 = vpop.f32.mrb[0].mxu0
      %v830 = vadd.f32 0.0, %v829
      %v831 = vpop.f32.mrb[0].mxu0
      %832 = vmatprep.mubr.bf16.mxu0 0
      %833 = vmatmul.mubr.bf16.gmra.mrb[0].mxu0 %v772
      %v834 = vpop.f32.mrb[0].mxu0
      %v835 = vadd.f32 0.0, %v834
      %v836 = vpop.f32.mrb[0].mxu0
      %v837 = vpop.f32.mrb[0].mxu0
      %v838 = vadd.f32 0.0, %v837
      %v839 = vpop.f32.mrb[0].mxu0
      %840 = vmatprep.mubr.bf16.mxu0 0
      %841 = vmatmul.mubr.bf16.gmra.mrb[0].mxu0 %v775
      %v842 = vpop.f32.mrb[0].mxu0
      %v843 = vadd.f32 0.0, %v842
      %v844 = vpop.f32.mrb[0].mxu0
      %v845 = vpop.f32.mrb[0].mxu0
      %v846 = vadd.f32 0.0, %v845
      %v847 = vpop.f32.mrb[0].mxu0
      %848 = vmatprep.mubr.bf16.mxu0 0
      %849 = vmatmul.mubr.bf16.gmra.mrb[0].mxu0 %v778
      %v850 = vpop.f32.mrb[0].mxu0
      %v851 = vadd.f32 0.0, %v850
      %v852 = vpop.f32.mrb[0].mxu0
      %v853 = vpop.f32.mrb[0].mxu0
      %v854 = vadd.f32 0.0, %v853
      %v855 = vpop.f32.mrb[0].mxu0
      %856 = vmatprep.mubr.bf16.mxu0 0
      %857 = vmatmul.mubr.bf16.gmra.mrb[0].mxu0 %v781
      %v858 = vpop.f32.mrb[0].mxu0
      %v859 = vadd.f32 0.0, %v858
      %v860 = vpop.f32.mrb[0].mxu0
      %v861 = vpop.f32.mrb[0].mxu0
      %v862 = vadd.f32 0.0, %v861
      %v863 = vpop.f32.mrb[0].mxu0
      %864 = vmatprep.mubr.bf16.mxu0 0
      %865 = vmatmul.mubr.bf16.gmra.mrb[0].mxu0 %v784
      %v866 = vpop.f32.mrb[0].mxu0
      %v867 = vadd.f32 0.0, %v866
      %v868 = vpop.f32.mrb[0].mxu0
      %v869 = vpop.f32.mrb[0].mxu0
      %v870 = vadd.f32 0.0, %v869
      %v871 = vpop.f32.mrb[0].mxu0
      %872 = vmatprep.mubr.bf16.mxu0 0
      %873 = vmatmul.mubr.bf16.gmra.mrb[0].mxu0 %v787
      %v874 = vpop.f32.mrb[0].mxu0
      %v875 = vadd.f32 0.0, %v874
      %v876 = vpop.f32.mrb[0].mxu0
      %v877 = vpop.f32.mrb[0].mxu0
      %v878 = vadd.f32 0.0, %v877
      %v879 = vpop.f32.mrb[0].mxu0
      %880 = vmatprep.mubr.bf16.mxu0 0
      %881 = vmatmul.mubr.bf16.gmra.mrb[0].mxu0 %v790
      %v882 = vpop.f32.mrb[0].mxu0
      %v883 = vadd.f32 0.0, %v882
      %v884 = vpop.f32.mrb[0].mxu0
      %v885 = vpop.f32.mrb[0].mxu0
      %v886 = vadd.f32 0.0, %v885
      %v887 = vpop.f32.mrb[0].mxu0
      %888 = vdwg.mxu0
      %v889 = vpack.c.bf16 %v830, %v827
      %v890 = vpack.c.bf16 %v838, %v835
      %v891 = vpack.c.bf16 %v846, %v843
      %v892 = vpack.c.bf16 %v854, %v851
      %v893 = vpack.c.bf16 %v862, %v859
      %v894 = vpack.c.bf16 %v870, %v867
      %v895 = vpack.c.bf16 %v878, %v875
      %v896 = vpack.c.bf16 %v886, %v883
      %901 = vrot.lane.b32.xlu0 %v889, 96
      %v902 = vpop.permute.xlu0 %901
      %903 = vrot.lane.b32.xlu0 %v890, 96
      %v904 = vpop.permute.xlu0 %903
      %905 = vrot.lane.b32.xlu0 %v891, 96
      %v906 = vpop.permute.xlu0 %905
      %907 = vrot.lane.b32.xlu0 %v892, 96
      %v908 = vpop.permute.xlu0 %907
      %vm909 = vcmask 130048
      %v911 = vsel %vm909, %v889, 0
      %v914 = vsel %vm909, %v890, 0
      %v917 = vsel %vm909, %v891, 0
      %v920 = vsel %vm909, %v892, 0
      %v923 = vsel %vm909, %v902, 0
      %v926 = vsel %vm909, %v904, 0
      %v929 = vsel %vm909, %v906, 0
      %v932 = vsel %vm909, %v908, 0
      %934 = vmatprep.subr.bf16.mxu0 0
      %935 = vmatpush1.bf16.xpose.msra.mxu0 %v923
      %936 = vmatprep.subr.bf16.mxu0 0
      %937 = vmatpush1.bf16.xpose.msra.mxu0 %v926
      %938 = vmatprep.subr.bf16.mxu0 0
      %939 = vmatpush1.bf16.xpose.msra.mxu0 %v929
      %940 = vmatprep.subr.bf16.mxu0 0
      %941 = vmatpush1.bf16.xpose.msra.mxu0 %v932
      %942 = vmatprep.subr.bf16.mxu0 0
      %943 = vmatpush1.bf16.xpose.msra.mxu0 0
      %944 = vmatprep.subr.bf16.mxu0 0
      %945 = vmatpush1.bf16.xpose.msra.mxu0 0
      %946 = vmatprep.subr.bf16.mxu0 0
      %947 = vmatpush1.bf16.xpose.msra.mxu0 0
      %948 = vmatprep.subr.bf16.mxu0 0
      %949 = vmatpush1.bf16.xpose.msra.mxu0 0
      %950 = vmatprep.subr.bf16.mxu0 0
      %951 = vmatpush1.bf16.xpose.msra.mxu0 0
      %952 = vmatprep.subr.bf16.mxu0 0
      %953 = vmatpush1.bf16.xpose.msra.mxu0 0
      %954 = vmatprep.subr.bf16.mxu0 0
      %955 = vmatpush1.bf16.xpose.msra.mxu0 0
      %956 = vmatprep.subr.bf16.mxu0 0
      %957 = vmatpush1.bf16.xpose.msra.mxu0 0
      %958 = vmatprep.subr.bf16.mxu0 0
      %959 = vmatpush1.bf16.xpose.msra.mxu0 0
      %960 = vmatprep.subr.bf16.mxu0 0
      %961 = vmatpush1.bf16.xpose.msra.mxu0 0
      %962 = vmatprep.subr.bf16.mxu0 0
      %963 = vmatpush1.bf16.xpose.msra.mxu0 0
      %964 = vmatprep.subr.bf16.mxu0 0
      %965 = vmatpush1.bf16.xpose.msra.mxu0 0
      %966 = vmatprep.mubr.bf16.mxu0 0
      %967 = vmatmul.mubr.bf16.gmra.mrb[0].mxu0 %v911
      %v968 = vpop.f32.mrb[0].mxu0
      %v969 = vadd.f32 0.0, %v968
      %v970 = vpop.f32.mrb[0].mxu0
      %v971 = vpop.f32.mrb[0].mxu0
      %v972 = vadd.f32 0.0, %v971
      %v973 = vpop.f32.mrb[0].mxu0
      %974 = vmatprep.mubr.bf16.mxu0 0
      %975 = vmatmul.mubr.bf16.gmra.mrb[0].mxu0 %v914
      %v976 = vpop.f32.mrb[0].mxu0
      %v977 = vadd.f32 0.0, %v976
      %v978 = vpop.f32.mrb[0].mxu0
      %v979 = vpop.f32.mrb[0].mxu0
      %v980 = vadd.f32 0.0, %v979
      %v981 = vpop.f32.mrb[0].mxu0
      %982 = vmatprep.mubr.bf16.mxu0 0
      %983 = vmatmul.mubr.bf16.gmra.mrb[0].mxu0 %v917
      %v984 = vpop.f32.mrb[0].mxu0
      %v985 = vadd.f32 0.0, %v984
      %v986 = vpop.f32.mrb[0].mxu0
      %v987 = vpop.f32.mrb[0].mxu0
      %v988 = vadd.f32 0.0, %v987
      %v989 = vpop.f32.mrb[0].mxu0
      %990 = vmatprep.mubr.bf16.mxu0 0
      %991 = vmatmul.mubr.bf16.gmra.mrb[0].mxu0 %v920
      %v992 = vpop.f32.mrb[0].mxu0
      %v993 = vadd.f32 0.0, %v992
      %v994 = vpop.f32.mrb[0].mxu0
      %v995 = vpop.f32.mrb[0].mxu0
      %v996 = vadd.f32 0.0, %v995
      %v997 = vpop.f32.mrb[0].mxu0
      %998 = vdwg.mxu0
      %1003 = vrot.lane.b32.xlu0 %v893, 96
      %v1004 = vpop.permute.xlu0 %1003
      %1005 = vrot.lane.b32.xlu0 %v894, 96
      %v1006 = vpop.permute.xlu0 %1005
      %1007 = vrot.lane.b32.xlu0 %v895, 96
      %v1008 = vpop.permute.xlu0 %1007
      %1009 = vrot.lane.b32.xlu0 %v896, 96
      %v1010 = vpop.permute.xlu0 %1009
      %v1012 = vsel %vm909, %v893, 0
      %v1015 = vsel %vm909, %v894, 0
      %v1018 = vsel %vm909, %v895, 0
      %v1021 = vsel %vm909, %v896, 0
      %v1024 = vsel %vm909, %v1004, 0
      %v1027 = vsel %vm909, %v1006, 0
      %v1030 = vsel %vm909, %v1008, 0
      %v1033 = vsel %vm909, %v1010, 0
      %1035 = vmatprep.subr.bf16.mxu0 0
      %1036 = vmatpush1.bf16.xpose.msra.mxu0 %v1024
      %1037 = vmatprep.subr.bf16.mxu0 0
      %1038 = vmatpush1.bf16.xpose.msra.mxu0 %v1027
      %1039 = vmatprep.subr.bf16.mxu0 0
      %1040 = vmatpush1.bf16.xpose.msra.mxu0 %v1030
      %1041 = vmatprep.subr.bf16.mxu0 0
      %1042 = vmatpush1.bf16.xpose.msra.mxu0 %v1033
      %1043 = vmatprep.subr.bf16.mxu0 0
      %1044 = vmatpush1.bf16.xpose.msra.mxu0 0
      %1045 = vmatprep.subr.bf16.mxu0 0
      %1046 = vmatpush1.bf16.xpose.msra.mxu0 0
      %1047 = vmatprep.subr.bf16.mxu0 0
      %1048 = vmatpush1.bf16.xpose.msra.mxu0 0
      %1049 = vmatprep.subr.bf16.mxu0 0
      %1050 = vmatpush1.bf16.xpose.msra.mxu0 0
      %1051 = vmatprep.subr.bf16.mxu0 0
      %1052 = vmatpush1.bf16.xpose.msra.mxu0 0
      %1053 = vmatprep.subr.bf16.mxu0 0
      %1054 = vmatpush1.bf16.xpose.msra.mxu0 0
      %1055 = vmatprep.subr.bf16.mxu0 0
      %1056 = vmatpush1.bf16.xpose.msra.mxu0 0
      %1057 = vmatprep.subr.bf16.mxu0 0
      %1058 = vmatpush1.bf16.xpose.msra.mxu0 0
      %1059 = vmatprep.subr.bf16.mxu0 0
      %1060 = vmatpush1.bf16.xpose.msra.mxu0 0
      %1061 = vmatprep.subr.bf16.mxu0 0
      %1062 = vmatpush1.bf16.xpose.msra.mxu0 0
      %1063 = vmatprep.subr.bf16.mxu0 0
      %1064 = vmatpush1.bf16.xpose.msra.mxu0 0
      %1065 = vmatprep.subr.bf16.mxu0 0
      %1066 = vmatpush1.bf16.xpose.msra.mxu0 0
      %1067 = vmatprep.mubr.bf16.mxu0 0
      %1068 = vmatmul.mubr.bf16.gmra.mrb[0].mxu0 %v1012
      %v1069 = vpop.f32.mrb[0].mxu0
      %v1070 = vadd.f32 0.0, %v1069
      %v1071 = vpop.f32.mrb[0].mxu0
      %v1072 = vpop.f32.mrb[0].mxu0
      %v1073 = vadd.f32 0.0, %v1072
      %v1074 = vpop.f32.mrb[0].mxu0
      %1075 = vmatprep.mubr.bf16.mxu0 0
      %1076 = vmatmul.mubr.bf16.gmra.mrb[0].mxu0 %v1015
      %v1077 = vpop.f32.mrb[0].mxu0
      %v1078 = vadd.f32 0.0, %v1077
      %v1079 = vpop.f32.mrb[0].mxu0
      %v1080 = vpop.f32.mrb[0].mxu0
      %v1081 = vadd.f32 0.0, %v1080
      %v1082 = vpop.f32.mrb[0].mxu0
      %1083 = vmatprep.mubr.bf16.mxu0 0
      %1084 = vmatmul.mubr.bf16.gmra.mrb[0].mxu0 %v1018
      %v1085 = vpop.f32.mrb[0].mxu0
      %v1086 = vadd.f32 0.0, %v1085
      %v1087 = vpop.f32.mrb[0].mxu0
      %v1088 = vpop.f32.mrb[0].mxu0
      %v1089 = vadd.f32 0.0, %v1088
      %v1090 = vpop.f32.mrb[0].mxu0
      %1091 = vmatprep.mubr.bf16.mxu0 0
      %1092 = vmatmul.mubr.bf16.gmra.mrb[0].mxu0 %v1021
      %v1093 = vpop.f32.mrb[0].mxu0
      %v1094 = vadd.f32 0.0, %v1093
      %v1095 = vpop.f32.mrb[0].mxu0
      %v1096 = vpop.f32.mrb[0].mxu0
      %v1097 = vadd.f32 0.0, %v1096
      %v1098 = vpop.f32.mrb[0].mxu0
      %1099 = vdwg.mxu0
      %vm1100 = vcmask 523264
      %v1101 = vsel %vm1100, %v969, -inf
      %1102 = vmax.xlane.f32.xlu0 %v1101
      %v1103 = vpop.xlane.xlu0 %1102
      %v1104 = vsel %vm1100, %v972, -inf
      %1105 = vmax.xlane.f32.xlu0 %v1104
      %v1106 = vpop.xlane.xlu0 %1105
      %v1107 = vsel %vm1100, %v977, -inf
      %1108 = vmax.xlane.f32.xlu0 %v1107
      %v1109 = vpop.xlane.xlu0 %1108
      %v1110 = vsel %vm1100, %v980, -inf
      %1111 = vmax.xlane.f32.xlu0 %v1110
      %v1112 = vpop.xlane.xlu0 %1111
      %v1113 = vsel %vm1100, %v985, -inf
      %1114 = vmax.xlane.f32.xlu0 %v1113
      %v1115 = vpop.xlane.xlu0 %1114
      %v1116 = vsel %vm1100, %v988, -inf
      %1117 = vmax.xlane.f32.xlu0 %v1116
      %v1118 = vpop.xlane.xlu0 %1117
      %v1119 = vsel %vm1100, %v993, -inf
      %1120 = vmax.xlane.f32.xlu0 %v1119
      %v1121 = vpop.xlane.xlu0 %1120
      %v1122 = vsel %vm1100, %v996, -inf
      %1123 = vmax.xlane.f32.xlu0 %v1122
      %v1124 = vpop.xlane.xlu0 %1123
      %v1125 = vsel %vm1100, %v1070, -inf
      %1126 = vmax.xlane.f32.xlu0 %v1125
      %v1127 = vpop.xlane.xlu0 %1126
      %v1128 = vsel %vm1100, %v1073, -inf
      %1129 = vmax.xlane.f32.xlu0 %v1128
      %v1130 = vpop.xlane.xlu0 %1129
      %v1131 = vsel %vm1100, %v1078, -inf
      %1132 = vmax.xlane.f32.xlu0 %v1131
      %v1133 = vpop.xlane.xlu0 %1132
      %v1134 = vsel %vm1100, %v1081, -inf
      %1135 = vmax.xlane.f32.xlu0 %v1134
      %v1136 = vpop.xlane.xlu0 %1135
      %v1137 = vsel %vm1100, %v1086, -inf
      %1138 = vmax.xlane.f32.xlu0 %v1137
      %v1139 = vpop.xlane.xlu0 %1138
      %v1140 = vsel %vm1100, %v1089, -inf
      %1141 = vmax.xlane.f32.xlu0 %v1140
      %v1142 = vpop.xlane.xlu0 %1141
      %v1143 = vsel %vm1100, %v1094, -inf
      %1144 = vmax.xlane.f32.xlu0 %v1143
      %v1145 = vpop.xlane.xlu0 %1144
      %v1146 = vsel %vm1100, %v1097, -inf
      %1147 = vmax.xlane.f32.xlu0 %v1146
      %v1148 = vpop.xlane.xlu0 %1147
      %v1149 = vsub.f32 %v969, %v1103
      %v1150 = vsub.f32 %v972, %v1106
      %v1151 = vsub.f32 %v977, %v1109
      %v1152 = vsub.f32 %v980, %v1112
      %v1153 = vsub.f32 %v985, %v1115
      %v1154 = vsub.f32 %v988, %v1118
      %v1155 = vsub.f32 %v993, %v1121
      %v1156 = vsub.f32 %v996, %v1124
      %v1157 = vsub.f32 %v1070, %v1127
      %v1158 = vsub.f32 %v1073, %v1130
      %v1159 = vsub.f32 %v1078, %v1133
      %v1160 = vsub.f32 %v1081, %v1136
      %v1161 = vsub.f32 %v1086, %v1139
      %v1162 = vsub.f32 %v1089, %v1142
      %v1163 = vsub.f32 %v1094, %v1145
      %v1164 = vsub.f32 %v1097, %v1148
      %v1165 = vmul.f32 %v1149, 1.442695
      %v1166 = vpow.pop %v1165
      %v1167 = vmul.f32 %v1150, 1.442695
      %v1168 = vpow.pop %v1167
      %v1169 = vmul.f32 %v1151, 1.442695
      %v1170 = vpow.pop %v1169
      %v1171 = vmul.f32 %v1152, 1.442695
      %v1172 = vpow.pop %v1171
      %v1173 = vmul.f32 %v1153, 1.442695
      %v1174 = vpow.pop %v1173
      %v1175 = vmul.f32 %v1154, 1.442695
      %v1176 = vpow.pop %v1175
      %v1177 = vmul.f32 %v1155, 1.442695
      %v1178 = vpow.pop %v1177
      %v1179 = vmul.f32 %v1156, 1.442695
      %v1180 = vpow.pop %v1179
      %v1181 = vmul.f32 %v1157, 1.442695
      %v1182 = vpow.pop %v1181
      %v1183 = vmul.f32 %v1158, 1.442695
      %v1184 = vpow.pop %v1183
      %v1185 = vmul.f32 %v1159, 1.442695
      %v1186 = vpow.pop %v1185
      %v1187 = vmul.f32 %v1160, 1.442695
      %v1188 = vpow.pop %v1187
      %v1189 = vmul.f32 %v1161, 1.442695
      %v1190 = vpow.pop %v1189
      %v1191 = vmul.f32 %v1162, 1.442695
      %v1192 = vpow.pop %v1191
      %v1193 = vmul.f32 %v1163, 1.442695
      %v1194 = vpow.pop %v1193
      %v1195 = vmul.f32 %v1164, 1.442695
      %v1196 = vpow.pop %v1195
      %v1197 = vpack.c.bf16 %v1168, %v1166
      %v1198 = vpack.c.bf16 %v1172, %v1170
      %v1199 = vpack.c.bf16 %v1176, %v1174
      %v1200 = vpack.c.bf16 %v1180, %v1178
      %v1201 = vpack.c.bf16 %v1184, %v1182
      %v1202 = vpack.c.bf16 %v1188, %v1186
      %v1203 = vpack.c.bf16 %v1192, %v1190
      %v1204 = vpack.c.bf16 %v1196, %v1194
      %1205 = vrot.lane.b32.xlu0 %v889, 64
      %v1206 = vpop.permute.xlu0 %1205
      %1207 = vrot.lane.b32.xlu0 %v890, 64
      %v1208 = vpop.permute.xlu0 %1207
      %1209 = vrot.lane.b32.xlu0 %v891, 64
      %v1210 = vpop.permute.xlu0 %1209
      %1211 = vrot.lane.b32.xlu0 %v892, 64
      %v1212 = vpop.permute.xlu0 %1211
      %v1218 = vsel %vm1100, %v1197, 0
      %v1221 = vsel %vm1100, %v1198, 0
      %v1224 = vsel %vm1100, %v1199, 0
      %v1227 = vsel %vm1100, %v1200, 0
      %1229 = vmatprep.subr.bf16.mxu0 0
      %1230 = vmatpush1.bf16.msra.mxu0 %v1206
      %1231 = vmatprep.subr.bf16.mxu0 0
      %1232 = vmatpush1.bf16.msra.mxu0 %v1208
      %1233 = vmatprep.subr.bf16.mxu0 0
      %1234 = vmatpush1.bf16.msra.mxu0 %v1210
      %1235 = vmatprep.subr.bf16.mxu0 0
      %1236 = vmatpush1.bf16.msra.mxu0 %v1212
      %1237 = vmatprep.subr.bf16.mxu0 0
      %1238 = vmatpush1.bf16.msra.mxu0 0
      %1239 = vmatprep.subr.bf16.mxu0 0
      %1240 = vmatpush1.bf16.msra.mxu0 0
      %1241 = vmatprep.subr.bf16.mxu0 0
      %1242 = vmatpush1.bf16.msra.mxu0 0
      %1243 = vmatprep.subr.bf16.mxu0 0
      %1244 = vmatpush1.bf16.msra.mxu0 0
      %1245 = vmatprep.subr.bf16.mxu0 0
      %1246 = vmatpush1.bf16.msra.mxu0 0
      %1247 = vmatprep.subr.bf16.mxu0 0
      %1248 = vmatpush1.bf16.msra.mxu0 0
      %1249 = vmatprep.subr.bf16.mxu0 0
      %1250 = vmatpush1.bf16.msra.mxu0 0
      %1251 = vmatprep.subr.bf16.mxu0 0
      %1252 = vmatpush1.bf16.msra.mxu0 0
      %1253 = vmatprep.subr.bf16.mxu0 0
      %1254 = vmatpush1.bf16.msra.mxu0 0
      %1255 = vmatprep.subr.bf16.mxu0 0
      %1256 = vmatpush1.bf16.msra.mxu0 0
      %1257 = vmatprep.subr.bf16.mxu0 0
      %1258 = vmatpush1.bf16.msra.mxu0 0
      %1259 = vmatprep.subr.bf16.mxu0 0
      %1260 = vmatpush1.bf16.msra.mxu0 0
      %1261 = vmatprep.mubr.bf16.mxu0 0
      %1262 = vmatmul.mubr.bf16.gmra.mrb[0].mxu0 %v1218
      %v1263 = vpop.f32.mrb[0].mxu0
      %v1264 = vadd.f32 0.0, %v1263
      %v1265 = vpop.f32.mrb[0].mxu0
      %v1266 = vpop.f32.mrb[0].mxu0
      %v1267 = vadd.f32 0.0, %v1266
      %v1268 = vpop.f32.mrb[0].mxu0
      %1269 = vmatprep.mubr.bf16.mxu0 0
      %1270 = vmatmul.mubr.bf16.gmra.mrb[0].mxu0 %v1221
      %v1271 = vpop.f32.mrb[0].mxu0
      %v1272 = vadd.f32 0.0, %v1271
      %v1273 = vpop.f32.mrb[0].mxu0
      %v1274 = vpop.f32.mrb[0].mxu0
      %v1275 = vadd.f32 0.0, %v1274
      %v1276 = vpop.f32.mrb[0].mxu0
      %1277 = vmatprep.mubr.bf16.mxu0 0
      %1278 = vmatmul.mubr.bf16.gmra.mrb[0].mxu0 %v1224
      %v1279 = vpop.f32.mrb[0].mxu0
      %v1280 = vadd.f32 0.0, %v1279
      %v1281 = vpop.f32.mrb[0].mxu0
      %v1282 = vpop.f32.mrb[0].mxu0
      %v1283 = vadd.f32 0.0, %v1282
      %v1284 = vpop.f32.mrb[0].mxu0
      %1285 = vmatprep.mubr.bf16.mxu0 0
      %1286 = vmatmul.mubr.bf16.gmra.mrb[0].mxu0 %v1227
      %v1287 = vpop.f32.mrb[0].mxu0
      %v1288 = vadd.f32 0.0, %v1287
      %v1289 = vpop.f32.mrb[0].mxu0
      %v1290 = vpop.f32.mrb[0].mxu0
      %v1291 = vadd.f32 0.0, %v1290
      %v1292 = vpop.f32.mrb[0].mxu0
      %1293 = vdwg.mxu0
      %1294 = vrot.lane.b32.xlu0 %v893, 64
      %v1295 = vpop.permute.xlu0 %1294
      %1296 = vrot.lane.b32.xlu0 %v894, 64
      %v1297 = vpop.permute.xlu0 %1296
      %1298 = vrot.lane.b32.xlu0 %v895, 64
      %v1299 = vpop.permute.xlu0 %1298
      %1300 = vrot.lane.b32.xlu0 %v896, 64
      %v1301 = vpop.permute.xlu0 %1300
      %v1307 = vsel %vm1100, %v1201, 0
      %v1310 = vsel %vm1100, %v1202, 0
      %v1313 = vsel %vm1100, %v1203, 0
      %v1316 = vsel %vm1100, %v1204, 0
      %1318 = vmatprep.subr.bf16.mxu0 0
      %1319 = vmatpush1.bf16.msra.mxu0 %v1295
      %1320 = vmatprep.subr.bf16.mxu0 0
      %1321 = vmatpush1.bf16.msra.mxu0 %v1297
      %1322 = vmatprep.subr.bf16.mxu0 0
      %1323 = vmatpush1.bf16.msra.mxu0 %v1299
      %1324 = vmatprep.subr.bf16.mxu0 0
      %1325 = vmatpush1.bf16.msra.mxu0 %v1301
      %1326 = vmatprep.subr.bf16.mxu0 0
      %1327 = vmatpush1.bf16.msra.mxu0 0
      %1328 = vmatprep.subr.bf16.mxu0 0
      %1329 = vmatpush1.bf16.msra.mxu0 0
      %1330 = vmatprep.subr.bf16.mxu0 0
      %1331 = vmatpush1.bf16.msra.mxu0 0
      %1332 = vmatprep.subr.bf16.mxu0 0
      %1333 = vmatpush1.bf16.msra.mxu0 0
      %1334 = vmatprep.subr.bf16.mxu0 0
      %1335 = vmatpush1.bf16.msra.mxu0 0
      %1336 = vmatprep.subr.bf16.mxu0 0
      %1337 = vmatpush1.bf16.msra.mxu0 0
      %1338 = vmatprep.subr.bf16.mxu0 0
      %1339 = vmatpush1.bf16.msra.mxu0 0
      %1340 = vmatprep.subr.bf16.mxu0 0
      %1341 = vmatpush1.bf16.msra.mxu0 0
      %1342 = vmatprep.subr.bf16.mxu0 0
      %1343 = vmatpush1.bf16.msra.mxu0 0
      %1344 = vmatprep.subr.bf16.mxu0 0
      %1345 = vmatpush1.bf16.msra.mxu0 0
      %1346 = vmatprep.subr.bf16.mxu0 0
      %1347 = vmatpush1.bf16.msra.mxu0 0
      %1348 = vmatprep.subr.bf16.mxu0 0
      %1349 = vmatpush1.bf16.msra.mxu0 0
      %1350 = vmatprep.mubr.bf16.mxu0 0
      %1351 = vmatmul.mubr.bf16.gmra.mrb[0].mxu0 %v1307
      %v1352 = vpop.f32.mrb[0].mxu0
      %v1353 = vadd.f32 0.0, %v1352
      %v1354 = vpop.f32.mrb[0].mxu0
      %v1355 = vpop.f32.mrb[0].mxu0
      %v1356 = vadd.f32 0.0, %v1355
      %v1357 = vpop.f32.mrb[0].mxu0
      %1358 = vmatprep.mubr.bf16.mxu0 0
      %1359 = vmatmul.mubr.bf16.gmra.mrb[0].mxu0 %v1310
      %v1360 = vpop.f32.mrb[0].mxu0
      %v1361 = vadd.f32 0.0, %v1360
      %v1362 = vpop.f32.mrb[0].mxu0
      %v1363 = vpop.f32.mrb[0].mxu0
      %v1364 = vadd.f32 0.0, %v1363
      %v1365 = vpop.f32.mrb[0].mxu0
      %1366 = vmatprep.mubr.bf16.mxu0 0
      %1367 = vmatmul.mubr.bf16.gmra.mrb[0].mxu0 %v1313
      %v1368 = vpop.f32.mrb[0].mxu0
      %v1369 = vadd.f32 0.0, %v1368
      %v1370 = vpop.f32.mrb[0].mxu0
      %v1371 = vpop.f32.mrb[0].mxu0
      %v1372 = vadd.f32 0.0, %v1371
      %v1373 = vpop.f32.mrb[0].mxu0
      %1374 = vmatprep.mubr.bf16.mxu0 0
      %1375 = vmatmul.mubr.bf16.gmra.mrb[0].mxu0 %v1316
      %v1376 = vpop.f32.mrb[0].mxu0
      %v1377 = vadd.f32 0.0, %v1376
      %v1378 = vpop.f32.mrb[0].mxu0
      %v1379 = vpop.f32.mrb[0].mxu0
      %v1380 = vadd.f32 0.0, %v1379
      %v1381 = vpop.f32.mrb[0].mxu0
      %1382 = vdwg.mxu0
      %v1383 = vsel %vm1100, %v1166, 0.0
      %1384 = vadd.xlane.f32.xlu0 %v1383
      %v1385 = vpop.xlane.xlu0 %1384
      %v1386 = vsel %vm1100, %v1168, 0.0
      %1387 = vadd.xlane.f32.xlu0 %v1386
      %v1388 = vpop.xlane.xlu0 %1387
      %v1389 = vsel %vm1100, %v1170, 0.0
      %1390 = vadd.xlane.f32.xlu0 %v1389
      %v1391 = vpop.xlane.xlu0 %1390
      %v1392 = vsel %vm1100, %v1172, 0.0
      %1393 = vadd.xlane.f32.xlu0 %v1392
      %v1394 = vpop.xlane.xlu0 %1393
      %v1395 = vsel %vm1100, %v1174, 0.0
      %1396 = vadd.xlane.f32.xlu0 %v1395
      %v1397 = vpop.xlane.xlu0 %1396
      %v1398 = vsel %vm1100, %v1176, 0.0
      %1399 = vadd.xlane.f32.xlu0 %v1398
      %v1400 = vpop.xlane.xlu0 %1399
      %v1401 = vsel %vm1100, %v1178, 0.0
      %1402 = vadd.xlane.f32.xlu0 %v1401
      %v1403 = vpop.xlane.xlu0 %1402
      %v1404 = vsel %vm1100, %v1180, 0.0
      %1405 = vadd.xlane.f32.xlu0 %v1404
      %v1406 = vpop.xlane.xlu0 %1405
      %v1407 = vsel %vm1100, %v1182, 0.0
      %1408 = vadd.xlane.f32.xlu0 %v1407
      %v1409 = vpop.xlane.xlu0 %1408
      %v1410 = vsel %vm1100, %v1184, 0.0
      %1411 = vadd.xlane.f32.xlu0 %v1410
      %v1412 = vpop.xlane.xlu0 %1411
      %v1413 = vsel %vm1100, %v1186, 0.0
      %1414 = vadd.xlane.f32.xlu0 %v1413
      %v1415 = vpop.xlane.xlu0 %1414
      %v1416 = vsel %vm1100, %v1188, 0.0
      %1417 = vadd.xlane.f32.xlu0 %v1416
      %v1418 = vpop.xlane.xlu0 %1417
      %v1419 = vsel %vm1100, %v1190, 0.0
      %1420 = vadd.xlane.f32.xlu0 %v1419
      %v1421 = vpop.xlane.xlu0 %1420
      %v1422 = vsel %vm1100, %v1192, 0.0
      %1423 = vadd.xlane.f32.xlu0 %v1422
      %v1424 = vpop.xlane.xlu0 %1423
      %v1425 = vsel %vm1100, %v1194, 0.0
      %1426 = vadd.xlane.f32.xlu0 %v1425
      %v1427 = vpop.xlane.xlu0 %1426
      %v1428 = vsel %vm1100, %v1196, 0.0
      %1429 = vadd.xlane.f32.xlu0 %v1428
      %v1430 = vpop.xlane.xlu0 %1429
      %v1431 = vrcp.pop %v1385
      %v1432 = vrcp.pop %v1388
      %v1433 = vrcp.pop %v1391
      %v1434 = vrcp.pop %v1394
      %v1435 = vrcp.pop %v1397
      %v1436 = vrcp.pop %v1400
      %v1437 = vrcp.pop %v1403
      %v1438 = vrcp.pop %v1406
      %v1439 = vrcp.pop %v1409
      %v1440 = vrcp.pop %v1412
      %v1441 = vrcp.pop %v1415
      %v1442 = vrcp.pop %v1418
      %v1443 = vrcp.pop %v1421
      %v1444 = vrcp.pop %v1424
      %v1445 = vrcp.pop %v1427
      %v1446 = vrcp.pop %v1430
      %v1447 = vmul.f32 %v1264, %v1431
      %v1448 = vmul.f32 %v1267, %v1432
      %v1449 = vmul.f32 %v1272, %v1433
      %v1450 = vmul.f32 %v1275, %v1434
      %v1451 = vmul.f32 %v1280, %v1435
      %v1452 = vmul.f32 %v1283, %v1436
      %v1453 = vmul.f32 %v1288, %v1437
      %v1454 = vmul.f32 %v1291, %v1438
      %v1455 = vmul.f32 %v1353, %v1439
      %v1456 = vmul.f32 %v1356, %v1440
      %v1457 = vmul.f32 %v1361, %v1441
      %v1458 = vmul.f32 %v1364, %v1442
      %v1459 = vmul.f32 %v1369, %v1443
      %v1460 = vmul.f32 %v1372, %v1444
      %v1461 = vmul.f32 %v1377, %v1445
      %v1462 = vmul.f32 %v1380, %v1446
      %1463 = vrot.lane.b32.xlu0 %v889, 112
      %v1464 = vpop.permute.xlu0 %1463
      %1465 = vrot.lane.b32.xlu0 %v890, 112
      %v1466 = vpop.permute.xlu0 %1465
      %1467 = vrot.lane.b32.xlu0 %v891, 112
      %v1468 = vpop.permute.xlu0 %1467
      %1469 = vrot.lane.b32.xlu0 %v892, 112
      %v1470 = vpop.permute.xlu0 %1469
      %1471 = vrot.lane.b32.xlu0 %v889, 80
      %v1472 = vpop.permute.xlu0 %1471
      %1473 = vrot.lane.b32.xlu0 %v890, 80
      %v1474 = vpop.permute.xlu0 %1473
      %1475 = vrot.lane.b32.xlu0 %v891, 80
      %v1476 = vpop.permute.xlu0 %1475
      %1477 = vrot.lane.b32.xlu0 %v892, 80
      %v1478 = vpop.permute.xlu0 %1477
      %v1480 = vsel %vm909, %v1464, 0
      %v1483 = vsel %vm909, %v1466, 0
      %v1486 = vsel %vm909, %v1468, 0
      %v1489 = vsel %vm909, %v1470, 0
      %v1492 = vsel %vm909, %v1472, 0
      %v1495 = vsel %vm909, %v1474, 0
      %v1498 = vsel %vm909, %v1476, 0
      %v1501 = vsel %vm909, %v1478, 0
      %1503 = vmatprep.subr.bf16.mxu0 0
      %1504 = vmatpush1.bf16.xpose.msra.mxu0 %v1492
      %1505 = vmatprep.subr.bf16.mxu0 0
      %1506 = vmatpush1.bf16.xpose.msra.mxu0 %v1495
      %1507 = vmatprep.subr.bf16.mxu0 0
      %1508 = vmatpush1.bf16.xpose.msra.mxu0 %v1498
      %1509 = vmatprep.subr.bf16.mxu0 0
      %1510 = vmatpush1.bf16.xpose.msra.mxu0 %v1501
      %1511 = vmatprep.subr.bf16.mxu0 0
      %1512 = vmatpush1.bf16.xpose.msra.mxu0 0
      %1513 = vmatprep.subr.bf16.mxu0 0
      %1514 = vmatpush1.bf16.xpose.msra.mxu0 0
      %1515 = vmatprep.subr.bf16.mxu0 0
      %1516 = vmatpush1.bf16.xpose.msra.mxu0 0
      %1517 = vmatprep.subr.bf16.mxu0 0
      %1518 = vmatpush1.bf16.xpose.msra.mxu0 0
      %1519 = vmatprep.subr.bf16.mxu0 0
      %1520 = vmatpush1.bf16.xpose.msra.mxu0 0
      %1521 = vmatprep.subr.bf16.mxu0 0
      %1522 = vmatpush1.bf16.xpose.msra.mxu0 0
      %1523 = vmatprep.subr.bf16.mxu0 0
      %1524 = vmatpush1.bf16.xpose.msra.mxu0 0
      %1525 = vmatprep.subr.bf16.mxu0 0
      %1526 = vmatpush1.bf16.xpose.msra.mxu0 0
      %1527 = vmatprep.subr.bf16.mxu0 0
      %1528 = vmatpush1.bf16.xpose.msra.mxu0 0
      %1529 = vmatprep.subr.bf16.mxu0 0
      %1530 = vmatpush1.bf16.xpose.msra.mxu0 0
      %1531 = vmatprep.subr.bf16.mxu0 0
      %1532 = vmatpush1.bf16.xpose.msra.mxu0 0
      %1533 = vmatprep.subr.bf16.mxu0 0
      %1534 = vmatpush1.bf16.xpose.msra.mxu0 0
      %1535 = vmatprep.mubr.bf16.mxu0 0
      %1536 = vmatmul.mubr.bf16.gmra.mrb[0].mxu0 %v1480
      %v1537 = vpop.f32.mrb[0].mxu0
      %v1538 = vadd.f32 0.0, %v1537
      %v1539 = vpop.f32.mrb[0].mxu0
      %v1540 = vpop.f32.mrb[0].mxu0
      %v1541 = vadd.f32 0.0, %v1540
      %v1542 = vpop.f32.mrb[0].mxu0
      %1543 = vmatprep.mubr.bf16.mxu0 0
      %1544 = vmatmul.mubr.bf16.gmra.mrb[0].mxu0 %v1483
      %v1545 = vpop.f32.mrb[0].mxu0
      %v1546 = vadd.f32 0.0, %v1545
      %v1547 = vpop.f32.mrb[0].mxu0
      %v1548 = vpop.f32.mrb[0].mxu0
      %v1549 = vadd.f32 0.0, %v1548
      %v1550 = vpop.f32.mrb[0].mxu0
      %1551 = vmatprep.mubr.bf16.mxu0 0
      %1552 = vmatmul.mubr.bf16.gmra.mrb[0].mxu0 %v1486
      %v1553 = vpop.f32.mrb[0].mxu0
      %v1554 = vadd.f32 0.0, %v1553
      %v1555 = vpop.f32.mrb[0].mxu0
      %v1556 = vpop.f32.mrb[0].mxu0
      %v1557 = vadd.f32 0.0, %v1556
      %v1558 = vpop.f32.mrb[0].mxu0
      %1559 = vmatprep.mubr.bf16.mxu0 0
      %1560 = vmatmul.mubr.bf16.gmra.mrb[0].mxu0 %v1489
      %v1561 = vpop.f32.mrb[0].mxu0
      %v1562 = vadd.f32 0.0, %v1561
      %v1563 = vpop.f32.mrb[0].mxu0
      %v1564 = vpop.f32.mrb[0].mxu0
      %v1565 = vadd.f32 0.0, %v1564
      %v1566 = vpop.f32.mrb[0].mxu0
      %1567 = vdwg.mxu0
      %1568 = vrot.lane.b32.xlu0 %v893, 112
      %v1569 = vpop.permute.xlu0 %1568
      %1570 = vrot.lane.b32.xlu0 %v894, 112
      %v1571 = vpop.permute.xlu0 %1570
      %1572 = vrot.lane.b32.xlu0 %v895, 112
      %v1573 = vpop.permute.xlu0 %1572
      %1574 = vrot.lane.b32.xlu0 %v896, 112
      %v1575 = vpop.permute.xlu0 %1574
      %1576 = vrot.lane.b32.xlu0 %v893, 80
      %v1577 = vpop.permute.xlu0 %1576
      %1578 = vrot.lane.b32.xlu0 %v894, 80
      %v1579 = vpop.permute.xlu0 %1578
      %1580 = vrot.lane.b32.xlu0 %v895, 80
      %v1581 = vpop.permute.xlu0 %1580
      %1582 = vrot.lane.b32.xlu0 %v896, 80
      %v1583 = vpop.permute.xlu0 %1582
      %v1585 = vsel %vm909, %v1569, 0
      %v1588 = vsel %vm909, %v1571, 0
      %v1591 = vsel %vm909, %v1573, 0
      %v1594 = vsel %vm909, %v1575, 0
      %v1597 = vsel %vm909, %v1577, 0
      %v1600 = vsel %vm909, %v1579, 0
      %v1603 = vsel %vm909, %v1581, 0
      %v1606 = vsel %vm909, %v1583, 0
      %1608 = vmatprep.subr.bf16.mxu0 0
      %1609 = vmatpush1.bf16.xpose.msra.mxu0 %v1597
      %1610 = vmatprep.subr.bf16.mxu0 0
      %1611 = vmatpush1.bf16.xpose.msra.mxu0 %v1600
      %1612 = vmatprep.subr.bf16.mxu0 0
      %1613 = vmatpush1.bf16.xpose.msra.mxu0 %v1603
      %1614 = vmatprep.subr.bf16.mxu0 0
      %1615 = vmatpush1.bf16.xpose.msra.mxu0 %v1606
      %1616 = vmatprep.subr.bf16.mxu0 0
      %1617 = vmatpush1.bf16.xpose.msra.mxu0 0
      %1618 = vmatprep.subr.bf16.mxu0 0
      %1619 = vmatpush1.bf16.xpose.msra.mxu0 0
      %1620 = vmatprep.subr.bf16.mxu0 0
      %1621 = vmatpush1.bf16.xpose.msra.mxu0 0
      %1622 = vmatprep.subr.bf16.mxu0 0
      %1623 = vmatpush1.bf16.xpose.msra.mxu0 0
      %1624 = vmatprep.subr.bf16.mxu0 0
      %1625 = vmatpush1.bf16.xpose.msra.mxu0 0
      %1626 = vmatprep.subr.bf16.mxu0 0
      %1627 = vmatpush1.bf16.xpose.msra.mxu0 0
      %1628 = vmatprep.subr.bf16.mxu0 0
      %1629 = vmatpush1.bf16.xpose.msra.mxu0 0
      %1630 = vmatprep.subr.bf16.mxu0 0
      %1631 = vmatpush1.bf16.xpose.msra.mxu0 0
      %1632 = vmatprep.subr.bf16.mxu0 0
      %1633 = vmatpush1.bf16.xpose.msra.mxu0 0
      %1634 = vmatprep.subr.bf16.mxu0 0
      %1635 = vmatpush1.bf16.xpose.msra.mxu0 0
      %1636 = vmatprep.subr.bf16.mxu0 0
      %1637 = vmatpush1.bf16.xpose.msra.mxu0 0
      %1638 = vmatprep.subr.bf16.mxu0 0
      %1639 = vmatpush1.bf16.xpose.msra.mxu0 0
      %1640 = vmatprep.mubr.bf16.mxu0 0
      %1641 = vmatmul.mubr.bf16.gmra.mrb[0].mxu0 %v1585
      %v1642 = vpop.f32.mrb[0].mxu0
      %v1643 = vadd.f32 0.0, %v1642
      %v1644 = vpop.f32.mrb[0].mxu0
      %v1645 = vpop.f32.mrb[0].mxu0
      %v1646 = vadd.f32 0.0, %v1645
      %v1647 = vpop.f32.mrb[0].mxu0
      %1648 = vmatprep.mubr.bf16.mxu0 0
      %1649 = vmatmul.mubr.bf16.gmra.mrb[0].mxu0 %v1588
      %v1650 = vpop.f32.mrb[0].mxu0
      %v1651 = vadd.f32 0.0, %v1650
      %v1652 = vpop.f32.mrb[0].mxu0
      %v1653 = vpop.f32.mrb[0].mxu0
      %v1654 = vadd.f32 0.0, %v1653
      %v1655 = vpop.f32.mrb[0].mxu0
      %1656 = vmatprep.mubr.bf16.mxu0 0
      %1657 = vmatmul.mubr.bf16.gmra.mrb[0].mxu0 %v1591
      %v1658 = vpop.f32.mrb[0].mxu0
      %v1659 = vadd.f32 0.0, %v1658
      %v1660 = vpop.f32.mrb[0].mxu0
      %v1661 = vpop.f32.mrb[0].mxu0
      %v1662 = vadd.f32 0.0, %v1661
      %v1663 = vpop.f32.mrb[0].mxu0
      %1664 = vmatprep.mubr.bf16.mxu0 0
      %1665 = vmatmul.mubr.bf16.gmra.mrb[0].mxu0 %v1594
      %v1666 = vpop.f32.mrb[0].mxu0
      %v1667 = vadd.f32 0.0, %v1666
      %v1668 = vpop.f32.mrb[0].mxu0
      %v1669 = vpop.f32.mrb[0].mxu0
      %v1670 = vadd.f32 0.0, %v1669
      %v1671 = vpop.f32.mrb[0].mxu0
      %1672 = vdwg.mxu0
      %v1673 = vsel %vm1100, %v1538, -inf
      %1674 = vmax.xlane.f32.xlu0 %v1673
      %v1675 = vpop.xlane.xlu0 %1674
      %v1676 = vsel %vm1100, %v1541, -inf
      %1677 = vmax.xlane.f32.xlu0 %v1676
      %v1678 = vpop.xlane.xlu0 %1677
      %v1679 = vsel %vm1100, %v1546, -inf
      %1680 = vmax.xlane.f32.xlu0 %v1679
      %v1681 = vpop.xlane.xlu0 %1680
      %v1682 = vsel %vm1100, %v1549, -inf
      %1683 = vmax.xlane.f32.xlu0 %v1682
      %v1684 = vpop.xlane.xlu0 %1683
      %v1685 = vsel %vm1100, %v1554, -inf
      %1686 = vmax.xlane.f32.xlu0 %v1685
      %v1687 = vpop.xlane.xlu0 %1686
      %v1688 = vsel %vm1100, %v1557, -inf
      %1689 = vmax.xlane.f32.xlu0 %v1688
      %v1690 = vpop.xlane.xlu0 %1689
      %v1691 = vsel %vm1100, %v1562, -inf
      %1692 = vmax.xlane.f32.xlu0 %v1691
      %v1693 = vpop.xlane.xlu0 %1692
      %v1694 = vsel %vm1100, %v1565, -inf
      %1695 = vmax.xlane.f32.xlu0 %v1694
      %v1696 = vpop.xlane.xlu0 %1695
      %v1697 = vsel %vm1100, %v1643, -inf
      %1698 = vmax.xlane.f32.xlu0 %v1697
      %v1699 = vpop.xlane.xlu0 %1698
      %v1700 = vsel %vm1100, %v1646, -inf
      %1701 = vmax.xlane.f32.xlu0 %v1700
      %v1702 = vpop.xlane.xlu0 %1701
      %v1703 = vsel %vm1100, %v1651, -inf
      %1704 = vmax.xlane.f32.xlu0 %v1703
      %v1705 = vpop.xlane.xlu0 %1704
      %v1706 = vsel %vm1100, %v1654, -inf
      %1707 = vmax.xlane.f32.xlu0 %v1706
      %v1708 = vpop.xlane.xlu0 %1707
      %v1709 = vsel %vm1100, %v1659, -inf
      %1710 = vmax.xlane.f32.xlu0 %v1709
      %v1711 = vpop.xlane.xlu0 %1710
      %v1712 = vsel %vm1100, %v1662, -inf
      %1713 = vmax.xlane.f32.xlu0 %v1712
      %v1714 = vpop.xlane.xlu0 %1713
      %v1715 = vsel %vm1100, %v1667, -inf
      %1716 = vmax.xlane.f32.xlu0 %v1715
      %v1717 = vpop.xlane.xlu0 %1716
      %v1718 = vsel %vm1100, %v1670, -inf
      %1719 = vmax.xlane.f32.xlu0 %v1718
      %v1720 = vpop.xlane.xlu0 %1719
      %v1721 = vsub.f32 %v1538, %v1675
      %v1722 = vsub.f32 %v1541, %v1678
      %v1723 = vsub.f32 %v1546, %v1681
      %v1724 = vsub.f32 %v1549, %v1684
      %v1725 = vsub.f32 %v1554, %v1687
      %v1726 = vsub.f32 %v1557, %v1690
      %v1727 = vsub.f32 %v1562, %v1693
      %v1728 = vsub.f32 %v1565, %v1696
      %v1729 = vsub.f32 %v1643, %v1699
      %v1730 = vsub.f32 %v1646, %v1702
      %v1731 = vsub.f32 %v1651, %v1705
      %v1732 = vsub.f32 %v1654, %v1708
      %v1733 = vsub.f32 %v1659, %v1711
      %v1734 = vsub.f32 %v1662, %v1714
      %v1735 = vsub.f32 %v1667, %v1717
      %v1736 = vsub.f32 %v1670, %v1720
      %v1737 = vmul.f32 %v1721, 1.442695
      %v1738 = vpow.pop %v1737
      %v1739 = vmul.f32 %v1722, 1.442695
      %v1740 = vpow.pop %v1739
      %v1741 = vmul.f32 %v1723, 1.442695
      %v1742 = vpow.pop %v1741
      %v1743 = vmul.f32 %v1724, 1.442695
      %v1744 = vpow.pop %v1743
      %v1745 = vmul.f32 %v1725, 1.442695
      %v1746 = vpow.pop %v1745
      %v1747 = vmul.f32 %v1726, 1.442695
      %v1748 = vpow.pop %v1747
      %v1749 = vmul.f32 %v1727, 1.442695
      %v1750 = vpow.pop %v1749
      %v1751 = vmul.f32 %v1728, 1.442695
      %v1752 = vpow.pop %v1751
      %v1753 = vmul.f32 %v1729, 1.442695
      %v1754 = vpow.pop %v1753
      %v1755 = vmul.f32 %v1730, 1.442695
      %v1756 = vpow.pop %v1755
      %v1757 = vmul.f32 %v1731, 1.442695
      %v1758 = vpow.pop %v1757
      %v1759 = vmul.f32 %v1732, 1.442695
      %v1760 = vpow.pop %v1759
      %v1761 = vmul.f32 %v1733, 1.442695
      %v1762 = vpow.pop %v1761
      %v1763 = vmul.f32 %v1734, 1.442695
      %v1764 = vpow.pop %v1763
      %v1765 = vmul.f32 %v1735, 1.442695
      %v1766 = vpow.pop %v1765
      %v1767 = vmul.f32 %v1736, 1.442695
      %v1768 = vpow.pop %v1767
      %v1769 = vpack.c.bf16 %v1740, %v1738
      %v1770 = vpack.c.bf16 %v1744, %v1742
      %v1771 = vpack.c.bf16 %v1748, %v1746
      %v1772 = vpack.c.bf16 %v1752, %v1750
      %v1773 = vpack.c.bf16 %v1756, %v1754
      %v1774 = vpack.c.bf16 %v1760, %v1758
      %v1775 = vpack.c.bf16 %v1764, %v1762
      %v1776 = vpack.c.bf16 %v1768, %v1766
      %1777 = vrot.lane.b32.xlu0 %v889, 48
      %v1778 = vpop.permute.xlu0 %1777
      %1779 = vrot.lane.b32.xlu0 %v890, 48
      %v1780 = vpop.permute.xlu0 %1779
      %1781 = vrot.lane.b32.xlu0 %v891, 48
      %v1782 = vpop.permute.xlu0 %1781
      %1783 = vrot.lane.b32.xlu0 %v892, 48
      %v1784 = vpop.permute.xlu0 %1783
      %v1790 = vsel %vm1100, %v1769, 0
      %v1793 = vsel %vm1100, %v1770, 0
      %v1796 = vsel %vm1100, %v1771, 0
      %v1799 = vsel %vm1100, %v1772, 0
      %1801 = vmatprep.subr.bf16.mxu0 0
      %1802 = vmatpush1.bf16.msra.mxu0 %v1778
      %1803 = vmatprep.subr.bf16.mxu0 0
      %1804 = vmatpush1.bf16.msra.mxu0 %v1780
      %1805 = vmatprep.subr.bf16.mxu0 0
      %1806 = vmatpush1.bf16.msra.mxu0 %v1782
      %1807 = vmatprep.subr.bf16.mxu0 0
      %1808 = vmatpush1.bf16.msra.mxu0 %v1784
      %1809 = vmatprep.subr.bf16.mxu0 0
      %1810 = vmatpush1.bf16.msra.mxu0 0
      %1811 = vmatprep.subr.bf16.mxu0 0
      %1812 = vmatpush1.bf16.msra.mxu0 0
      %1813 = vmatprep.subr.bf16.mxu0 0
      %1814 = vmatpush1.bf16.msra.mxu0 0
      %1815 = vmatprep.subr.bf16.mxu0 0
      %1816 = vmatpush1.bf16.msra.mxu0 0
      %1817 = vmatprep.subr.bf16.mxu0 0
      %1818 = vmatpush1.bf16.msra.mxu0 0
      %1819 = vmatprep.subr.bf16.mxu0 0
      %1820 = vmatpush1.bf16.msra.mxu0 0
      %1821 = vmatprep.subr.bf16.mxu0 0
      %1822 = vmatpush1.bf16.msra.mxu0 0
      %1823 = vmatprep.subr.bf16.mxu0 0
      %1824 = vmatpush1.bf16.msra.mxu0 0
      %1825 = vmatprep.subr.bf16.mxu0 0
      %1826 = vmatpush1.bf16.msra.mxu0 0
      %1827 = vmatprep.subr.bf16.mxu0 0
      %1828 = vmatpush1.bf16.msra.mxu0 0
      %1829 = vmatprep.subr.bf16.mxu0 0
      %1830 = vmatpush1.bf16.msra.mxu0 0
      %1831 = vmatprep.subr.bf16.mxu0 0
      %1832 = vmatpush1.bf16.msra.mxu0 0
      %1833 = vmatprep.mubr.bf16.mxu0 0
      %1834 = vmatmul.mubr.bf16.gmra.mrb[0].mxu0 %v1790
      %v1835 = vpop.f32.mrb[0].mxu0
      %v1836 = vadd.f32 0.0, %v1835
      %v1837 = vpop.f32.mrb[0].mxu0
      %v1838 = vpop.f32.mrb[0].mxu0
      %v1839 = vadd.f32 0.0, %v1838
      %v1840 = vpop.f32.mrb[0].mxu0
      %1841 = vmatprep.mubr.bf16.mxu0 0
      %1842 = vmatmul.mubr.bf16.gmra.mrb[0].mxu0 %v1793
      %v1843 = vpop.f32.mrb[0].mxu0
      %v1844 = vadd.f32 0.0, %v1843
      %v1845 = vpop.f32.mrb[0].mxu0
      %v1846 = vpop.f32.mrb[0].mxu0
      %v1847 = vadd.f32 0.0, %v1846
      %v1848 = vpop.f32.mrb[0].mxu0
      %1849 = vmatprep.mubr.bf16.mxu0 0
      %1850 = vmatmul.mubr.bf16.gmra.mrb[0].mxu0 %v1796
      %v1851 = vpop.f32.mrb[0].mxu0
      %v1852 = vadd.f32 0.0, %v1851
      %v1853 = vpop.f32.mrb[0].mxu0
      %v1854 = vpop.f32.mrb[0].mxu0
      %v1855 = vadd.f32 0.0, %v1854
      %v1856 = vpop.f32.mrb[0].mxu0
      %1857 = vmatprep.mubr.bf16.mxu0 0
      %1858 = vmatmul.mubr.bf16.gmra.mrb[0].mxu0 %v1799
      %v1859 = vpop.f32.mrb[0].mxu0
      %v1860 = vadd.f32 0.0, %v1859
      %v1861 = vpop.f32.mrb[0].mxu0
      %v1862 = vpop.f32.mrb[0].mxu0
      %v1863 = vadd.f32 0.0, %v1862
      %v1864 = vpop.f32.mrb[0].mxu0
      %1865 = vdwg.mxu0
      %1866 = vrot.lane.b32.xlu0 %v893, 48
      %v1867 = vpop.permute.xlu0 %1866
      %1868 = vrot.lane.b32.xlu0 %v894, 48
      %v1869 = vpop.permute.xlu0 %1868
      %1870 = vrot.lane.b32.xlu0 %v895, 48
      %v1871 = vpop.permute.xlu0 %1870
      %1872 = vrot.lane.b32.xlu0 %v896, 48
      %v1873 = vpop.permute.xlu0 %1872
      %v1879 = vsel %vm1100, %v1773, 0
      %v1882 = vsel %vm1100, %v1774, 0
      %v1885 = vsel %vm1100, %v1775, 0
      %v1888 = vsel %vm1100, %v1776, 0
      %1890 = vmatprep.subr.bf16.mxu0 0
      %1891 = vmatpush1.bf16.msra.mxu0 %v1867
      %1892 = vmatprep.subr.bf16.mxu0 0
      %1893 = vmatpush1.bf16.msra.mxu0 %v1869
      %1894 = vmatprep.subr.bf16.mxu0 0
      %1895 = vmatpush1.bf16.msra.mxu0 %v1871
      %1896 = vmatprep.subr.bf16.mxu0 0
      %1897 = vmatpush1.bf16.msra.mxu0 %v1873
      %1898 = vmatprep.subr.bf16.mxu0 0
      %1899 = vmatpush1.bf16.msra.mxu0 0
      %1900 = vmatprep.subr.bf16.mxu0 0
      %1901 = vmatpush1.bf16.msra.mxu0 0
      %1902 = vmatprep.subr.bf16.mxu0 0
      %1903 = vmatpush1.bf16.msra.mxu0 0
      %1904 = vmatprep.subr.bf16.mxu0 0
      %1905 = vmatpush1.bf16.msra.mxu0 0
      %1906 = vmatprep.subr.bf16.mxu0 0
      %1907 = vmatpush1.bf16.msra.mxu0 0
      %1908 = vmatprep.subr.bf16.mxu0 0
      %1909 = vmatpush1.bf16.msra.mxu0 0
      %1910 = vmatprep.subr.bf16.mxu0 0
      %1911 = vmatpush1.bf16.msra.mxu0 0
      %1912 = vmatprep.subr.bf16.mxu0 0
      %1913 = vmatpush1.bf16.msra.mxu0 0
      %1914 = vmatprep.subr.bf16.mxu0 0
      %1915 = vmatpush1.bf16.msra.mxu0 0
      %1916 = vmatprep.subr.bf16.mxu0 0
      %1917 = vmatpush1.bf16.msra.mxu0 0
      %1918 = vmatprep.subr.bf16.mxu0 0
      %1919 = vmatpush1.bf16.msra.mxu0 0
      %1920 = vmatprep.subr.bf16.mxu0 0
      %1921 = vmatpush1.bf16.msra.mxu0 0
      %1922 = vmatprep.mubr.bf16.mxu0 0
      %1923 = vmatmul.mubr.bf16.gmra.mrb[0].mxu0 %v1879
      %v1924 = vpop.f32.mrb[0].mxu0
      %v1925 = vadd.f32 0.0, %v1924
      %v1926 = vpop.f32.mrb[0].mxu0
      %v1927 = vpop.f32.mrb[0].mxu0
      %v1928 = vadd.f32 0.0, %v1927
      %v1929 = vpop.f32.mrb[0].mxu0
      %1930 = vmatprep.mubr.bf16.mxu0 0
      %1931 = vmatmul.mubr.bf16.gmra.mrb[0].mxu0 %v1882
      %v1932 = vpop.f32.mrb[0].mxu0
      %v1933 = vadd.f32 0.0, %v1932
      %v1934 = vpop.f32.mrb[0].mxu0
      %v1935 = vpop.f32.mrb[0].mxu0
      %v1936 = vadd.f32 0.0, %v1935
      %v1937 = vpop.f32.mrb[0].mxu0
      %1938 = vmatprep.mubr.bf16.mxu0 0
      %1939 = vmatmul.mubr.bf16.gmra.mrb[0].mxu0 %v1885
      %v1940 = vpop.f32.mrb[0].mxu0
      %v1941 = vadd.f32 0.0, %v1940
      %v1942 = vpop.f32.mrb[0].mxu0
      %v1943 = vpop.f32.mrb[0].mxu0
      %v1944 = vadd.f32 0.0, %v1943
      %v1945 = vpop.f32.mrb[0].mxu0
      %1946 = vmatprep.mubr.bf16.mxu0 0
      %1947 = vmatmul.mubr.bf16.gmra.mrb[0].mxu0 %v1888
      %v1948 = vpop.f32.mrb[0].mxu0
      %v1949 = vadd.f32 0.0, %v1948
      %v1950 = vpop.f32.mrb[0].mxu0
      %v1951 = vpop.f32.mrb[0].mxu0
      %v1952 = vadd.f32 0.0, %v1951
      %v1953 = vpop.f32.mrb[0].mxu0
      %1954 = vdwg.mxu0
      %v1955 = vsel %vm1100, %v1738, 0.0
      %1956 = vadd.xlane.f32.xlu0 %v1955
      %v1957 = vpop.xlane.xlu0 %1956
      %v1958 = vsel %vm1100, %v1740, 0.0
      %1959 = vadd.xlane.f32.xlu0 %v1958
      %v1960 = vpop.xlane.xlu0 %1959
      %v1961 = vsel %vm1100, %v1742, 0.0
      %1962 = vadd.xlane.f32.xlu0 %v1961
      %v1963 = vpop.xlane.xlu0 %1962
      %v1964 = vsel %vm1100, %v1744, 0.0
      %1965 = vadd.xlane.f32.xlu0 %v1964
      %v1966 = vpop.xlane.xlu0 %1965
      %v1967 = vsel %vm1100, %v1746, 0.0
      %1968 = vadd.xlane.f32.xlu0 %v1967
      %v1969 = vpop.xlane.xlu0 %1968
      %v1970 = vsel %vm1100, %v1748, 0.0
      %1971 = vadd.xlane.f32.xlu0 %v1970
      %v1972 = vpop.xlane.xlu0 %1971
      %v1973 = vsel %vm1100, %v1750, 0.0
      %1974 = vadd.xlane.f32.xlu0 %v1973
      %v1975 = vpop.xlane.xlu0 %1974
      %v1976 = vsel %vm1100, %v1752, 0.0
      %1977 = vadd.xlane.f32.xlu0 %v1976
      %v1978 = vpop.xlane.xlu0 %1977
      %v1979 = vsel %vm1100, %v1754, 0.0
      %1980 = vadd.xlane.f32.xlu0 %v1979
      %v1981 = vpop.xlane.xlu0 %1980
      %v1982 = vsel %vm1100, %v1756, 0.0
      %1983 = vadd.xlane.f32.xlu0 %v1982
      %v1984 = vpop.xlane.xlu0 %1983
      %v1985 = vsel %vm1100, %v1758, 0.0
      %1986 = vadd.xlane.f32.xlu0 %v1985
      %v1987 = vpop.xlane.xlu0 %1986
      %v1988 = vsel %vm1100, %v1760, 0.0
      %1989 = vadd.xlane.f32.xlu0 %v1988
      %v1990 = vpop.xlane.xlu0 %1989
      %v1991 = vsel %vm1100, %v1762, 0.0
      %1992 = vadd.xlane.f32.xlu0 %v1991
      %v1993 = vpop.xlane.xlu0 %1992
      %v1994 = vsel %vm1100, %v1764, 0.0
      %1995 = vadd.xlane.f32.xlu0 %v1994
      %v1996 = vpop.xlane.xlu0 %1995
      %v1997 = vsel %vm1100, %v1766, 0.0
      %1998 = vadd.xlane.f32.xlu0 %v1997
      %v1999 = vpop.xlane.xlu0 %1998
      %v2000 = vsel %vm1100, %v1768, 0.0
      %2001 = vadd.xlane.f32.xlu0 %v2000
      %v2002 = vpop.xlane.xlu0 %2001
      %v2003 = vrcp.pop %v1957
      %v2004 = vrcp.pop %v1960
      %v2005 = vrcp.pop %v1963
      %v2006 = vrcp.pop %v1966
      %v2007 = vrcp.pop %v1969
      %v2008 = vrcp.pop %v1972
      %v2009 = vrcp.pop %v1975
      %v2010 = vrcp.pop %v1978
      %v2011 = vrcp.pop %v1981
      %v2012 = vrcp.pop %v1984
      %v2013 = vrcp.pop %v1987
      %v2014 = vrcp.pop %v1990
      %v2015 = vrcp.pop %v1993
      %v2016 = vrcp.pop %v1996
      %v2017 = vrcp.pop %v1999
      %v2018 = vrcp.pop %v2002
      %v2019 = vmul.f32 %v1836, %v2003
      %v2020 = vmul.f32 %v1839, %v2004
      %v2021 = vmul.f32 %v1844, %v2005
      %v2022 = vmul.f32 %v1847, %v2006
      %v2023 = vmul.f32 %v1852, %v2007
      %v2024 = vmul.f32 %v1855, %v2008
      %v2025 = vmul.f32 %v1860, %v2009
      %v2026 = vmul.f32 %v1863, %v2010
      %v2027 = vmul.f32 %v1925, %v2011
      %v2028 = vmul.f32 %v1928, %v2012
      %v2029 = vmul.f32 %v1933, %v2013
      %v2030 = vmul.f32 %v1936, %v2014
      %v2031 = vmul.f32 %v1941, %v2015
      %v2032 = vmul.f32 %v1944, %v2016
      %v2033 = vmul.f32 %v1949, %v2017
      %v2034 = vmul.f32 %v1952, %v2018
      %2051 = vrot.lane.b32.xlu0 %v2019, 16
      %v2052 = vpop.permute.xlu0 %2051
      %2053 = vrot.lane.b32.xlu0 %v2020, 16
      %v2054 = vpop.permute.xlu0 %2053
      %2055 = vrot.lane.b32.xlu0 %v2021, 16
      %v2056 = vpop.permute.xlu0 %2055
      %2057 = vrot.lane.b32.xlu0 %v2022, 16
      %v2058 = vpop.permute.xlu0 %2057
      %2059 = vrot.lane.b32.xlu0 %v2023, 16
      %v2060 = vpop.permute.xlu0 %2059
      %2061 = vrot.lane.b32.xlu0 %v2024, 16
      %v2062 = vpop.permute.xlu0 %2061
      %2063 = vrot.lane.b32.xlu0 %v2025, 16
      %v2064 = vpop.permute.xlu0 %2063
      %2065 = vrot.lane.b32.xlu0 %v2026, 16
      %v2066 = vpop.permute.xlu0 %2065
      %2067 = vrot.lane.b32.xlu0 %v2027, 16
      %v2068 = vpop.permute.xlu0 %2067
      %2069 = vrot.lane.b32.xlu0 %v2028, 16
      %v2070 = vpop.permute.xlu0 %2069
      %2071 = vrot.lane.b32.xlu0 %v2029, 16
      %v2072 = vpop.permute.xlu0 %2071
      %2073 = vrot.lane.b32.xlu0 %v2030, 16
      %v2074 = vpop.permute.xlu0 %2073
      %2075 = vrot.lane.b32.xlu0 %v2031, 16
      %v2076 = vpop.permute.xlu0 %2075
      %2077 = vrot.lane.b32.xlu0 %v2032, 16
      %v2078 = vpop.permute.xlu0 %2077
      %2079 = vrot.lane.b32.xlu0 %v2033, 16
      %v2080 = vpop.permute.xlu0 %2079
      %2081 = vrot.lane.b32.xlu0 %v2034, 16
      %v2082 = vpop.permute.xlu0 %2081
      %v2099 = vsel %vm909, %v1447, %v2052
      %v2100 = vsel %vm909, %v1448, %v2054
      %v2101 = vsel %vm909, %v1449, %v2056
      %v2102 = vsel %vm909, %v1450, %v2058
      %v2103 = vsel %vm909, %v1451, %v2060
      %v2104 = vsel %vm909, %v1452, %v2062
      %v2105 = vsel %vm909, %v1453, %v2064
      %v2106 = vsel %vm909, %v1454, %v2066
      %v2107 = vsel %vm909, %v1455, %v2068
      %v2108 = vsel %vm909, %v1456, %v2070
      %v2109 = vsel %vm909, %v1457, %v2072
      %v2110 = vsel %vm909, %v1458, %v2074
      %v2111 = vsel %vm909, %v1459, %v2076
      %v2112 = vsel %vm909, %v1460, %v2078
      %v2113 = vsel %vm909, %v1461, %v2080
      %v2114 = vsel %vm909, %v1462, %v2082
      %v2115 = vpack.c.bf16 %v2100, %v2099
      %v2116 = vpack.c.bf16 %v2102, %v2101
      %v2117 = vpack.c.bf16 %v2104, %v2103
      %v2118 = vpack.c.bf16 %v2106, %v2105
      %v2119 = vpack.c.bf16 %v2108, %v2107
      %v2120 = vpack.c.bf16 %v2110, %v2109
      %v2121 = vpack.c.bf16 %v2112, %v2111
      %v2122 = vpack.c.bf16 %v2114, %v2113
      %v2123 = vld [vmem:[%s4] sm:$0xf]
      %v2124 = vld [vmem:[%s4 + $0x4] sm:$0xf]
      %v2125 = vld [vmem:[%s4 + $0x8] sm:$0xf]
      %v2126 = vld [vmem:[%s4 + $0xc] sm:$0xf]
      %v2131 = vunpack.c.l.b16 %v2123
      %v2132 = vunpack.c.l.b16 %v2124
      %v2133 = vunpack.c.l.b16 %v2125
      %v2134 = vunpack.c.l.b16 %v2126
      %v2135 = vpack.c.b16 %v2132, %v2131
      %v2136 = vpack.c.b16 %v2134, %v2133
      %v2140 = vsel %vm490, %v2115, 0
      %v2143 = vsel %vm490, %v2116, 0
      %v2146 = vsel %vm490, %v2117, 0
      %v2149 = vsel %vm490, %v2118, 0
      %v2152 = vsel %vm490, %v2119, 0
      %v2155 = vsel %vm490, %v2120, 0
      %v2158 = vsel %vm490, %v2121, 0
      %v2161 = vsel %vm490, %v2122, 0
      %2163 = vmatprep.subr.bf16.mxu0 0
      %2164 = vmatpush1.bf16.msra.mxu0 %v2135
      %2165 = vmatprep.subr.bf16.mxu0 0
      %2166 = vmatpush1.bf16.msra.mxu0 %v2136
      %2167 = vmatprep.subr.bf16.mxu0 0
      %2168 = vmatpush1.bf16.msra.mxu0 0
      %2169 = vmatprep.subr.bf16.mxu0 0
      %2170 = vmatpush1.bf16.msra.mxu0 0
      %2171 = vmatprep.subr.bf16.mxu0 0
      %2172 = vmatpush1.bf16.msra.mxu0 0
      %2173 = vmatprep.subr.bf16.mxu0 0
      %2174 = vmatpush1.bf16.msra.mxu0 0
      %2175 = vmatprep.subr.bf16.mxu0 0
      %2176 = vmatpush1.bf16.msra.mxu0 0
      %2177 = vmatprep.subr.bf16.mxu0 0
      %2178 = vmatpush1.bf16.msra.mxu0 0
      %2179 = vmatprep.subr.bf16.mxu0 0
      %2180 = vmatpush1.bf16.msra.mxu0 0
      %2181 = vmatprep.subr.bf16.mxu0 0
      %2182 = vmatpush1.bf16.msra.mxu0 0
      %2183 = vmatprep.subr.bf16.mxu0 0
      %2184 = vmatpush1.bf16.msra.mxu0 0
      %2185 = vmatprep.subr.bf16.mxu0 0
      %2186 = vmatpush1.bf16.msra.mxu0 0
      %2187 = vmatprep.subr.bf16.mxu0 0
      %2188 = vmatpush1.bf16.msra.mxu0 0
      %2189 = vmatprep.subr.bf16.mxu0 0
      %2190 = vmatpush1.bf16.msra.mxu0 0
      %2191 = vmatprep.subr.bf16.mxu0 0
      %2192 = vmatpush1.bf16.msra.mxu0 0
      %2193 = vmatprep.subr.bf16.mxu0 0
      %2194 = vmatpush1.bf16.msra.mxu0 0
      %2195 = vmatprep.mubr.bf16.mxu0 0
      %2196 = vmatmul.mubr.bf16.gmra.mrb[0].mxu0 %v2140
      %v2197 = vpop.f32.mrb[0].mxu0
      %v2198 = vadd.f32 0.0, %v2197
      %v2199 = vpop.f32.mrb[0].mxu0
      %v2200 = vpop.f32.mrb[0].mxu0
      %v2201 = vadd.f32 0.0, %v2200
      %v2202 = vpop.f32.mrb[0].mxu0
      %2203 = vmatprep.mubr.bf16.mxu0 0
      %2204 = vmatmul.mubr.bf16.gmra.mrb[0].mxu0 %v2143
      %v2205 = vpop.f32.mrb[0].mxu0
      %v2206 = vadd.f32 0.0, %v2205
      %v2207 = vpop.f32.mrb[0].mxu0
      %v2208 = vpop.f32.mrb[0].mxu0
      %v2209 = vadd.f32 0.0, %v2208
      %v2210 = vpop.f32.mrb[0].mxu0
      %2211 = vmatprep.mubr.bf16.mxu0 0
      %2212 = vmatmul.mubr.bf16.gmra.mrb[0].mxu0 %v2146
      %v2213 = vpop.f32.mrb[0].mxu0
      %v2214 = vadd.f32 0.0, %v2213
      %v2215 = vpop.f32.mrb[0].mxu0
      %v2216 = vpop.f32.mrb[0].mxu0
      %v2217 = vadd.f32 0.0, %v2216
      %v2218 = vpop.f32.mrb[0].mxu0
      %2219 = vmatprep.mubr.bf16.mxu0 0
      %2220 = vmatmul.mubr.bf16.gmra.mrb[0].mxu0 %v2149
      %v2221 = vpop.f32.mrb[0].mxu0
      %v2222 = vadd.f32 0.0, %v2221
      %v2223 = vpop.f32.mrb[0].mxu0
      %v2224 = vpop.f32.mrb[0].mxu0
      %v2225 = vadd.f32 0.0, %v2224
      %v2226 = vpop.f32.mrb[0].mxu0
      %2227 = vmatprep.mubr.bf16.mxu0 0
      %2228 = vmatmul.mubr.bf16.gmra.mrb[0].mxu0 %v2152
      %v2229 = vpop.f32.mrb[0].mxu0
      %v2230 = vadd.f32 0.0, %v2229
      %v2231 = vpop.f32.mrb[0].mxu0
      %v2232 = vpop.f32.mrb[0].mxu0
      %v2233 = vadd.f32 0.0, %v2232
      %v2234 = vpop.f32.mrb[0].mxu0
      %2235 = vmatprep.mubr.bf16.mxu0 0
      %2236 = vmatmul.mubr.bf16.gmra.mrb[0].mxu0 %v2155
      %v2237 = vpop.f32.mrb[0].mxu0
      %v2238 = vadd.f32 0.0, %v2237
      %v2239 = vpop.f32.mrb[0].mxu0
      %v2240 = vpop.f32.mrb[0].mxu0
      %v2241 = vadd.f32 0.0, %v2240
      %v2242 = vpop.f32.mrb[0].mxu0
      %2243 = vmatprep.mubr.bf16.mxu0 0
      %2244 = vmatmul.mubr.bf16.gmra.mrb[0].mxu0 %v2158
      %v2245 = vpop.f32.mrb[0].mxu0
      %v2246 = vadd.f32 0.0, %v2245
      %v2247 = vpop.f32.mrb[0].mxu0
      %v2248 = vpop.f32.mrb[0].mxu0
      %v2249 = vadd.f32 0.0, %v2248
      %v2250 = vpop.f32.mrb[0].mxu0
      %2251 = vmatprep.mubr.bf16.mxu0 0
      %2252 = vmatmul.mubr.bf16.gmra.mrb[0].mxu0 %v2161
      %v2253 = vpop.f32.mrb[0].mxu0
      %v2254 = vadd.f32 0.0, %v2253
      %v2255 = vpop.f32.mrb[0].mxu0
      %v2256 = vpop.f32.mrb[0].mxu0
      %v2257 = vadd.f32 0.0, %v2256
      %v2258 = vpop.f32.mrb[0].mxu0
      %2259 = vdwg.mxu0
      %v2260 = vadd.f32 %v472, %v2198
      %v2261 = vadd.f32 %v473, %v2201
      %v2262 = vadd.f32 %v474, %v2206
      %v2263 = vadd.f32 %v475, %v2209
      %v2264 = vadd.f32 %v476, %v2214
      %v2265 = vadd.f32 %v477, %v2217
      %v2266 = vadd.f32 %v478, %v2222
      %v2267 = vadd.f32 %v479, %v2225
      %v2268 = vadd.f32 %v480, %v2230
      %v2269 = vadd.f32 %v481, %v2233
      %v2270 = vadd.f32 %v482, %v2238
      %v2271 = vadd.f32 %v483, %v2241
      %v2272 = vadd.f32 %v484, %v2246
      %v2273 = vadd.f32 %v485, %v2249
      %v2274 = vadd.f32 %v486, %v2254
      %v2275 = vadd.f32 %v487, %v2257
      %v2276 = vld [vmem:[%s5] sm:$0x1]
      %v2278 = vlaneseq
      %v2279 = vshrl.u32 %v2278, 7
      %v2280 = vsub.s32 0, %v2279
      %v2281 = vrot.slane %v2276, %v2280
      %v2283 = vadd.f32 %v2260, %v2281
      %v2284 = vadd.f32 %v2261, %v2281
      %v2285 = vadd.f32 %v2262, %v2281
      %v2286 = vadd.f32 %v2263, %v2281
      %v2287 = vadd.f32 %v2264, %v2281
      %v2288 = vadd.f32 %v2265, %v2281
      %v2289 = vadd.f32 %v2266, %v2281
      %v2290 = vadd.f32 %v2267, %v2281
      %v2291 = vadd.f32 %v2268, %v2281
      %v2292 = vadd.f32 %v2269, %v2281
      %v2293 = vadd.f32 %v2270, %v2281
      %v2294 = vadd.f32 %v2271, %v2281
      %v2295 = vadd.f32 %v2272, %v2281
      %v2296 = vadd.f32 %v2273, %v2281
      %v2297 = vadd.f32 %v2274, %v2281
      %v2298 = vadd.f32 %v2275, %v2281
      %v2299 = vld [vmem:[%s6] sm:$0x1]
      %v2300 = vld [vmem:[%s7] sm:$0x1]
      %v2301 = vsel %vm490, %v2283, 0.0
      %2302 = vadd.xlane.f32.xlu0 %v2301
      %v2303 = vpop.xlane.xlu0 %2302
      %v2304 = vsel %vm490, %v2284, 0.0
      %2305 = vadd.xlane.f32.xlu0 %v2304
      %v2306 = vpop.xlane.xlu0 %2305
      %v2307 = vsel %vm490, %v2285, 0.0
      %2308 = vadd.xlane.f32.xlu0 %v2307
      %v2309 = vpop.xlane.xlu0 %2308
      %v2310 = vsel %vm490, %v2286, 0.0
      %2311 = vadd.xlane.f32.xlu0 %v2310
      %v2312 = vpop.xlane.xlu0 %2311
      %v2313 = vsel %vm490, %v2287, 0.0
      %2314 = vadd.xlane.f32.xlu0 %v2313
      %v2315 = vpop.xlane.xlu0 %2314
      %v2316 = vsel %vm490, %v2288, 0.0
      %2317 = vadd.xlane.f32.xlu0 %v2316
      %v2318 = vpop.xlane.xlu0 %2317
      %v2319 = vsel %vm490, %v2289, 0.0
      %2320 = vadd.xlane.f32.xlu0 %v2319
      %v2321 = vpop.xlane.xlu0 %2320
      %v2322 = vsel %vm490, %v2290, 0.0
      %2323 = vadd.xlane.f32.xlu0 %v2322
      %v2324 = vpop.xlane.xlu0 %2323
      %v2325 = vsel %vm490, %v2291, 0.0
      %2326 = vadd.xlane.f32.xlu0 %v2325
      %v2327 = vpop.xlane.xlu0 %2326
      %v2328 = vsel %vm490, %v2292, 0.0
      %2329 = vadd.xlane.f32.xlu0 %v2328
      %v2330 = vpop.xlane.xlu0 %2329
      %v2331 = vsel %vm490, %v2293, 0.0
      %2332 = vadd.xlane.f32.xlu0 %v2331
      %v2333 = vpop.xlane.xlu0 %2332
      %v2334 = vsel %vm490, %v2294, 0.0
      %2335 = vadd.xlane.f32.xlu0 %v2334
      %v2336 = vpop.xlane.xlu0 %2335
      %v2337 = vsel %vm490, %v2295, 0.0
      %2338 = vadd.xlane.f32.xlu0 %v2337
      %v2339 = vpop.xlane.xlu0 %2338
      %v2340 = vsel %vm490, %v2296, 0.0
      %2341 = vadd.xlane.f32.xlu0 %v2340
      %v2342 = vpop.xlane.xlu0 %2341
      %v2343 = vsel %vm490, %v2297, 0.0
      %2344 = vadd.xlane.f32.xlu0 %v2343
      %v2345 = vpop.xlane.xlu0 %2344
      %v2346 = vsel %vm490, %v2298, 0.0
      %2347 = vadd.xlane.f32.xlu0 %v2346
      %v2348 = vpop.xlane.xlu0 %2347
      %v2349 = vmul.f32 %v2303, %v539
      %v2350 = vmul.f32 %v2306, %v539
      %v2351 = vmul.f32 %v2309, %v539
      %v2352 = vmul.f32 %v2312, %v539
      %v2353 = vmul.f32 %v2315, %v539
      %v2354 = vmul.f32 %v2318, %v539
      %v2355 = vmul.f32 %v2321, %v539
      %v2356 = vmul.f32 %v2324, %v539
      %v2357 = vmul.f32 %v2327, %v539
      %v2358 = vmul.f32 %v2330, %v539
      %v2359 = vmul.f32 %v2333, %v539
      %v2360 = vmul.f32 %v2336, %v539
      %v2361 = vmul.f32 %v2339, %v539
      %v2362 = vmul.f32 %v2342, %v539
      %v2363 = vmul.f32 %v2345, %v539
      %v2364 = vmul.f32 %v2348, %v539
      %v2365 = vsub.f32 %v2283, %v2349
      %v2366 = vsub.f32 %v2284, %v2350
      %v2367 = vsub.f32 %v2285, %v2351
      %v2368 = vsub.f32 %v2286, %v2352
      %v2369 = vsub.f32 %v2287, %v2353
      %v2370 = vsub.f32 %v2288, %v2354
      %v2371 = vsub.f32 %v2289, %v2355
      %v2372 = vsub.f32 %v2290, %v2356
      %v2373 = vsub.f32 %v2291, %v2357
      %v2374 = vsub.f32 %v2292, %v2358
      %v2375 = vsub.f32 %v2293, %v2359
      %v2376 = vsub.f32 %v2294, %v2360
      %v2377 = vsub.f32 %v2295, %v2361
      %v2378 = vsub.f32 %v2296, %v2362
      %v2379 = vsub.f32 %v2297, %v2363
      %v2380 = vsub.f32 %v2298, %v2364
      %v2381 = vmul.f32 %v2365, %v2365
      %v2382 = vmul.f32 %v2366, %v2366
      %v2383 = vmul.f32 %v2367, %v2367
      %v2384 = vmul.f32 %v2368, %v2368
      %v2385 = vmul.f32 %v2369, %v2369
      %v2386 = vmul.f32 %v2370, %v2370
      %v2387 = vmul.f32 %v2371, %v2371
      %v2388 = vmul.f32 %v2372, %v2372
      %v2389 = vmul.f32 %v2373, %v2373
      %v2390 = vmul.f32 %v2374, %v2374
      %v2391 = vmul.f32 %v2375, %v2375
      %v2392 = vmul.f32 %v2376, %v2376
      %v2393 = vmul.f32 %v2377, %v2377
      %v2394 = vmul.f32 %v2378, %v2378
      %v2395 = vmul.f32 %v2379, %v2379
      %v2396 = vmul.f32 %v2380, %v2380
      %v2397 = vsel %vm490, %v2381, 0.0
      %2398 = vadd.xlane.f32.xlu0 %v2397
      %v2399 = vpop.xlane.xlu0 %2398
      %v2400 = vsel %vm490, %v2382, 0.0
      %2401 = vadd.xlane.f32.xlu0 %v2400
      %v2402 = vpop.xlane.xlu0 %2401
      %v2403 = vsel %vm490, %v2383, 0.0
      %2404 = vadd.xlane.f32.xlu0 %v2403
      %v2405 = vpop.xlane.xlu0 %2404
      %v2406 = vsel %vm490, %v2384, 0.0
      %2407 = vadd.xlane.f32.xlu0 %v2406
      %v2408 = vpop.xlane.xlu0 %2407
      %v2409 = vsel %vm490, %v2385, 0.0
      %2410 = vadd.xlane.f32.xlu0 %v2409
      %v2411 = vpop.xlane.xlu0 %2410
      %v2412 = vsel %vm490, %v2386, 0.0
      %2413 = vadd.xlane.f32.xlu0 %v2412
      %v2414 = vpop.xlane.xlu0 %2413
      %v2415 = vsel %vm490, %v2387, 0.0
      %2416 = vadd.xlane.f32.xlu0 %v2415
      %v2417 = vpop.xlane.xlu0 %2416
      %v2418 = vsel %vm490, %v2388, 0.0
      %2419 = vadd.xlane.f32.xlu0 %v2418
      %v2420 = vpop.xlane.xlu0 %2419
      %v2421 = vsel %vm490, %v2389, 0.0
      %2422 = vadd.xlane.f32.xlu0 %v2421
      %v2423 = vpop.xlane.xlu0 %2422
      %v2424 = vsel %vm490, %v2390, 0.0
      %2425 = vadd.xlane.f32.xlu0 %v2424
      %v2426 = vpop.xlane.xlu0 %2425
      %v2427 = vsel %vm490, %v2391, 0.0
      %2428 = vadd.xlane.f32.xlu0 %v2427
      %v2429 = vpop.xlane.xlu0 %2428
      %v2430 = vsel %vm490, %v2392, 0.0
      %2431 = vadd.xlane.f32.xlu0 %v2430
      %v2432 = vpop.xlane.xlu0 %2431
      %v2433 = vsel %vm490, %v2393, 0.0
      %2434 = vadd.xlane.f32.xlu0 %v2433
      %v2435 = vpop.xlane.xlu0 %2434
      %v2436 = vsel %vm490, %v2394, 0.0
      %2437 = vadd.xlane.f32.xlu0 %v2436
      %v2438 = vpop.xlane.xlu0 %2437
      %v2439 = vsel %vm490, %v2395, 0.0
      %2440 = vadd.xlane.f32.xlu0 %v2439
      %v2441 = vpop.xlane.xlu0 %2440
      %v2442 = vsel %vm490, %v2396, 0.0
      %2443 = vadd.xlane.f32.xlu0 %v2442
      %v2444 = vpop.xlane.xlu0 %2443
      %v2445 = vmul.f32 %v2399, %v539
      %v2446 = vmul.f32 %v2402, %v539
      %v2447 = vmul.f32 %v2405, %v539
      %v2448 = vmul.f32 %v2408, %v539
      %v2449 = vmul.f32 %v2411, %v539
      %v2450 = vmul.f32 %v2414, %v539
      %v2451 = vmul.f32 %v2417, %v539
      %v2452 = vmul.f32 %v2420, %v539
      %v2453 = vmul.f32 %v2423, %v539
      %v2454 = vmul.f32 %v2426, %v539
      %v2455 = vmul.f32 %v2429, %v539
      %v2456 = vmul.f32 %v2432, %v539
      %v2457 = vmul.f32 %v2435, %v539
      %v2458 = vmul.f32 %v2438, %v539
      %v2459 = vmul.f32 %v2441, %v539
      %v2460 = vmul.f32 %v2444, %v539
      %v2461 = vadd.f32 %v2445, 1e-05
      %v2462 = vadd.f32 %v2446, 1e-05
      %v2463 = vadd.f32 %v2447, 1e-05
      %v2464 = vadd.f32 %v2448, 1e-05
      %v2465 = vadd.f32 %v2449, 1e-05
      %v2466 = vadd.f32 %v2450, 1e-05
      %v2467 = vadd.f32 %v2451, 1e-05
      %v2468 = vadd.f32 %v2452, 1e-05
      %v2469 = vadd.f32 %v2453, 1e-05
      %v2470 = vadd.f32 %v2454, 1e-05
      %v2471 = vadd.f32 %v2455, 1e-05
      %v2472 = vadd.f32 %v2456, 1e-05
      %v2473 = vadd.f32 %v2457, 1e-05
      %v2474 = vadd.f32 %v2458, 1e-05
      %v2475 = vadd.f32 %v2459, 1e-05
      %v2476 = vadd.f32 %v2460, 1e-05
      %v2477 = vrsqrt.pop %v2461
      %v2478 = vrsqrt.pop %v2462
      %v2479 = vrsqrt.pop %v2463
      %v2480 = vrsqrt.pop %v2464
      %v2481 = vrsqrt.pop %v2465
      %v2482 = vrsqrt.pop %v2466
      %v2483 = vrsqrt.pop %v2467
      %v2484 = vrsqrt.pop %v2468
      %v2485 = vrsqrt.pop %v2469
      %v2486 = vrsqrt.pop %v2470
      %v2487 = vrsqrt.pop %v2471
      %v2488 = vrsqrt.pop %v2472
      %v2489 = vrsqrt.pop %v2473
      %v2490 = vrsqrt.pop %v2474
      %v2491 = vrsqrt.pop %v2475
      %v2492 = vrsqrt.pop %v2476
      %v2493 = vmul.f32 %v2365, %v2477
      %v2494 = vmul.f32 %v2366, %v2478
      %v2495 = vmul.f32 %v2367, %v2479
      %v2496 = vmul.f32 %v2368, %v2480
      %v2497 = vmul.f32 %v2369, %v2481
      %v2498 = vmul.f32 %v2370, %v2482
      %v2499 = vmul.f32 %v2371, %v2483
      %v2500 = vmul.f32 %v2372, %v2484
      %v2501 = vmul.f32 %v2373, %v2485
      %v2502 = vmul.f32 %v2374, %v2486
      %v2503 = vmul.f32 %v2375, %v2487
      %v2504 = vmul.f32 %v2376, %v2488
      %v2505 = vmul.f32 %v2377, %v2489
      %v2506 = vmul.f32 %v2378, %v2490
      %v2507 = vmul.f32 %v2379, %v2491
      %v2508 = vmul.f32 %v2380, %v2492
      %v2510 = vlaneseq
      %v2511 = vshrl.u32 %v2510, 7
      %v2512 = vsub.s32 0, %v2511
      %v2513 = vrot.slane %v2299, %v2512
      %v2515 = vmul.f32 %v2493, %v2513
      %v2516 = vmul.f32 %v2494, %v2513
      %v2517 = vmul.f32 %v2495, %v2513
      %v2518 = vmul.f32 %v2496, %v2513
      %v2519 = vmul.f32 %v2497, %v2513
      %v2520 = vmul.f32 %v2498, %v2513
      %v2521 = vmul.f32 %v2499, %v2513
      %v2522 = vmul.f32 %v2500, %v2513
      %v2523 = vmul.f32 %v2501, %v2513
      %v2524 = vmul.f32 %v2502, %v2513
      %v2525 = vmul.f32 %v2503, %v2513
      %v2526 = vmul.f32 %v2504, %v2513
      %v2527 = vmul.f32 %v2505, %v2513
      %v2528 = vmul.f32 %v2506, %v2513
      %v2529 = vmul.f32 %v2507, %v2513
      %v2530 = vmul.f32 %v2508, %v2513
      %v2532 = vlaneseq
      %v2533 = vshrl.u32 %v2532, 7
      %v2534 = vsub.s32 0, %v2533
      %v2535 = vrot.slane %v2300, %v2534
      %v2537 = vadd.f32 %v2515, %v2535
      %v2538 = vadd.f32 %v2516, %v2535
      %v2539 = vadd.f32 %v2517, %v2535
      %v2540 = vadd.f32 %v2518, %v2535
      %v2541 = vadd.f32 %v2519, %v2535
      %v2542 = vadd.f32 %v2520, %v2535
      %v2543 = vadd.f32 %v2521, %v2535
      %v2544 = vadd.f32 %v2522, %v2535
      %v2545 = vadd.f32 %v2523, %v2535
      %v2546 = vadd.f32 %v2524, %v2535
      %v2547 = vadd.f32 %v2525, %v2535
      %v2548 = vadd.f32 %v2526, %v2535
      %v2549 = vadd.f32 %v2527, %v2535
      %v2550 = vadd.f32 %v2528, %v2535
      %v2551 = vadd.f32 %v2529, %v2535
      %v2552 = vadd.f32 %v2530, %v2535
      %v2553 = vpack.c.bf16 %v2538, %v2537
      %v2554 = vpack.c.bf16 %v2540, %v2539
      %v2555 = vpack.c.bf16 %v2542, %v2541
      %v2556 = vpack.c.bf16 %v2544, %v2543
      %v2557 = vpack.c.bf16 %v2546, %v2545
      %v2558 = vpack.c.bf16 %v2548, %v2547
      %v2559 = vpack.c.bf16 %v2550, %v2549
      %v2560 = vpack.c.bf16 %v2552, %v2551
      %v2561 = vld [vmem:[%s8] sm:$0xf]
      %v2562 = vld [vmem:[%s8 + $0x4] sm:$0xf]
      %v2563 = vld [vmem:[%s8 + $0x8] sm:$0xf]
      %v2564 = vld [vmem:[%s8 + $0xc] sm:$0xf]
      %v2565 = vld [vmem:[%s9] sm:$0x1]
      %v2567 = vlaneseq
      %v2568 = vshrl.u32 %v2567, 7
      %v2569 = vsub.s32 0, %v2568
      %v2570 = vrot.slane %v2565, %v2569
      %v2576 = vunpack.c.l.b16 %v2561
      %v2577 = vunpack.c.l.b16 %v2562
      %v2578 = vunpack.c.l.b16 %v2563
      %v2579 = vunpack.c.l.b16 %v2564
      %v2580 = vpack.c.b16 %v2577, %v2576
      %v2581 = vpack.c.b16 %v2579, %v2578
      %v2585 = vsel %vm490, %v2553, 0
      %v2588 = vsel %vm490, %v2554, 0
      %v2591 = vsel %vm490, %v2555, 0
      %v2594 = vsel %vm490, %v2556, 0
      %v2597 = vsel %vm490, %v2557, 0
      %v2600 = vsel %vm490, %v2558, 0
      %v2603 = vsel %vm490, %v2559, 0
      %v2606 = vsel %vm490, %v2560, 0
      %2608 = vmatprep.subr.bf16.mxu0 0
      %2609 = vmatpush1.bf16.msra.mxu0 %v2580
      %2610 = vmatprep.subr.bf16.mxu0 0
      %2611 = vmatpush1.bf16.msra.mxu0 %v2581
      %2612 = vmatprep.subr.bf16.mxu0 0
      %2613 = vmatpush1.bf16.msra.mxu0 0
      %2614 = vmatprep.subr.bf16.mxu0 0
      %2615 = vmatpush1.bf16.msra.mxu0 0
      %2616 = vmatprep.subr.bf16.mxu0 0
      %2617 = vmatpush1.bf16.msra.mxu0 0
      %2618 = vmatprep.subr.bf16.mxu0 0
      %2619 = vmatpush1.bf16.msra.mxu0 0
      %2620 = vmatprep.subr.bf16.mxu0 0
      %2621 = vmatpush1.bf16.msra.mxu0 0
      %2622 = vmatprep.subr.bf16.mxu0 0
      %2623 = vmatpush1.bf16.msra.mxu0 0
      %2624 = vmatprep.subr.bf16.mxu0 0
      %2625 = vmatpush1.bf16.msra.mxu0 0
      %2626 = vmatprep.subr.bf16.mxu0 0
      %2627 = vmatpush1.bf16.msra.mxu0 0
      %2628 = vmatprep.subr.bf16.mxu0 0
      %2629 = vmatpush1.bf16.msra.mxu0 0
      %2630 = vmatprep.subr.bf16.mxu0 0
      %2631 = vmatpush1.bf16.msra.mxu0 0
      %2632 = vmatprep.subr.bf16.mxu0 0
      %2633 = vmatpush1.bf16.msra.mxu0 0
      %2634 = vmatprep.subr.bf16.mxu0 0
      %2635 = vmatpush1.bf16.msra.mxu0 0
      %2636 = vmatprep.subr.bf16.mxu0 0
      %2637 = vmatpush1.bf16.msra.mxu0 0
      %2638 = vmatprep.subr.bf16.mxu0 0
      %2639 = vmatpush1.bf16.msra.mxu0 0
      %2640 = vmatprep.mubr.bf16.mxu0 0
      %2641 = vmatmul.mubr.bf16.gmra.mrb[0].mxu0 %v2585
      %v2642 = vpop.f32.mrb[0].mxu0
      %v2643 = vadd.f32 %v2570, %v2642
      %v2644 = vpop.f32.mrb[0].mxu0
      %v2645 = vpop.f32.mrb[0].mxu0
      %v2646 = vadd.f32 %v2570, %v2645
      %v2647 = vpop.f32.mrb[0].mxu0
      %2648 = vmatprep.mubr.bf16.mxu0 0
      %2649 = vmatmul.mubr.bf16.gmra.mrb[0].mxu0 %v2588
      %v2650 = vpop.f32.mrb[0].mxu0
      %v2651 = vadd.f32 %v2570, %v2650
      %v2652 = vpop.f32.mrb[0].mxu0
      %v2653 = vpop.f32.mrb[0].mxu0
      %v2654 = vadd.f32 %v2570, %v2653
      %v2655 = vpop.f32.mrb[0].mxu0
      %2656 = vmatprep.mubr.bf16.mxu0 0
      %2657 = vmatmul.mubr.bf16.gmra.mrb[0].mxu0 %v2591
      %v2658 = vpop.f32.mrb[0].mxu0
      %v2659 = vadd.f32 %v2570, %v2658
      %v2660 = vpop.f32.mrb[0].mxu0
      %v2661 = vpop.f32.mrb[0].mxu0
      %v2662 = vadd.f32 %v2570, %v2661
      %v2663 = vpop.f32.mrb[0].mxu0
      %2664 = vmatprep.mubr.bf16.mxu0 0
      %2665 = vmatmul.mubr.bf16.gmra.mrb[0].mxu0 %v2594
      %v2666 = vpop.f32.mrb[0].mxu0
      %v2667 = vadd.f32 %v2570, %v2666
      %v2668 = vpop.f32.mrb[0].mxu0
      %v2669 = vpop.f32.mrb[0].mxu0
      %v2670 = vadd.f32 %v2570, %v2669
      %v2671 = vpop.f32.mrb[0].mxu0
      %2672 = vmatprep.mubr.bf16.mxu0 0
      %2673 = vmatmul.mubr.bf16.gmra.mrb[0].mxu0 %v2597
      %v2674 = vpop.f32.mrb[0].mxu0
      %v2675 = vadd.f32 %v2570, %v2674
      %v2676 = vpop.f32.mrb[0].mxu0
      %v2677 = vpop.f32.mrb[0].mxu0
      %v2678 = vadd.f32 %v2570, %v2677
      %v2679 = vpop.f32.mrb[0].mxu0
      %2680 = vmatprep.mubr.bf16.mxu0 0
      %2681 = vmatmul.mubr.bf16.gmra.mrb[0].mxu0 %v2600
      %v2682 = vpop.f32.mrb[0].mxu0
      %v2683 = vadd.f32 %v2570, %v2682
      %v2684 = vpop.f32.mrb[0].mxu0
      %v2685 = vpop.f32.mrb[0].mxu0
      %v2686 = vadd.f32 %v2570, %v2685
      %v2687 = vpop.f32.mrb[0].mxu0
      %2688 = vmatprep.mubr.bf16.mxu0 0
      %2689 = vmatmul.mubr.bf16.gmra.mrb[0].mxu0 %v2603
      %v2690 = vpop.f32.mrb[0].mxu0
      %v2691 = vadd.f32 %v2570, %v2690
      %v2692 = vpop.f32.mrb[0].mxu0
      %v2693 = vpop.f32.mrb[0].mxu0
      %v2694 = vadd.f32 %v2570, %v2693
      %v2695 = vpop.f32.mrb[0].mxu0
      %2696 = vmatprep.mubr.bf16.mxu0 0
      %2697 = vmatmul.mubr.bf16.gmra.mrb[0].mxu0 %v2606
      %v2698 = vpop.f32.mrb[0].mxu0
      %v2699 = vadd.f32 %v2570, %v2698
      %v2700 = vpop.f32.mrb[0].mxu0
      %v2701 = vpop.f32.mrb[0].mxu0
      %v2702 = vadd.f32 %v2570, %v2701
      %v2703 = vpop.f32.mrb[0].mxu0
      %2704 = vdwg.mxu0
      %2705 = vst [vmem:[#allocation2] sm:$0xff] 0.0
      %2706 = vst [vmem:[#allocation2 + $0x8] sm:$0xff] 0.0
      %2707 = vst [vmem:[#allocation2 + $0x60] sm:$0xff] 0.0
      %2708 = vst [vmem:[#allocation2 + $0x68] sm:$0xff] 0.0
      %2709 = vst [vmem:[#allocation2 + $0x50] sm:$0xff] 0.0
      %2710 = vst [vmem:[#allocation2 + $0x58] sm:$0xff] 0.0
      %2711 = vst [vmem:[#allocation2 + $0xb0] sm:$0xff] 0.0
      %2712 = vst [vmem:[#allocation2 + $0xb8] sm:$0xff] 0.0
      %2713 = vst [vmem:[#allocation2 + $0x10] sm:$0xff] %v2643
      %2714 = vst [vmem:[#allocation2 + $0x18] sm:$0xff] %v2646
      %2715 = vst [vmem:[#allocation2 + $0x20] sm:$0xff] %v2651
      %2716 = vst [vmem:[#allocation2 + $0x28] sm:$0xff] %v2654
      %2717 = vst [vmem:[#allocation2 + $0x30] sm:$0xff] %v2659
      %2718 = vst [vmem:[#allocation2 + $0x38] sm:$0xff] %v2662
      %2719 = vst [vmem:[#allocation2 + $0x40] sm:$0xff] %v2667
      %2720 = vst [vmem:[#allocation2 + $0x48] sm:$0xff] %v2670
      %2721 = vst [vmem:[#allocation2 + $0x70] sm:$0xff] %v2675
      %2722 = vst [vmem:[#allocation2 + $0x78] sm:$0xff] %v2678
      %2723 = vst [vmem:[#allocation2 + $0x80] sm:$0xff] %v2683
      %2724 = vst [vmem:[#allocation2 + $0x88] sm:$0xff] %v2686
      %2725 = vst [vmem:[#allocation2 + $0x90] sm:$0xff] %v2691
      %2726 = vst [vmem:[#allocation2 + $0x98] sm:$0xff] %v2694
      %2727 = vst [vmem:[#allocation2 + $0xa0] sm:$0xff] %v2699
      %2728 = vst [vmem:[#allocation2 + $0xa8] sm:$0xff] %v2702
      %v2729 = vlaneseq
      %v2730 = vshrl.u32 %v2729, 7
      %v2731 = vadd.s32 %v2730, 8
      %v2732 = vadd.s32 %v2730, 16
      %v2733 = vadd.s32 %v2730, 24
      %v2734 = vadd.s32 %v2730, 32
      %v2735 = vadd.s32 %v2730, 40
      %v2736 = vadd.s32 %v2730, 48
      %v2737 = vadd.s32 %v2730, 56
      %vm2738 = vcmp.lt.s32.totalorder %v2730, 0
      %v2739 = vsub.s32 0, %v2730
      %v2740 = vsel %vm2738, %v2739, %v2730
      %v2741 = vshrl.u32 %v2740, 3
      %v2742 = vand.u32 %v2740, 7
      %v2743 = vsub.s32 0, %v2742
      %v2744 = vsel %vm2738, %v2743, %v2742
      %vm2745 = vcmp.lt.s32.totalorder %v2731, 0
      %v2746 = vsub.s32 0, %v2731
      %v2747 = vsel %vm2745, %v2746, %v2731
      %v2748 = vshrl.u32 %v2747, 3
      %v2749 = vand.u32 %v2747, 7
      %v2750 = vsub.s32 0, %v2749
      %v2751 = vsel %vm2745, %v2750, %v2749
      %vm2752 = vcmp.lt.s32.totalorder %v2732, 0
      %v2753 = vsub.s32 0, %v2732
      %v2754 = vsel %vm2752, %v2753, %v2732
      %v2755 = vshrl.u32 %v2754, 3
      %v2756 = vand.u32 %v2754, 7
      %v2757 = vsub.s32 0, %v2756
      %v2758 = vsel %vm2752, %v2757, %v2756
      %vm2759 = vcmp.lt.s32.totalorder %v2733, 0
      %v2760 = vsub.s32 0, %v2733
      %v2761 = vsel %vm2759, %v2760, %v2733
      %v2762 = vshrl.u32 %v2761, 3
      %v2763 = vand.u32 %v2761, 7
      %v2764 = vsub.s32 0, %v2763
      %v2765 = vsel %vm2759, %v2764, %v2763
      %vm2766 = vcmp.lt.s32.totalorder %v2734, 0
      %v2767 = vsub.s32 0, %v2734
      %v2768 = vsel %vm2766, %v2767, %v2734
      %v2769 = vshrl.u32 %v2768, 3
      %v2770 = vand.u32 %v2768, 7
      %v2771 = vsub.s32 0, %v2770
      %v2772 = vsel %vm2766, %v2771, %v2770
      %vm2773 = vcmp.lt.s32.totalorder %v2735, 0
      %v2774 = vsub.s32 0, %v2735
      %v2775 = vsel %vm2773, %v2774, %v2735
      %v2776 = vshrl.u32 %v2775, 3
      %v2777 = vand.u32 %v2775, 7
      %v2778 = vsub.s32 0, %v2777
      %v2779 = vsel %vm2773, %v2778, %v2777
      %vm2780 = vcmp.lt.s32.totalorder %v2736, 0
      %v2781 = vsub.s32 0, %v2736
      %v2782 = vsel %vm2780, %v2781, %v2736
      %v2783 = vshrl.u32 %v2782, 3
      %v2784 = vand.u32 %v2782, 7
      %v2785 = vsub.s32 0, %v2784
      %v2786 = vsel %vm2780, %v2785, %v2784
      %vm2787 = vcmp.lt.s32.totalorder %v2737, 0
      %v2788 = vsub.s32 0, %v2737
      %v2789 = vsel %vm2787, %v2788, %v2737
      %v2790 = vshrl.u32 %v2789, 3
      %v2791 = vand.u32 %v2789, 7
      %v2792 = vsub.s32 0, %v2791
      %v2793 = vsel %vm2787, %v2792, %v2791
      %vm2794 = vcmp.ne.s32.totalorder %v2744, 0
      %vm2795 = vcmp.ne.s32.totalorder %v2751, 0
      %vm2796 = vcmp.ne.s32.totalorder %v2758, 0
      %vm2797 = vcmp.ne.s32.totalorder %v2765, 0
      %vm2798 = vcmp.ne.s32.totalorder %v2772, 0
      %vm2799 = vcmp.ne.s32.totalorder %v2779, 0
      %vm2800 = vcmp.ne.s32.totalorder %v2786, 0
      %vm2801 = vcmp.ne.s32.totalorder %v2793, 0
      %vm2802 = vcmp.lt.s32.totalorder %v2744, 0
      %vm2803 = vcmp.lt.s32.totalorder %v2751, 0
      %vm2804 = vcmp.lt.s32.totalorder %v2758, 0
      %vm2805 = vcmp.lt.s32.totalorder %v2765, 0
      %vm2806 = vcmp.lt.s32.totalorder %v2772, 0
      %vm2807 = vcmp.lt.s32.totalorder %v2779, 0
      %vm2808 = vcmp.lt.s32.totalorder %v2786, 0
      %vm2809 = vcmp.lt.s32.totalorder %v2793, 0
      %vm2810 = vmand %vm2802, %vm2794
      %vm2811 = vmand %vm2803, %vm2795
      %vm2812 = vmand %vm2804, %vm2796
      %vm2813 = vmand %vm2805, %vm2797
      %vm2814 = vmand %vm2806, %vm2798
      %vm2815 = vmand %vm2807, %vm2799
      %vm2816 = vmand %vm2808, %vm2800
      %vm2817 = vmand %vm2809, %vm2801
      %v2818 = vadd.s32 %v2744, 8
      %v2819 = vadd.s32 %v2751, 8
      %v2820 = vadd.s32 %v2758, 8
      %v2821 = vadd.s32 %v2765, 8
      %v2822 = vadd.s32 %v2772, 8
      %v2823 = vadd.s32 %v2779, 8
      %v2824 = vadd.s32 %v2786, 8
      %v2825 = vadd.s32 %v2793, 8
      %v2826 = vsel %vm2810, %v2818, %v2744
      %v2827 = vsel %vm2811, %v2819, %v2751
      %v2828 = vsel %vm2812, %v2820, %v2758
      %v2829 = vsel %vm2813, %v2821, %v2765
      %v2830 = vsel %vm2814, %v2822, %v2772
      %v2831 = vsel %vm2815, %v2823, %v2779
      %v2832 = vsel %vm2816, %v2824, %v2786
      %v2833 = vsel %vm2817, %v2825, %v2793
      %vm2834 = vcmp.gt.s32.totalorder %v2826, 0
      %vm2835 = vcmp.gt.s32.totalorder %v2827, 0
      %vm2836 = vcmp.gt.s32.totalorder %v2828, 0
      %vm2837 = vcmp.gt.s32.totalorder %v2829, 0
      %vm2838 = vcmp.gt.s32.totalorder %v2830, 0
      %vm2839 = vcmp.gt.s32.totalorder %v2831, 0
      %vm2840 = vcmp.gt.s32.totalorder %v2832, 0
      %vm2841 = vcmp.gt.s32.totalorder %v2833, 0
      %v2842 = vsel %vm2834, 1, 0
      %v2843 = vsel %vm2835, 1, 0
      %v2844 = vsel %vm2836, 1, 0
      %v2845 = vsel %vm2837, 1, 0
      %v2846 = vsel %vm2838, 1, 0
      %v2847 = vsel %vm2839, 1, 0
      %v2848 = vsel %vm2840, 1, 0
      %v2849 = vsel %vm2841, 1, 0
      %v2850 = vcvt.s32.f32 %v2842
      %v2851 = vcvt.s32.f32 %v2843
      %v2852 = vcvt.s32.f32 %v2844
      %v2853 = vcvt.s32.f32 %v2845
      %v2854 = vcvt.s32.f32 %v2846
      %v2855 = vcvt.s32.f32 %v2847
      %v2856 = vcvt.s32.f32 %v2848
      %v2857 = vcvt.s32.f32 %v2849
      %vm2858 = vcmp.lt.s32.totalorder %v2826, 7
      %vm2859 = vcmp.lt.s32.totalorder %v2827, 7
      %vm2860 = vcmp.lt.s32.totalorder %v2828, 7
      %vm2861 = vcmp.lt.s32.totalorder %v2829, 7
      %vm2862 = vcmp.lt.s32.totalorder %v2830, 7
      %vm2863 = vcmp.lt.s32.totalorder %v2831, 7
      %vm2864 = vcmp.lt.s32.totalorder %v2832, 7
      %vm2865 = vcmp.lt.s32.totalorder %v2833, 7
      %v2866 = vsel %vm2858, 1, 0
      %v2867 = vsel %vm2859, 1, 0
      %v2868 = vsel %vm2860, 1, 0
      %v2869 = vsel %vm2861, 1, 0
      %v2870 = vsel %vm2862, 1, 0
      %v2871 = vsel %vm2863, 1, 0
      %v2872 = vsel %vm2864, 1, 0
      %v2873 = vsel %vm2865, 1, 0
      %v2874 = vcvt.s32.f32 %v2866
      %v2875 = vcvt.s32.f32 %v2867
      %v2876 = vcvt.s32.f32 %v2868
      %v2877 = vcvt.s32.f32 %v2869
      %v2878 = vcvt.s32.f32 %v2870
      %v2879 = vcvt.s32.f32 %v2871
      %v2880 = vcvt.s32.f32 %v2872
      %v2881 = vcvt.s32.f32 %v2873
      %v2882 = vld [vmem:[#allocation2 + $0x7] sm:$0xff]
      %v2883 = vld [vmem:[#allocation2 + $0xf] sm:$0xff]
      %v2884 = vld [vmem:[#allocation2 + $0x17] sm:$0xff]
      %v2885 = vld [vmem:[#allocation2 + $0x1f] sm:$0xff]
      %v2886 = vld [vmem:[#allocation2 + $0x27] sm:$0xff]
      %v2887 = vld [vmem:[#allocation2 + $0x2f] sm:$0xff]
      %v2888 = vld [vmem:[#allocation2 + $0x37] sm:$0xff]
      %v2889 = vld [vmem:[#allocation2 + $0x3f] sm:$0xff]
      %v2890 = vld [vmem:[#allocation2 + $0x67] sm:$0xff]
      %v2891 = vld [vmem:[#allocation2 + $0x6f] sm:$0xff]
      %v2892 = vld [vmem:[#allocation2 + $0x77] sm:$0xff]
      %v2893 = vld [vmem:[#allocation2 + $0x7f] sm:$0xff]
      %v2894 = vld [vmem:[#allocation2 + $0x87] sm:$0xff]
      %v2895 = vld [vmem:[#allocation2 + $0x8f] sm:$0xff]
      %v2896 = vld [vmem:[#allocation2 + $0x97] sm:$0xff]
      %v2897 = vld [vmem:[#allocation2 + $0x9f] sm:$0xff]
      %v2898 = vld [vmem:[%s10] sm:$0x1]
      %v2899 = vlaneseq
      %v2900 = vshrl.u32 %v2899, 7
      %v2901 = vsub.s32 0, %v2900
      %v2902 = vrot.slane %v2898, %v2901
      %v2903 = vmul.f32 %v2882, %v2902
      %v2904 = vmul.f32 %v2883, %v2902
      %v2905 = vmul.f32 %v2884, %v2902
      %v2906 = vmul.f32 %v2885, %v2902
      %v2907 = vmul.f32 %v2886, %v2902
      %v2908 = vmul.f32 %v2887, %v2902
      %v2909 = vmul.f32 %v2888, %v2902
      %v2910 = vmul.f32 %v2889, %v2902
      %v2911 = vmul.f32 %v2890, %v2902
      %v2912 = vmul.f32 %v2891, %v2902
      %v2913 = vmul.f32 %v2892, %v2902
      %v2914 = vmul.f32 %v2893, %v2902
      %v2915 = vmul.f32 %v2894, %v2902
      %v2916 = vmul.f32 %v2895, %v2902
      %v2917 = vmul.f32 %v2896, %v2902
      %v2918 = vmul.f32 %v2897, %v2902
      %v2919 = vmul.f32 %v2903, %v2850
      %v2920 = vmul.f32 %v2904, %v2851
      %v2921 = vmul.f32 %v2905, %v2852
      %v2922 = vmul.f32 %v2906, %v2853
      %v2923 = vmul.f32 %v2907, %v2854
      %v2924 = vmul.f32 %v2908, %v2855
      %v2925 = vmul.f32 %v2909, %v2856
      %v2926 = vmul.f32 %v2910, %v2857
      %v2927 = vmul.f32 %v2911, %v2850
      %v2928 = vmul.f32 %v2912, %v2851
      %v2929 = vmul.f32 %v2913, %v2852
      %v2930 = vmul.f32 %v2914, %v2853
      %v2931 = vmul.f32 %v2915, %v2854
      %v2932 = vmul.f32 %v2916, %v2855
      %v2933 = vmul.f32 %v2917, %v2856
      %v2934 = vmul.f32 %v2918, %v2857
      %v2935 = vld [vmem:[#allocation2 + $0x8] sm:$0xff]
      %v2936 = vld [vmem:[#allocation2 + $0x10] sm:$0xff]
      %v2937 = vld [vmem:[#allocation2 + $0x18] sm:$0xff]
      %v2938 = vld [vmem:[#allocation2 + $0x20] sm:$0xff]
      %v2939 = vld [vmem:[#allocation2 + $0x28] sm:$0xff]
      %v2940 = vld [vmem:[#allocation2 + $0x30] sm:$0xff]
      %v2941 = vld [vmem:[#allocation2 + $0x38] sm:$0xff]
      %v2942 = vld [vmem:[#allocation2 + $0x40] sm:$0xff]
      %v2943 = vld [vmem:[#allocation2 + $0x68] sm:$0xff]
      %v2944 = vld [vmem:[#allocation2 + $0x70] sm:$0xff]
      %v2945 = vld [vmem:[#allocation2 + $0x78] sm:$0xff]
      %v2946 = vld [vmem:[#allocation2 + $0x80] sm:$0xff]
      %v2947 = vld [vmem:[#allocation2 + $0x88] sm:$0xff]
      %v2948 = vld [vmem:[#allocation2 + $0x90] sm:$0xff]
      %v2949 = vld [vmem:[#allocation2 + $0x98] sm:$0xff]
      %v2950 = vld [vmem:[#allocation2 + $0xa0] sm:$0xff]
      %v2951 = vld [vmem:[%s10 + $0x1] sm:$0x1]
      %v2952 = vlaneseq
      %v2953 = vshrl.u32 %v2952, 7
      %v2954 = vsub.s32 0, %v2953
      %v2955 = vrot.slane %v2951, %v2954
      %v2956 = vmul.f32 %v2935, %v2955
      %v2957 = vmul.f32 %v2936, %v2955
      %v2958 = vmul.f32 %v2937, %v2955
      %v2959 = vmul.f32 %v2938, %v2955
      %v2960 = vmul.f32 %v2939, %v2955
      %v2961 = vmul.f32 %v2940, %v2955
      %v2962 = vmul.f32 %v2941, %v2955
      %v2963 = vmul.f32 %v2942, %v2955
      %v2964 = vmul.f32 %v2943, %v2955
      %v2965 = vmul.f32 %v2944, %v2955
      %v2966 = vmul.f32 %v2945, %v2955
      %v2967 = vmul.f32 %v2946, %v2955
      %v2968 = vmul.f32 %v2947, %v2955
      %v2969 = vmul.f32 %v2948, %v2955
      %v2970 = vmul.f32 %v2949, %v2955
      %v2971 = vmul.f32 %v2950, %v2955
      %v2972 = vadd.f32 %v2919, %v2956
      %v2973 = vadd.f32 %v2920, %v2957
      %v2974 = vadd.f32 %v2921, %v2958
      %v2975 = vadd.f32 %v2922, %v2959
      %v2976 = vadd.f32 %v2923, %v2960
      %v2977 = vadd.f32 %v2924, %v2961
      %v2978 = vadd.f32 %v2925, %v2962
      %v2979 = vadd.f32 %v2926, %v2963
      %v2980 = vadd.f32 %v2927, %v2964
      %v2981 = vadd.f32 %v2928, %v2965
      %v2982 = vadd.f32 %v2929, %v2966
      %v2983 = vadd.f32 %v2930, %v2967
      %v2984 = vadd.f32 %v2931, %v2968
      %v2985 = vadd.f32 %v2932, %v2969
      %v2986 = vadd.f32 %v2933, %v2970
      %v2987 = vadd.f32 %v2934, %v2971
      %v2988 = vld [vmem:[#allocation2 + $0x9] sm:$0xff]
      %v2989 = vld [vmem:[#allocation2 + $0x11] sm:$0xff]
      %v2990 = vld [vmem:[#allocation2 + $0x19] sm:$0xff]
      %v2991 = vld [vmem:[#allocation2 + $0x21] sm:$0xff]
      %v2992 = vld [vmem:[#allocation2 + $0x29] sm:$0xff]
      %v2993 = vld [vmem:[#allocation2 + $0x31] sm:$0xff]
      %v2994 = vld [vmem:[#allocation2 + $0x39] sm:$0xff]
      %v2995 = vld [vmem:[#allocation2 + $0x41] sm:$0xff]
      %v2996 = vld [vmem:[#allocation2 + $0x69] sm:$0xff]
      %v2997 = vld [vmem:[#allocation2 + $0x71] sm:$0xff]
      %v2998 = vld [vmem:[#allocation2 + $0x79] sm:$0xff]
      %v2999 = vld [vmem:[#allocation2 + $0x81] sm:$0xff]
      %v3000 = vld [vmem:[#allocation2 + $0x89] sm:$0xff]
      %v3001 = vld [vmem:[#allocation2 + $0x91] sm:$0xff]
      %v3002 = vld [vmem:[#allocation2 + $0x99] sm:$0xff]
      %v3003 = vld [vmem:[#allocation2 + $0xa1] sm:$0xff]
      %v3004 = vld [vmem:[%s10 + $0x2] sm:$0x1]
      %v3005 = vlaneseq
      %v3006 = vshrl.u32 %v3005, 7
      %v3007 = vsub.s32 0, %v3006
      %v3008 = vrot.slane %v3004, %v3007
      %v3009 = vmul.f32 %v2988, %v3008
      %v3010 = vmul.f32 %v2989, %v3008
      %v3011 = vmul.f32 %v2990, %v3008
      %v3012 = vmul.f32 %v2991, %v3008
      %v3013 = vmul.f32 %v2992, %v3008
      %v3014 = vmul.f32 %v2993, %v3008
      %v3015 = vmul.f32 %v2994, %v3008
      %v3016 = vmul.f32 %v2995, %v3008
      %v3017 = vmul.f32 %v2996, %v3008
      %v3018 = vmul.f32 %v2997, %v3008
      %v3019 = vmul.f32 %v2998, %v3008
      %v3020 = vmul.f32 %v2999, %v3008
      %v3021 = vmul.f32 %v3000, %v3008
      %v3022 = vmul.f32 %v3001, %v3008
      %v3023 = vmul.f32 %v3002, %v3008
      %v3024 = vmul.f32 %v3003, %v3008
      %v3025 = vmul.f32 %v3009, %v2874
      %v3026 = vmul.f32 %v3010, %v2875
      %v3027 = vmul.f32 %v3011, %v2876
      %v3028 = vmul.f32 %v3012, %v2877
      %v3029 = vmul.f32 %v3013, %v2878
      %v3030 = vmul.f32 %v3014, %v2879
      %v3031 = vmul.f32 %v3015, %v2880
      %v3032 = vmul.f32 %v3016, %v2881
      %v3033 = vmul.f32 %v3017, %v2874
      %v3034 = vmul.f32 %v3018, %v2875
      %v3035 = vmul.f32 %v3019, %v2876
      %v3036 = vmul.f32 %v3020, %v2877
      %v3037 = vmul.f32 %v3021, %v2878
      %v3038 = vmul.f32 %v3022, %v2879
      %v3039 = vmul.f32 %v3023, %v2880
      %v3040 = vmul.f32 %v3024, %v2881
      %v3041 = vadd.f32 %v2972, %v3025
      %v3042 = vadd.f32 %v2973, %v3026
      %v3043 = vadd.f32 %v2974, %v3027
      %v3044 = vadd.f32 %v2975, %v3028
      %v3045 = vadd.f32 %v2976, %v3029
      %v3046 = vadd.f32 %v2977, %v3030
      %v3047 = vadd.f32 %v2978, %v3031
      %v3048 = vadd.f32 %v2979, %v3032
      %v3049 = vadd.f32 %v2980, %v3033
      %v3050 = vadd.f32 %v2981, %v3034
      %v3051 = vadd.f32 %v2982, %v3035
      %v3052 = vadd.f32 %v2983, %v3036
      %v3053 = vadd.f32 %v2984, %v3037
      %v3054 = vadd.f32 %v2985, %v3038
      %v3055 = vadd.f32 %v2986, %v3039
      %v3056 = vadd.f32 %v2987, %v3040
      %v3057 = vld [vmem:[#allocation2 + $0x47] sm:$0xff]
      %v3058 = vld [vmem:[#allocation2 + $0xa7] sm:$0xff]
      %v3059 = vld [vmem:[%s10 + $0x3] sm:$0x1]
      %v3060 = vlaneseq
      %v3061 = vshrl.u32 %v3060, 7
      %v3062 = vsub.s32 0, %v3061
      %v3063 = vrot.slane %v3059, %v3062
      %v3064 = vmul.f32 %v2883, %v3063
      %v3065 = vmul.f32 %v2884, %v3063
      %v3066 = vmul.f32 %v2885, %v3063
      %v3067 = vmul.f32 %v2886, %v3063
      %v3068 = vmul.f32 %v2887, %v3063
      %v3069 = vmul.f32 %v2888, %v3063
      %v3070 = vmul.f32 %v2889, %v3063
      %v3071 = vmul.f32 %v3057, %v3063
      %v3072 = vmul.f32 %v2891, %v3063
      %v3073 = vmul.f32 %v2892, %v3063
      %v3074 = vmul.f32 %v2893, %v3063
      %v3075 = vmul.f32 %v2894, %v3063
      %v3076 = vmul.f32 %v2895, %v3063
      %v3077 = vmul.f32 %v2896, %v3063
      %v3078 = vmul.f32 %v2897, %v3063
      %v3079 = vmul.f32 %v3058, %v3063
      %v3080 = vmul.f32 %v3064, %v2850
      %v3081 = vmul.f32 %v3065, %v2851
      %v3082 = vmul.f32 %v3066, %v2852
      %v3083 = vmul.f32 %v3067, %v2853
      %v3084 = vmul.f32 %v3068, %v2854
      %v3085 = vmul.f32 %v3069, %v2855
      %v3086 = vmul.f32 %v3070, %v2856
      %v3087 = vmul.f32 %v3071, %v2857
      %v3088 = vmul.f32 %v3072, %v2850
      %v3089 = vmul.f32 %v3073, %v2851
      %v3090 = vmul.f32 %v3074, %v2852
      %v3091 = vmul.f32 %v3075, %v2853
      %v3092 = vmul.f32 %v3076, %v2854
      %v3093 = vmul.f32 %v3077, %v2855
      %v3094 = vmul.f32 %v3078, %v2856
      %v3095 = vmul.f32 %v3079, %v2857
      %v3096 = vadd.f32 %v3041, %v3080
      %v3097 = vadd.f32 %v3042, %v3081
      %v3098 = vadd.f32 %v3043, %v3082
      %v3099 = vadd.f32 %v3044, %v3083
      %v3100 = vadd.f32 %v3045, %v3084
      %v3101 = vadd.f32 %v3046, %v3085
      %v3102 = vadd.f32 %v3047, %v3086
      %v3103 = vadd.f32 %v3048, %v3087
      %v3104 = vadd.f32 %v3049, %v3088
      %v3105 = vadd.f32 %v3050, %v3089
      %v3106 = vadd.f32 %v3051, %v3090
      %v3107 = vadd.f32 %v3052, %v3091
      %v3108 = vadd.f32 %v3053, %v3092
      %v3109 = vadd.f32 %v3054, %v3093
      %v3110 = vadd.f32 %v3055, %v3094
      %v3111 = vadd.f32 %v3056, %v3095
      %v3112 = vld [vmem:[#allocation2 + $0x48] sm:$0xff]
      %v3113 = vld [vmem:[#allocation2 + $0xa8] sm:$0xff]
      %v3114 = vld [vmem:[%s10 + $0x4] sm:$0x1]
      %v3115 = vlaneseq
      %v3116 = vshrl.u32 %v3115, 7
      %v3117 = vsub.s32 0, %v3116
      %v3118 = vrot.slane %v3114, %v3117
      %v3119 = vmul.f32 %v2936, %v3118
      %v3120 = vmul.f32 %v2937, %v3118
      %v3121 = vmul.f32 %v2938, %v3118
      %v3122 = vmul.f32 %v2939, %v3118
      %v3123 = vmul.f32 %v2940, %v3118
      %v3124 = vmul.f32 %v2941, %v3118
      %v3125 = vmul.f32 %v2942, %v3118
      %v3126 = vmul.f32 %v3112, %v3118
      %v3127 = vmul.f32 %v2944, %v3118
      %v3128 = vmul.f32 %v2945, %v3118
      %v3129 = vmul.f32 %v2946, %v3118
      %v3130 = vmul.f32 %v2947, %v3118
      %v3131 = vmul.f32 %v2948, %v3118
      %v3132 = vmul.f32 %v2949, %v3118
      %v3133 = vmul.f32 %v2950, %v3118
      %v3134 = vmul.f32 %v3113, %v3118
      %v3135 = vadd.f32 %v3096, %v3119
      %v3136 = vadd.f32 %v3097, %v3120
      %v3137 = vadd.f32 %v3098, %v3121
      %v3138 = vadd.f32 %v3099, %v3122
      %v3139 = vadd.f32 %v3100, %v3123
      %v3140 = vadd.f32 %v3101, %v3124
      %v3141 = vadd.f32 %v3102, %v3125
      %v3142 = vadd.f32 %v3103, %v3126
      %v3143 = vadd.f32 %v3104, %v3127
      %v3144 = vadd.f32 %v3105, %v3128
      %v3145 = vadd.f32 %v3106, %v3129
      %v3146 = vadd.f32 %v3107, %v3130
      %v3147 = vadd.f32 %v3108, %v3131
      %v3148 = vadd.f32 %v3109, %v3132
      %v3149 = vadd.f32 %v3110, %v3133
      %v3150 = vadd.f32 %v3111, %v3134
      %v3151 = vld [vmem:[#allocation2 + $0x49] sm:$0xff]
      %v3152 = vld [vmem:[#allocation2 + $0xa9] sm:$0xff]
      %v3153 = vld [vmem:[%s10 + $0x5] sm:$0x1]
      %v3154 = vlaneseq
      %v3155 = vshrl.u32 %v3154, 7
      %v3156 = vsub.s32 0, %v3155
      %v3157 = vrot.slane %v3153, %v3156
      %v3158 = vmul.f32 %v2989, %v3157
      %v3159 = vmul.f32 %v2990, %v3157
      %v3160 = vmul.f32 %v2991, %v3157
      %v3161 = vmul.f32 %v2992, %v3157
      %v3162 = vmul.f32 %v2993, %v3157
      %v3163 = vmul.f32 %v2994, %v3157
      %v3164 = vmul.f32 %v2995, %v3157
      %v3165 = vmul.f32 %v3151, %v3157
      %v3166 = vmul.f32 %v2997, %v3157
      %v3167 = vmul.f32 %v2998, %v3157
      %v3168 = vmul.f32 %v2999, %v3157
      %v3169 = vmul.f32 %v3000, %v3157
      %v3170 = vmul.f32 %v3001, %v3157
      %v3171 = vmul.f32 %v3002, %v3157
      %v3172 = vmul.f32 %v3003, %v3157
      %v3173 = vmul.f32 %v3152, %v3157
      %v3174 = vmul.f32 %v3158, %v2874
      %v3175 = vmul.f32 %v3159, %v2875
      %v3176 = vmul.f32 %v3160, %v2876
      %v3177 = vmul.f32 %v3161, %v2877
      %v3178 = vmul.f32 %v3162, %v2878
      %v3179 = vmul.f32 %v3163, %v2879
      %v3180 = vmul.f32 %v3164, %v2880
      %v3181 = vmul.f32 %v3165, %v2881
      %v3182 = vmul.f32 %v3166, %v2874
      %v3183 = vmul.f32 %v3167, %v2875
      %v3184 = vmul.f32 %v3168, %v2876
      %v3185 = vmul.f32 %v3169, %v2877
      %v3186 = vmul.f32 %v3170, %v2878
      %v3187 = vmul.f32 %v3171, %v2879
      %v3188 = vmul.f32 %v3172, %v2880
      %v3189 = vmul.f32 %v3173, %v2881
      %v3190 = vadd.f32 %v3135, %v3174
      %v3191 = vadd.f32 %v3136, %v3175
      %v3192 = vadd.f32 %v3137, %v3176
      %v3193 = vadd.f32 %v3138, %v3177
      %v3194 = vadd.f32 %v3139, %v3178
      %v3195 = vadd.f32 %v3140, %v3179
      %v3196 = vadd.f32 %v3141, %v3180
      %v3197 = vadd.f32 %v3142, %v3181
      %v3198 = vadd.f32 %v3143, %v3182
      %v3199 = vadd.f32 %v3144, %v3183
      %v3200 = vadd.f32 %v3145, %v3184
      %v3201 = vadd.f32 %v3146, %v3185
      %v3202 = vadd.f32 %v3147, %v3186
      %v3203 = vadd.f32 %v3148, %v3187
      %v3204 = vadd.f32 %v3149, %v3188
      %v3205 = vadd.f32 %v3150, %v3189
      %v3206 = vld [vmem:[#allocation2 + $0x4f] sm:$0xff]
      %v3207 = vld [vmem:[#allocation2 + $0xaf] sm:$0xff]
      %v3208 = vld [vmem:[%s10 + $0x6] sm:$0x1]
      %v3209 = vlaneseq
      %v3210 = vshrl.u32 %v3209, 7
      %v3211 = vsub.s32 0, %v3210
      %v3212 = vrot.slane %v3208, %v3211
      %v3213 = vmul.f32 %v2884, %v3212
      %v3214 = vmul.f32 %v2885, %v3212
      %v3215 = vmul.f32 %v2886, %v3212
      %v3216 = vmul.f32 %v2887, %v3212
      %v3217 = vmul.f32 %v2888, %v3212
      %v3218 = vmul.f32 %v2889, %v3212
      %v3219 = vmul.f32 %v3057, %v3212
      %v3220 = vmul.f32 %v3206, %v3212
      %v3221 = vmul.f32 %v2892, %v3212
      %v3222 = vmul.f32 %v2893, %v3212
      %v3223 = vmul.f32 %v2894, %v3212
      %v3224 = vmul.f32 %v2895, %v3212
      %v3225 = vmul.f32 %v2896, %v3212
      %v3226 = vmul.f32 %v2897, %v3212
      %v3227 = vmul.f32 %v3058, %v3212
      %v3228 = vmul.f32 %v3207, %v3212
      %v3229 = vmul.f32 %v3213, %v2850
      %v3230 = vmul.f32 %v3214, %v2851
      %v3231 = vmul.f32 %v3215, %v2852
      %v3232 = vmul.f32 %v3216, %v2853
      %v3233 = vmul.f32 %v3217, %v2854
      %v3234 = vmul.f32 %v3218, %v2855
      %v3235 = vmul.f32 %v3219, %v2856
      %v3236 = vmul.f32 %v3220, %v2857
      %v3237 = vmul.f32 %v3221, %v2850
      %v3238 = vmul.f32 %v3222, %v2851
      %v3239 = vmul.f32 %v3223, %v2852
      %v3240 = vmul.f32 %v3224, %v2853
      %v3241 = vmul.f32 %v3225, %v2854
      %v3242 = vmul.f32 %v3226, %v2855
      %v3243 = vmul.f32 %v3227, %v2856
      %v3244 = vmul.f32 %v3228, %v2857
      %v3245 = vadd.f32 %v3190, %v3229
      %v3246 = vadd.f32 %v3191, %v3230
      %v3247 = vadd.f32 %v3192, %v3231
      %v3248 = vadd.f32 %v3193, %v3232
      %v3249 = vadd.f32 %v3194, %v3233
      %v3250 = vadd.f32 %v3195, %v3234
      %v3251 = vadd.f32 %v3196, %v3235
      %v3252 = vadd.f32 %v3197, %v3236
      %v3253 = vadd.f32 %v3198, %v3237
      %v3254 = vadd.f32 %v3199, %v3238
      %v3255 = vadd.f32 %v3200, %v3239
      %v3256 = vadd.f32 %v3201, %v3240
      %v3257 = vadd.f32 %v3202, %v3241
      %v3258 = vadd.f32 %v3203, %v3242
      %v3259 = vadd.f32 %v3204, %v3243
      %v3260 = vadd.f32 %v3205, %v3244
      %v3261 = vld [vmem:[#allocation2 + $0x50] sm:$0xff]
      %v3262 = vld [vmem:[#allocation2 + $0xb0] sm:$0xff]
      %v3263 = vld [vmem:[%s10 + $0x7] sm:$0x1]
      %v3264 = vlaneseq
      %v3265 = vshrl.u32 %v3264, 7
      %v3266 = vsub.s32 0, %v3265
      %v3267 = vrot.slane %v3263, %v3266
      %v3268 = vmul.f32 %v2937, %v3267
      %v3269 = vmul.f32 %v2938, %v3267
      %v3270 = vmul.f32 %v2939, %v3267
      %v3271 = vmul.f32 %v2940, %v3267
      %v3272 = vmul.f32 %v2941, %v3267
      %v3273 = vmul.f32 %v2942, %v3267
      %v3274 = vmul.f32 %v3112, %v3267
      %v3275 = vmul.f32 %v3261, %v3267
      %v3276 = vmul.f32 %v2945, %v3267
      %v3277 = vmul.f32 %v2946, %v3267
      %v3278 = vmul.f32 %v2947, %v3267
      %v3279 = vmul.f32 %v2948, %v3267
      %v3280 = vmul.f32 %v2949, %v3267
      %v3281 = vmul.f32 %v2950, %v3267
      %v3282 = vmul.f32 %v3113, %v3267
      %v3283 = vmul.f32 %v3262, %v3267
      %v3284 = vadd.f32 %v3245, %v3268
      %v3285 = vadd.f32 %v3246, %v3269
      %v3286 = vadd.f32 %v3247, %v3270
      %v3287 = vadd.f32 %v3248, %v3271
      %v3288 = vadd.f32 %v3249, %v3272
      %v3289 = vadd.f32 %v3250, %v3273
      %v3290 = vadd.f32 %v3251, %v3274
      %v3291 = vadd.f32 %v3252, %v3275
      %v3292 = vadd.f32 %v3253, %v3276
      %v3293 = vadd.f32 %v3254, %v3277
      %v3294 = vadd.f32 %v3255, %v3278
      %v3295 = vadd.f32 %v3256, %v3279
      %v3296 = vadd.f32 %v3257, %v3280
      %v3297 = vadd.f32 %v3258, %v3281
      %v3298 = vadd.f32 %v3259, %v3282
      %v3299 = vadd.f32 %v3260, %v3283
      %v3300 = vld [vmem:[#allocation2 + $0x51] sm:$0xff]
      %v3301 = vld [vmem:[#allocation2 + $0xb1] sm:$0xff]
      %v3302 = vld [vmem:[%s10 + $0x8] sm:$0x1]
      %v3303 = vlaneseq
      %v3304 = vshrl.u32 %v3303, 7
      %v3305 = vsub.s32 0, %v3304
      %v3306 = vrot.slane %v3302, %v3305
      %v3307 = vmul.f32 %v2990, %v3306
      %v3308 = vmul.f32 %v2991, %v3306
      %v3309 = vmul.f32 %v2992, %v3306
      %v3310 = vmul.f32 %v2993, %v3306
      %v3311 = vmul.f32 %v2994, %v3306
      %v3312 = vmul.f32 %v2995, %v3306
      %v3313 = vmul.f32 %v3151, %v3306
      %v3314 = vmul.f32 %v3300, %v3306
      %v3315 = vmul.f32 %v2998, %v3306
      %v3316 = vmul.f32 %v2999, %v3306
      %v3317 = vmul.f32 %v3000, %v3306
      %v3318 = vmul.f32 %v3001, %v3306
      %v3319 = vmul.f32 %v3002, %v3306
      %v3320 = vmul.f32 %v3003, %v3306
      %v3321 = vmul.f32 %v3152, %v3306
      %v3322 = vmul.f32 %v3301, %v3306
      %v3323 = vmul.f32 %v3307, %v2874
      %v3324 = vmul.f32 %v3308, %v2875
      %v3325 = vmul.f32 %v3309, %v2876
      %v3326 = vmul.f32 %v3310, %v2877
      %v3327 = vmul.f32 %v3311, %v2878
      %v3328 = vmul.f32 %v3312, %v2879
      %v3329 = vmul.f32 %v3313, %v2880
      %v3330 = vmul.f32 %v3314, %v2881
      %v3331 = vmul.f32 %v3315, %v2874
      %v3332 = vmul.f32 %v3316, %v2875
      %v3333 = vmul.f32 %v3317, %v2876
      %v3334 = vmul.f32 %v3318, %v2877
      %v3335 = vmul.f32 %v3319, %v2878
      %v3336 = vmul.f32 %v3320, %v2879
      %v3337 = vmul.f32 %v3321, %v2880
      %v3338 = vmul.f32 %v3322, %v2881
      %v3339 = vadd.f32 %v3284, %v3323
      %v3340 = vadd.f32 %v3285, %v3324
      %v3341 = vadd.f32 %v3286, %v3325
      %v3342 = vadd.f32 %v3287, %v3326
      %v3343 = vadd.f32 %v3288, %v3327
      %v3344 = vadd.f32 %v3289, %v3328
      %v3345 = vadd.f32 %v3290, %v3329
      %v3346 = vadd.f32 %v3291, %v3330
      %v3347 = vadd.f32 %v3292, %v3331
      %v3348 = vadd.f32 %v3293, %v3332
      %v3349 = vadd.f32 %v3294, %v3333
      %v3350 = vadd.f32 %v3295, %v3334
      %v3351 = vadd.f32 %v3296, %v3335
      %v3352 = vadd.f32 %v3297, %v3336
      %v3353 = vadd.f32 %v3298, %v3337
      %v3354 = vadd.f32 %v3299, %v3338
      %v3355 = vld [vmem:[%s11] sm:$0x1]
      %v3357 = vlaneseq
      %v3358 = vshrl.u32 %v3357, 7
      %v3359 = vsub.s32 0, %v3358
      %v3360 = vrot.slane %v3355, %v3359
      %v3362 = vadd.f32 %v3339, %v3360
      %v3363 = vadd.f32 %v3340, %v3360
      %v3364 = vadd.f32 %v3341, %v3360
      %v3365 = vadd.f32 %v3342, %v3360
      %v3366 = vadd.f32 %v3343, %v3360
      %v3367 = vadd.f32 %v3344, %v3360
      %v3368 = vadd.f32 %v3345, %v3360
      %v3369 = vadd.f32 %v3346, %v3360
      %v3370 = vadd.f32 %v3347, %v3360
      %v3371 = vadd.f32 %v3348, %v3360
      %v3372 = vadd.f32 %v3349, %v3360
      %v3373 = vadd.f32 %v3350, %v3360
      %v3374 = vadd.f32 %v3351, %v3360
      %v3375 = vadd.f32 %v3352, %v3360
      %v3376 = vadd.f32 %v3353, %v3360
      %v3377 = vadd.f32 %v3354, %v3360
      %v3378 = vmul.f32 %v3362, 0.5
      %v3379 = vmul.f32 %v3363, 0.5
      %v3380 = vmul.f32 %v3364, 0.5
      %v3381 = vmul.f32 %v3365, 0.5
      %v3382 = vmul.f32 %v3366, 0.5
      %v3383 = vmul.f32 %v3367, 0.5
      %v3384 = vmul.f32 %v3368, 0.5
      %v3385 = vmul.f32 %v3369, 0.5
      %v3386 = vmul.f32 %v3370, 0.5
      %v3387 = vmul.f32 %v3371, 0.5
      %v3388 = vmul.f32 %v3372, 0.5
      %v3389 = vmul.f32 %v3373, 0.5
      %v3390 = vmul.f32 %v3374, 0.5
      %v3391 = vmul.f32 %v3375, 0.5
      %v3392 = vmul.f32 %v3376, 0.5
      %v3393 = vmul.f32 %v3377, 0.5
      %v3394 = vmul.f32 %v3362, %v3362
      %v3395 = vmul.f32 %v3363, %v3363
      %v3396 = vmul.f32 %v3364, %v3364
      %v3397 = vmul.f32 %v3365, %v3365
      %v3398 = vmul.f32 %v3366, %v3366
      %v3399 = vmul.f32 %v3367, %v3367
      %v3400 = vmul.f32 %v3368, %v3368
      %v3401 = vmul.f32 %v3369, %v3369
      %v3402 = vmul.f32 %v3370, %v3370
      %v3403 = vmul.f32 %v3371, %v3371
      %v3404 = vmul.f32 %v3372, %v3372
      %v3405 = vmul.f32 %v3373, %v3373
      %v3406 = vmul.f32 %v3374, %v3374
      %v3407 = vmul.f32 %v3375, %v3375
      %v3408 = vmul.f32 %v3376, %v3376
      %v3409 = vmul.f32 %v3377, %v3377
      %v3410 = vmul.f32 %v3394, %v3362
      %v3411 = vmul.f32 %v3395, %v3363
      %v3412 = vmul.f32 %v3396, %v3364
      %v3413 = vmul.f32 %v3397, %v3365
      %v3414 = vmul.f32 %v3398, %v3366
      %v3415 = vmul.f32 %v3399, %v3367
      %v3416 = vmul.f32 %v3400, %v3368
      %v3417 = vmul.f32 %v3401, %v3369
      %v3418 = vmul.f32 %v3402, %v3370
      %v3419 = vmul.f32 %v3403, %v3371
      %v3420 = vmul.f32 %v3404, %v3372
      %v3421 = vmul.f32 %v3405, %v3373
      %v3422 = vmul.f32 %v3406, %v3374
      %v3423 = vmul.f32 %v3407, %v3375
      %v3424 = vmul.f32 %v3408, %v3376
      %v3425 = vmul.f32 %v3409, %v3377
      %v3426 = vmul.f32 %v3410, 0.044715
      %v3427 = vmul.f32 %v3411, 0.044715
      %v3428 = vmul.f32 %v3412, 0.044715
      %v3429 = vmul.f32 %v3413, 0.044715
      %v3430 = vmul.f32 %v3414, 0.044715
      %v3431 = vmul.f32 %v3415, 0.044715
      %v3432 = vmul.f32 %v3416, 0.044715
      %v3433 = vmul.f32 %v3417, 0.044715
      %v3434 = vmul.f32 %v3418, 0.044715
      %v3435 = vmul.f32 %v3419, 0.044715
      %v3436 = vmul.f32 %v3420, 0.044715
      %v3437 = vmul.f32 %v3421, 0.044715
      %v3438 = vmul.f32 %v3422, 0.044715
      %v3439 = vmul.f32 %v3423, 0.044715
      %v3440 = vmul.f32 %v3424, 0.044715
      %v3441 = vmul.f32 %v3425, 0.044715
      %v3442 = vadd.f32 %v3362, %v3426
      %v3443 = vadd.f32 %v3363, %v3427
      %v3444 = vadd.f32 %v3364, %v3428
      %v3445 = vadd.f32 %v3365, %v3429
      %v3446 = vadd.f32 %v3366, %v3430
      %v3447 = vadd.f32 %v3367, %v3431
      %v3448 = vadd.f32 %v3368, %v3432
      %v3449 = vadd.f32 %v3369, %v3433
      %v3450 = vadd.f32 %v3370, %v3434
      %v3451 = vadd.f32 %v3371, %v3435
      %v3452 = vadd.f32 %v3372, %v3436
      %v3453 = vadd.f32 %v3373, %v3437
      %v3454 = vadd.f32 %v3374, %v3438
      %v3455 = vadd.f32 %v3375, %v3439
      %v3456 = vadd.f32 %v3376, %v3440
      %v3457 = vadd.f32 %v3377, %v3441
      %v3458 = vmul.f32 %v3442, 0.7978846
      %v3459 = vmul.f32 %v3443, 0.7978846
      %v3460 = vmul.f32 %v3444, 0.7978846
      %v3461 = vmul.f32 %v3445, 0.7978846
      %v3462 = vmul.f32 %v3446, 0.7978846
      %v3463 = vmul.f32 %v3447, 0.7978846
      %v3464 = vmul.f32 %v3448, 0.7978846
      %v3465 = vmul.f32 %v3449, 0.7978846
      %v3466 = vmul.f32 %v3450, 0.7978846
      %v3467 = vmul.f32 %v3451, 0.7978846
      %v3468 = vmul.f32 %v3452, 0.7978846
      %v3469 = vmul.f32 %v3453, 0.7978846
      %v3470 = vmul.f32 %v3454, 0.7978846
      %v3471 = vmul.f32 %v3455, 0.7978846
      %v3472 = vmul.f32 %v3456, 0.7978846
      %v3473 = vmul.f32 %v3457, 0.7978846
      %v3474 = vtanh.pop %v3458
      %v3475 = vtanh.pop %v3459
      %v3476 = vtanh.pop %v3460
      %v3477 = vtanh.pop %v3461
      %v3478 = vtanh.pop %v3462
      %v3479 = vtanh.pop %v3463
      %v3480 = vtanh.pop %v3464
      %v3481 = vtanh.pop %v3465
      %v3482 = vtanh.pop %v3466
      %v3483 = vtanh.pop %v3467
      %v3484 = vtanh.pop %v3468
      %v3485 = vtanh.pop %v3469
      %v3486 = vtanh.pop %v3470
      %v3487 = vtanh.pop %v3471
      %v3488 = vtanh.pop %v3472
      %v3489 = vtanh.pop %v3473
      %v3490 = vadd.f32 %v3474, 1.0
      %v3491 = vadd.f32 %v3475, 1.0
      %v3492 = vadd.f32 %v3476, 1.0
      %v3493 = vadd.f32 %v3477, 1.0
      %v3494 = vadd.f32 %v3478, 1.0
      %v3495 = vadd.f32 %v3479, 1.0
      %v3496 = vadd.f32 %v3480, 1.0
      %v3497 = vadd.f32 %v3481, 1.0
      %v3498 = vadd.f32 %v3482, 1.0
      %v3499 = vadd.f32 %v3483, 1.0
      %v3500 = vadd.f32 %v3484, 1.0
      %v3501 = vadd.f32 %v3485, 1.0
      %v3502 = vadd.f32 %v3486, 1.0
      %v3503 = vadd.f32 %v3487, 1.0
      %v3504 = vadd.f32 %v3488, 1.0
      %v3505 = vadd.f32 %v3489, 1.0
      %v3506 = vmul.f32 %v3378, %v3490
      %v3507 = vmul.f32 %v3379, %v3491
      %v3508 = vmul.f32 %v3380, %v3492
      %v3509 = vmul.f32 %v3381, %v3493
      %v3510 = vmul.f32 %v3382, %v3494
      %v3511 = vmul.f32 %v3383, %v3495
      %v3512 = vmul.f32 %v3384, %v3496
      %v3513 = vmul.f32 %v3385, %v3497
      %v3514 = vmul.f32 %v3386, %v3498
      %v3515 = vmul.f32 %v3387, %v3499
      %v3516 = vmul.f32 %v3388, %v3500
      %v3517 = vmul.f32 %v3389, %v3501
      %v3518 = vmul.f32 %v3390, %v3502
      %v3519 = vmul.f32 %v3391, %v3503
      %v3520 = vmul.f32 %v3392, %v3504
      %v3521 = vmul.f32 %v3393, %v3505
      %v3522 = vpack.c.bf16 %v3507, %v3506
      %v3523 = vpack.c.bf16 %v3509, %v3508
      %v3524 = vpack.c.bf16 %v3511, %v3510
      %v3525 = vpack.c.bf16 %v3513, %v3512
      %v3526 = vpack.c.bf16 %v3515, %v3514
      %v3527 = vpack.c.bf16 %v3517, %v3516
      %v3528 = vpack.c.bf16 %v3519, %v3518
      %v3529 = vpack.c.bf16 %v3521, %v3520
      %v3530 = vld [vmem:[%s12] sm:$0xf]
      %v3531 = vld [vmem:[%s12 + $0x4] sm:$0xf]
      %v3532 = vld [vmem:[%s12 + $0x8] sm:$0xf]
      %v3533 = vld [vmem:[%s12 + $0xc] sm:$0xf]
      %v3534 = vld [vmem:[%s12 + $0x10] sm:$0xf]
      %v3535 = vld [vmem:[%s12 + $0x14] sm:$0xf]
      %v3536 = vld [vmem:[%s12 + $0x18] sm:$0xf]
      %v3537 = vld [vmem:[%s12 + $0x1c] sm:$0xf]
      %v3538 = vld [vmem:[%s12 + $0x20] sm:$0xf]
      %v3539 = vld [vmem:[%s12 + $0x24] sm:$0xf]
      %v3540 = vld [vmem:[%s12 + $0x28] sm:$0xf]
      %v3541 = vld [vmem:[%s12 + $0x2c] sm:$0xf]
      %v3542 = vld [vmem:[%s12 + $0x30] sm:$0xf]
      %v3543 = vld [vmem:[%s12 + $0x34] sm:$0xf]
      %v3544 = vld [vmem:[%s12 + $0x38] sm:$0xf]
      %v3545 = vld [vmem:[%s12 + $0x3c] sm:$0xf]
      %v3546 = vld [vmem:[%s13] sm:$0x1]
      %v3548 = vlaneseq
      %v3549 = vshrl.u32 %v3548, 7
      %v3550 = vsub.s32 0, %v3549
      %v3551 = vrot.slane %v3546, %v3550
      %v3569 = vunpack.c.l.b16 %v3530
      %v3570 = vunpack.c.l.b16 %v3531
      %v3571 = vunpack.c.l.b16 %v3532
      %v3572 = vunpack.c.l.b16 %v3533
      %v3573 = vunpack.c.l.b16 %v3534
      %v3574 = vunpack.c.l.b16 %v3535
      %v3575 = vunpack.c.l.b16 %v3536
      %v3576 = vunpack.c.l.b16 %v3537
      %v3577 = vunpack.c.l.b16 %v3538
      %v3578 = vunpack.c.l.b16 %v3539
      %v3579 = vunpack.c.l.b16 %v3540
      %v3580 = vunpack.c.l.b16 %v3541
      %v3581 = vunpack.c.l.b16 %v3542
      %v3582 = vunpack.c.l.b16 %v3543
      %v3583 = vunpack.c.l.b16 %v3544
      %v3584 = vunpack.c.l.b16 %v3545
      %v3585 = vpack.c.b16 %v3570, %v3569
      %v3586 = vpack.c.b16 %v3572, %v3571
      %v3587 = vpack.c.b16 %v3574, %v3573
      %v3588 = vpack.c.b16 %v3576, %v3575
      %v3589 = vpack.c.b16 %v3578, %v3577
      %v3590 = vpack.c.b16 %v3580, %v3579
      %v3591 = vpack.c.b16 %v3582, %v3581
      %v3592 = vpack.c.b16 %v3584, %v3583
      %3601 = vmatprep.subr.bf16.mxu0 0
      %3602 = vmatpush1.bf16.msra.mxu0 %v3585
      %3603 = vmatprep.subr.bf16.mxu0 0
      %3604 = vmatpush1.bf16.msra.mxu0 %v3586
      %3605 = vmatprep.subr.bf16.mxu0 0
      %3606 = vmatpush1.bf16.msra.mxu0 %v3587
      %3607 = vmatprep.subr.bf16.mxu0 0
      %3608 = vmatpush1.bf16.msra.mxu0 %v3588
      %3609 = vmatprep.subr.bf16.mxu0 0
      %3610 = vmatpush1.bf16.msra.mxu0 %v3589
      %3611 = vmatprep.subr.bf16.mxu0 0
      %3612 = vmatpush1.bf16.msra.mxu0 %v3590
      %3613 = vmatprep.subr.bf16.mxu0 0
      %3614 = vmatpush1.bf16.msra.mxu0 %v3591
      %3615 = vmatprep.subr.bf16.mxu0 0
      %3616 = vmatpush1.bf16.msra.mxu0 %v3592
      %3617 = vmatprep.subr.bf16.mxu0 0
      %3618 = vmatpush1.bf16.msra.mxu0 0
      %3619 = vmatprep.subr.bf16.mxu0 0
      %3620 = vmatpush1.bf16.msra.mxu0 0
      %3621 = vmatprep.subr.bf16.mxu0 0
      %3622 = vmatpush1.bf16.msra.mxu0 0
      %3623 = vmatprep.subr.bf16.mxu0 0
      %3624 = vmatpush1.bf16.msra.mxu0 0
      %3625 = vmatprep.subr.bf16.mxu0 0
      %3626 = vmatpush1.bf16.msra.mxu0 0
      %3627 = vmatprep.subr.bf16.mxu0 0
      %3628 = vmatpush1.bf16.msra.mxu0 0
      %3629 = vmatprep.subr.bf16.mxu0 0
      %3630 = vmatpush1.bf16.msra.mxu0 0
      %3631 = vmatprep.subr.bf16.mxu0 0
      %3632 = vmatpush1.bf16.msra.mxu0 0
      %3633 = vmatprep.mubr.bf16.mxu0 0
      %3634 = vmatmul.mubr.bf16.gmra.mrb[0].mxu0 %v3522
      %v3635 = vpop.f32.mrb[0].mxu0
      %v3636 = vadd.f32 %v3551, %v3635
      %v3637 = vpop.f32.mrb[0].mxu0
      %v3638 = vpop.f32.mrb[0].mxu0
      %v3639 = vadd.f32 %v3551, %v3638
      %v3640 = vpop.f32.mrb[0].mxu0
      %3641 = vmatprep.mubr.bf16.mxu0 0
      %3642 = vmatmul.mubr.bf16.gmra.mrb[0].mxu0 %v3523
      %v3643 = vpop.f32.mrb[0].mxu0
      %v3644 = vadd.f32 %v3551, %v3643
      %v3645 = vpop.f32.mrb[0].mxu0
      %v3646 = vpop.f32.mrb[0].mxu0
      %v3647 = vadd.f32 %v3551, %v3646
      %v3648 = vpop.f32.mrb[0].mxu0
      %3649 = vmatprep.mubr.bf16.mxu0 0
      %3650 = vmatmul.mubr.bf16.gmra.mrb[0].mxu0 %v3524
      %v3651 = vpop.f32.mrb[0].mxu0
      %v3652 = vadd.f32 %v3551, %v3651
      %v3653 = vpop.f32.mrb[0].mxu0
      %v3654 = vpop.f32.mrb[0].mxu0
      %v3655 = vadd.f32 %v3551, %v3654
      %v3656 = vpop.f32.mrb[0].mxu0
      %3657 = vmatprep.mubr.bf16.mxu0 0
      %3658 = vmatmul.mubr.bf16.gmra.mrb[0].mxu0 %v3525
      %v3659 = vpop.f32.mrb[0].mxu0
      %v3660 = vadd.f32 %v3551, %v3659
      %v3661 = vpop.f32.mrb[0].mxu0
      %v3662 = vpop.f32.mrb[0].mxu0
      %v3663 = vadd.f32 %v3551, %v3662
      %v3664 = vpop.f32.mrb[0].mxu0
      %3665 = vmatprep.mubr.bf16.mxu0 0
      %3666 = vmatmul.mubr.bf16.gmra.mrb[0].mxu0 %v3526
      %v3667 = vpop.f32.mrb[0].mxu0
      %v3668 = vadd.f32 %v3551, %v3667
      %v3669 = vpop.f32.mrb[0].mxu0
      %v3670 = vpop.f32.mrb[0].mxu0
      %v3671 = vadd.f32 %v3551, %v3670
      %v3672 = vpop.f32.mrb[0].mxu0
      %3673 = vmatprep.mubr.bf16.mxu0 0
      %3674 = vmatmul.mubr.bf16.gmra.mrb[0].mxu0 %v3527
      %v3675 = vpop.f32.mrb[0].mxu0
      %v3676 = vadd.f32 %v3551, %v3675
      %v3677 = vpop.f32.mrb[0].mxu0
      %v3678 = vpop.f32.mrb[0].mxu0
      %v3679 = vadd.f32 %v3551, %v3678
      %v3680 = vpop.f32.mrb[0].mxu0
      %3681 = vmatprep.mubr.bf16.mxu0 0
      %3682 = vmatmul.mubr.bf16.gmra.mrb[0].mxu0 %v3528
      %v3683 = vpop.f32.mrb[0].mxu0
      %v3684 = vadd.f32 %v3551, %v3683
      %v3685 = vpop.f32.mrb[0].mxu0
      %v3686 = vpop.f32.mrb[0].mxu0
      %v3687 = vadd.f32 %v3551, %v3686
      %v3688 = vpop.f32.mrb[0].mxu0
      %3689 = vmatprep.mubr.bf16.mxu0 0
      %3690 = vmatmul.mubr.bf16.gmra.mrb[0].mxu0 %v3529
      %v3691 = vpop.f32.mrb[0].mxu0
      %v3692 = vadd.f32 %v3551, %v3691
      %v3693 = vpop.f32.mrb[0].mxu0
      %v3694 = vpop.f32.mrb[0].mxu0
      %v3695 = vadd.f32 %v3551, %v3694
      %v3696 = vpop.f32.mrb[0].mxu0
      %3697 = vdwg.mxu0
      %v3698 = vadd.f32 %v2283, %v3636
      %v3699 = vadd.f32 %v2284, %v3639
      %v3700 = vadd.f32 %v2285, %v3644
      %v3701 = vadd.f32 %v2286, %v3647
      %v3702 = vadd.f32 %v2287, %v3652
      %v3703 = vadd.f32 %v2288, %v3655
      %v3704 = vadd.f32 %v2289, %v3660
      %v3705 = vadd.f32 %v2290, %v3663
      %v3706 = vadd.f32 %v2291, %v3668
      %v3707 = vadd.f32 %v2292, %v3671
      %v3708 = vadd.f32 %v2293, %v3676
      %v3709 = vadd.f32 %v2294, %v3679
      %v3710 = vadd.f32 %v2295, %v3684
      %v3711 = vadd.f32 %v2296, %v3687
      %v3712 = vadd.f32 %v2297, %v3692
      %v3713 = vadd.f32 %v2298, %v3695
      %3714 = vst.msk [vmem:[%s469] sm:$0xff] %vm490, %v3698
      %3715 = vst.msk [vmem:[%s469 + $0x8] sm:$0xff] %vm490, %v3699
      %3716 = vst.msk [vmem:[%s469 + $0x10] sm:$0xff] %vm490, %v3700
      %3717 = vst.msk [vmem:[%s469 + $0x18] sm:$0xff] %vm490, %v3701
      %3718 = vst.msk [vmem:[%s469 + $0x20] sm:$0xff] %vm490, %v3702
      %3719 = vst.msk [vmem:[%s469 + $0x28] sm:$0xff] %vm490, %v3703
      %3720 = vst.msk [vmem:[%s469 + $0x30] sm:$0xff] %vm490, %v3704
      %3721 = vst.msk [vmem:[%s469 + $0x38] sm:$0xff] %vm490, %v3705
      %3722 = vst.msk [vmem:[%s469 + $0x40] sm:$0xff] %vm490, %v3706
      %3723 = vst.msk [vmem:[%s469 + $0x48] sm:$0xff] %vm490, %v3707
      %3724 = vst.msk [vmem:[%s469 + $0x50] sm:$0xff] %vm490, %v3708
      %3725 = vst.msk [vmem:[%s469 + $0x58] sm:$0xff] %vm490, %v3709
      %3726 = vst.msk [vmem:[%s469 + $0x60] sm:$0xff] %vm490, %v3710
      %3727 = vst.msk [vmem:[%s469 + $0x68] sm:$0xff] %vm490, %v3711
      %3728 = vst.msk [vmem:[%s469 + $0x70] sm:$0xff] %vm490, %v3712
      %3729 = vst.msk [vmem:[%s469 + $0x78] sm:$0xff] %vm490, %v3713
      %s3730 = smul.u32 16, %s25
      %p3731 = scmp.lt.s32.totalorder %s3730, 31
      %s3732 = scalar_select %p3731, %s3730, 31
      %s3733 = smul.addr %s3732, 8
      %s3734 = scalar_lea.vmem %s14, %s3733
      // Predicated region
      $region77: #{tpu_custom_call.1} parent=75 // pred_check
        %p3735 = pneg %p342
      $region78: #{tpu_custom_call.1} parent=75 // pred_check_branch
        %3737 = sbr.rel (%p3735) target = $region80
      $region79: #{tpu_custom_call.1} parent=75 // pred_region
        %s3738 = smul.u32 16, %s25
      $region80: #{tpu_custom_call.1} parent=75 // pred_fallthru
        _
    $region76: #{tpu_custom_call.1} parent=5 // pred_fallthru
      _
    %p3739 = scmp.le.s32.totalorder 2, %s20
    // Predicated region
    $region81: #{tpu_custom_call.1} parent=5 // pred_check
      %p3740 = pneg %p3739
    $region82: #{tpu_custom_call.1} parent=5 // pred_check_branch
      %3742 = sbr.rel (%p3740) target = $region84
    $region83: #{tpu_custom_call.1} parent=5 // pred_region
      %s3743 = ssub.s32 %s20, 2
      // Predicated region
      $region85: #{tpu_custom_call.1} parent=83 // pred_check
        %p3744 = pneg %p348
      $region86: #{tpu_custom_call.1} parent=83 // pred_check_branch
        %3746 = sbr.rel (%p3744) target = $region88
      $region87: #{tpu_custom_call.1} parent=83 // pred_region
        %s3747 = smul.u32 16, %s26
        %p3748 = scmp.lt.s32.totalorder %s3747, 31
        %s3749 = scalar_select %p3748, %s3747, 31
        %s3750 = smul.addr %s3749, 8
        %s3751 = scalar_lea.vmem %s14, %s3750
      $region88: #{tpu_custom_call.1} parent=83 // pred_fallthru
        _
    $region84: #{tpu_custom_call.1} parent=5 // pred_fallthru
      _
  $region6: #{tpu_custom_call.1} parent=0 // loop_footer
    %s24 = sadd.s32 1, %s20
  $region7: #{tpu_custom_call.1} parent=0 // loop_footer_branch
    %19 = sbr.rel target = $region3
  $region8: #{tpu_custom_call.1} parent=0 // loop_exit
    _

</llo_original>
